<compile_context>
chip_gen: v6e
topology: v6e:2x2x1
jax: 0.10.0
libtpu: 0.0.40
codegen_flags: <defaults>
</compile_context>

<pallas_src>
import jax
import jax.numpy as jnp
from jax.experimental import pallas as pl
from jax.experimental.pallas import tpu as pltpu

BN_EPS = 1e-5
SOFTPLUS_THRESHOLD = 20.0   # torch.nn.Softplus default
HEAD_OUT_PAD = 128          # lane-dense padded width of the (C, 1) output


# ----------------------------- in-kernel math ------------------------------

def _softplus(x):
    # matches torch.nn.Softplus(beta=1, threshold=20)
    return jnp.where(x > SOFTPLUS_THRESHOLD, x,
                     jnp.log1p(jnp.exp(jnp.minimum(x, SOFTPLUS_THRESHOLD))))


def _sigmoid(x):
    # numerically stable, exact sigmoid (no approx reciprocal)
    z = jnp.exp(-jnp.abs(x))
    r = 1.0 / (1.0 + z)
    return jnp.where(x >= 0, r, z * r)


# ------------------------------ fused kernel -------------------------------

def cgcnn_fused_kernel(atom_in_ref, nbr_ref, gmat_ref, pool_ref,
                       we_ref, be_ref,
                       ws_ref, wn_ref, wb_ref, b_ref,
                       g1_ref, bt1_ref, g2_ref, bt2_ref,
                       w1_ref, b1_ref, w2_ref, b2_ref,
                       out_ref):
    f32 = jnp.float32

    def dot(a, b):
        return jnp.dot(a, b, preferred_element_type=f32)

    # ---- embedding: (N, F) @ (F, A) + (1, A)
    atom = dot(atom_in_ref[...], we_ref[...]) + be_ref[...]            # (N, A)

    n_conv, a_len, _ = ws_ref.shape            # (L, A, 2A)
    m = gmat_ref.shape[0]                      # neighbor slots
    n = atom.shape[0]
    inv_n = 1.0 / n
    inv_mn = 1.0 / (m * n)

    # Bond-feature projections: nbr_fea is layer-invariant, so these tiny
    # K=B matmuls are all done up front, off the per-layer dependence chain.
    hb = [[dot(nbr_ref[mm], wb_ref[i]) for mm in range(m)]             # (N, 2A)
          for i in range(n_conv)]

    for i in range(n_conv):
        # split fc_full: per-atom projections once per atom (no (N,M,2A+B)
        # concat tensor); filter|core columns kept fused -> 2A-wide matmuls.
        hs = dot(atom, ws_ref[i]) + b_ref[i]                           # (N, 2A)
        hn = dot(atom, wn_ref[i])                                      # (N, 2A)

        # Per-neighbor-slot gated features: the neighbor gather is a one-hot
        # matmul; the self term is a free broadcast (no emat/pnbr matmuls).
        blocks = [hs + dot(gmat_ref[mm], hn) + hb[i][mm]
                  for mm in range(m)]                                  # M x (N, 2A)

        # bn1: training-mode batch stats over all M*N rows, two-pass variance
        mu1 = sum(jnp.sum(g, axis=0, keepdims=True) for g in blocks) * inv_mn
        var1 = sum(jnp.sum((g - mu1) ** 2, axis=0, keepdims=True)
                   for g in blocks) * inv_mn
        scale1 = g1_ref[i] * jax.lax.rsqrt(var1 + BN_EPS)
        shift1 = bt1_ref[i] - mu1 * scale1

        # sigmoid(filter) * softplus(core), summed over the M neighbor slots
        # (M cheap VPU adds instead of a (N, N*M) one-hot matmul).
        nbr_sumed = jnp.zeros((n, a_len), f32)
        for g in blocks:
            gb = g * scale1 + shift1
            nbr_sumed = nbr_sumed + (_sigmoid(gb[:, :a_len])
                                     * _softplus(gb[:, a_len:]))

        # bn2 over the N atom rows, two-pass variance
        mu2 = jnp.sum(nbr_sumed, axis=0, keepdims=True) * inv_n
        var2 = jnp.sum((nbr_sumed - mu2) ** 2, axis=0, keepdims=True) * inv_n
        nbr_sumed = ((nbr_sumed - mu2)
                     * (g2_ref[i] * jax.lax.rsqrt(var2 + BN_EPS)) + bt2_ref[i])

        atom = _softplus(atom + nbr_sumed)

    # ---- per-crystal mean pooling + MLP head
    pooled = dot(pool_ref[...], atom)                                  # (C, A)
    x = _softplus(pooled)                                              # conv_to_fc_softplus
    x = _softplus(dot(x, w1_ref[...]) + b1_ref[...])                   # conv_to_fc + softplus
    # dropout(p=0.0) == identity; reference `self.fcs` loop is dead code.
    out_ref[...] = dot(x, w2_ref[...]) + b2_ref[...]                   # (C, 128) lane-dense


# ----------------------------- parameter init ------------------------------

def _linear_init(key, fan_in, fan_out):
    # PyTorch nn.Linear default: U(-1/sqrt(fan_in), 1/sqrt(fan_in)); W stored (in, out)
    k1, k2 = jax.random.split(key)
    bound = 1.0 / (fan_in ** 0.5)
    w = jax.random.uniform(k1, (fan_in, fan_out), jnp.float32, -bound, bound)
    b = jax.random.uniform(k2, (1, fan_out), jnp.float32, -bound, bound)
    return w, b


def init_params(key, orig_atom_fea_len, nbr_fea_len, atom_fea_len, n_conv,
                h_fea_len):
    keys = jax.random.split(key, 3 + n_conv)
    params = {}
    params["embedding"] = _linear_init(keys[0], orig_atom_fea_len, atom_fea_len)
    convs = []
    for i in range(n_conv):
        w, b = _linear_init(keys[1 + i],
                            2 * atom_fea_len + nbr_fea_len, 2 * atom_fea_len)
        g1 = jnp.ones((1, 2 * atom_fea_len), jnp.float32)    # bn1 weight
        be1 = jnp.zeros((1, 2 * atom_fea_len), jnp.float32)  # bn1 bias
        g2 = jnp.ones((1, atom_fea_len), jnp.float32)        # bn2 weight
        be2 = jnp.zeros((1, atom_fea_len), jnp.float32)      # bn2 bias
        convs.append((w, b, g1, be1, g2, be2))
    params["convs"] = convs
    params["conv_to_fc"] = _linear_init(keys[1 + n_conv], atom_fea_len, h_fea_len)
    params["fc_out"] = _linear_init(keys[2 + n_conv], h_fea_len, 1)
    return params


def _pack_conv_params(convs, atom_fea_len):
    """Split fc_full rows into (self | nbr | bond) pieces (columns stay fused
    at full 2A width) and stack across layers for static layer indexing."""
    A = atom_fea_len

    def stack(fn):
        return jnp.stack([fn(c) for c in convs], axis=0)

    return [
        stack(lambda c: c[0][:A, :]),           # ws  (L, A, 2A)
        stack(lambda c: c[0][A:2 * A, :]),      # wn  (L, A, 2A)
        stack(lambda c: c[0][2 * A:, :]),       # wb  (L, B, 2A)
        stack(lambda c: c[1]),                  # b   (L, 1, 2A)
        stack(lambda c: c[2]),                  # g1  (L, 1, 2A)
        stack(lambda c: c[3]),                  # bt1 (L, 1, 2A)
        stack(lambda c: c[4]),                  # g2  (L, 1, A)
        stack(lambda c: c[5]),                  # bt2 (L, 1, A)
    ]


def _pick_vmem_limit(arrays, out_bytes):
    """Generation-aware VMEM limit: scale with the actual input footprint and
    cap at 3/4 of this chip's physical VMEM (v7x: 64 MiB, v5e/v6e: 128 MiB)."""
    in_bytes = sum(int(a.size) * a.dtype.itemsize for a in arrays)
    need = 6 * (in_bytes + out_bytes) + (4 << 20)      # slack for temporaries
    try:
        cap = int(pltpu.get_tpu_info().vmem_capacity_bytes)
    except Exception:
        cap = 64 << 20                                  # conservative (v7x)
    return int(min(max(need, 32 << 20), (3 * cap) // 4))


# -------------------------------- forward ----------------------------------

def cgcnn_forward(params, atom_fea, nbr_fea, nbr_fea_idx, crystal_atom_idx,
                  atom_fea_len):
    N, M = nbr_fea_idx.shape
    A = atom_fea_len
    C = len(crystal_atom_idx)
    H = params["conv_to_fc"][0].shape[1]

    # Graph topology laid out neighbor-slot-major so the kernel only indexes
    # leading axes (free) and never does unaligned sublane slicing.
    nbr_m = jnp.transpose(nbr_fea, (1, 0, 2)).astype(jnp.float32)        # (M, N, B)
    gmat = jnp.transpose(jax.nn.one_hot(nbr_fea_idx, N, dtype=jnp.float32),
                         (1, 0, 2))                                      # (M, N, N)

    # per-crystal mean pooling as a dense (C, N) matrix
    pool_mat = jnp.zeros((C, N), jnp.float32)
    for c, idx in enumerate(crystal_atom_idx):
        pool_mat = pool_mat.at[c, idx].set(1.0 / idx.shape[0])

    we, be = params["embedding"]
    conv_packed = _pack_conv_params(params["convs"], A)
    w1, b1 = params["conv_to_fc"]
    w2, b2 = params["fc_out"]

    # pad fc_out to a lane-dense 128-wide output; column 0 holds the result
    w2p = jnp.zeros((H, HEAD_OUT_PAD), jnp.float32).at[:, :1].set(w2)
    b2p = jnp.zeros((1, HEAD_OUT_PAD), jnp.float32).at[:, :1].set(b2)

    inputs = [atom_fea, nbr_m, gmat, pool_mat, we, be,
              *conv_packed, w1, b1, w2p, b2p]

    vmem_limit = _pick_vmem_limit(inputs, C * HEAD_OUT_PAD * 4)

    out_padded = pl.pallas_call(
        cgcnn_fused_kernel,
        out_shape=jax.ShapeDtypeStruct((C, HEAD_OUT_PAD), jnp.float32),
        in_specs=[pl.BlockSpec(memory_space=pltpu.MemorySpace.VMEM)
                  for _ in inputs],
        out_specs=pl.BlockSpec(memory_space=pltpu.MemorySpace.VMEM),
        compiler_params=pltpu.CompilerParams(vmem_limit_bytes=vmem_limit),
    )(*inputs)

    return out_padded[:, :1]


# --------------------------- pure-JAX reference -----------------------------

def cgcnn_reference(params, atom_fea, nbr_fea, nbr_fea_idx, crystal_atom_idx, A):
    def bn(x, g, b):
        mu = jnp.mean(x, axis=0, keepdims=True)
        var = jnp.mean((x - mu) ** 2, axis=0, keepdims=True)
        return (x - mu) / jnp.sqrt(var + BN_EPS) * g + b

    we, be = params["embedding"]
    atom = atom_fea @ we + be
    N, M = nbr_fea_idx.shape
    for (w, b, g1, bt1, g2, bt2) in params["convs"]:
        atom_nbr = atom[nbr_fea_idx]                                     # (N, M, A)
        total = jnp.concatenate(
            [jnp.broadcast_to(atom[:, None, :], (N, M, A)), atom_nbr, nbr_fea],
            axis=2)
        gated = total.reshape(N * M, -1) @ w + b
        gated = bn(gated, g1, bt1).reshape(N, M, 2 * A)
        filt, core = gated[..., :A], gated[..., A:]
        nbr_sumed = jnp.sum(jax.nn.sigmoid(filt) * _softplus(core), axis=1)
        nbr_sumed = bn(nbr_sumed, g2, bt2)
        atom = _softplus(atom + nbr_sumed)
    pooled = jnp.stack([jnp.mean(atom[idx], axis=0) for idx in crystal_atom_idx])
    w1, b1 = params["conv_to_fc"]
    w2, b2 = params["fc_out"]
    x = _softplus(pooled)
    x = _softplus(x @ w1 + b1)
    return x @ w2 + b2


# ---------------------------------- main ------------------------------------

if __name__ == "__main__":
    # small, deterministic problem
    orig_atom_fea_len = 16
    nbr_fea_len = 8
    atom_fea_len = 32
    n_conv = 3
    h_fea_len = 64
    N, M = 12, 4                                               # 12 atoms, 4 neighbors
    crystal_atom_idx = [jnp.arange(0, 6), jnp.arange(6, 12)]   # 2 crystals

    key = jax.random.PRNGKey(0)
    k_param, k_atom, k_nbr, k_idx = jax.random.split(key, 4)

    params = init_params(k_param, orig_atom_fea_len, nbr_fea_len,
                         atom_fea_len, n_conv, h_fea_len)

    atom_fea = jax.random.normal(k_atom, (N, orig_atom_fea_len), jnp.float32)
    nbr_fea = jax.random.normal(k_nbr, (N, M, nbr_fea_len), jnp.float32)
    nbr_fea_idx = jax.random.randint(k_idx, (N, M), 0, N, jnp.int32)

    out = cgcnn_forward(params, atom_fea, nbr_fea, nbr_fea_idx,
                        crystal_atom_idx, atom_fea_len)
    out = jax.block_until_ready(out)

    with jax.default_matmul_precision("highest"):
        ref = cgcnn_reference(params, atom_fea, nbr_fea, nbr_fea_idx,
                              crystal_atom_idx, atom_fea_len)
    ref = jax.block_until_ready(ref)

    assert out.shape == (len(crystal_atom_idx), 1)
    assert bool(jnp.all(jnp.isfinite(out)))
    assert bool(jnp.allclose(out, ref, rtol=5e-3, atol=5e-3))
    print("KERNEL_OK")
</pallas_src>

<mosaic_0001>
module attributes {stable_mosaic.version = 11 : i64} {
  func.func @cgcnn_fused_kernel(%arg0: memref<12x16xf32, #tpu.memory_space<vmem>>, %arg1: memref<4x12x8xf32, #tpu.memory_space<vmem>>, %arg2: memref<4x12x12xf32, #tpu.memory_space<vmem>>, %arg3: memref<2x12xf32, #tpu.memory_space<vmem>>, %arg4: memref<16x32xf32, #tpu.memory_space<vmem>>, %arg5: memref<1x32xf32, #tpu.memory_space<vmem>>, %arg6: memref<3x32x64xf32, #tpu.memory_space<vmem>>, %arg7: memref<3x32x64xf32, #tpu.memory_space<vmem>>, %arg8: memref<3x8x64xf32, #tpu.memory_space<vmem>>, %arg9: memref<3x1x64xf32, #tpu.memory_space<vmem>>, %arg10: memref<3x1x64xf32, #tpu.memory_space<vmem>>, %arg11: memref<3x1x64xf32, #tpu.memory_space<vmem>>, %arg12: memref<3x1x32xf32, #tpu.memory_space<vmem>>, %arg13: memref<3x1x32xf32, #tpu.memory_space<vmem>>, %arg14: memref<32x64xf32, #tpu.memory_space<vmem>>, %arg15: memref<1x64xf32, #tpu.memory_space<vmem>>, %arg16: memref<64x128xf32, #tpu.memory_space<vmem>>, %arg17: memref<1x128xf32, #tpu.memory_space<vmem>>, %arg18: memref<2x128xf32, #tpu.memory_space<vmem>>) attributes {dimension_semantics = [], scalar_prefetch = 0 : i64, scratch_operands = 0 : i64, tpu.core_type = #tpu.core_type<tc>} {
    %c0 = arith.constant 0 : index
    %c0_0 = arith.constant 0 : index
    %0 = vector.load %arg0[%c0, %c0_0] : memref<12x16xf32, #tpu.memory_space<vmem>>, vector<12x16xf32>
    %c0_1 = arith.constant 0 : index
    %c0_2 = arith.constant 0 : index
    %1 = vector.load %arg4[%c0_1, %c0_2] : memref<16x32xf32, #tpu.memory_space<vmem>>, vector<16x32xf32>
    %cst = arith.constant dense<0.000000e+00> : vector<12x32xf32>
    %2 = tpu.matmul %0, %1, %cst {dimension_numbers = #tpu.dot_dimension_numbers<[1], [0], [0], [1], [0, 0, 1, 1], [], []>} : vector<12x16xf32>, vector<16x32xf32>, vector<12x32xf32> -> vector<12x32xf32>
    %c0_3 = arith.constant 0 : index
    %c0_4 = arith.constant 0 : index
    %3 = vector.load %arg5[%c0_3, %c0_4] : memref<1x32xf32, #tpu.memory_space<vmem>>, vector<1x32xf32>
    %4 = vector.broadcast %3 : vector<1x32xf32> to vector<12x32xf32>
    %5 = arith.addf %2, %4 : vector<12x32xf32>
    %c0_5 = arith.constant 0 : index
    %c0_6 = arith.constant 0 : index
    %c0_7 = arith.constant 0 : index
    %6 = vector.load %arg1[%c0_5, %c0_6, %c0_7] : memref<4x12x8xf32, #tpu.memory_space<vmem>>, vector<1x12x8xf32>
    %7 = vector.shape_cast %6 : vector<1x12x8xf32> to vector<12x8xf32>
    %c0_8 = arith.constant 0 : index
    %c0_9 = arith.constant 0 : index
    %c0_10 = arith.constant 0 : index
    %8 = vector.load %arg8[%c0_8, %c0_9, %c0_10] : memref<3x8x64xf32, #tpu.memory_space<vmem>>, vector<1x8x64xf32>
    %9 = vector.shape_cast %8 : vector<1x8x64xf32> to vector<8x64xf32>
    %cst_11 = arith.constant dense<0.000000e+00> : vector<12x64xf32>
    %10 = tpu.matmul %7, %9, %cst_11 {dimension_numbers = #tpu.dot_dimension_numbers<[1], [0], [0], [1], [0, 0, 1, 1], [], []>} : vector<12x8xf32>, vector<8x64xf32>, vector<12x64xf32> -> vector<12x64xf32>
    %c1 = arith.constant 1 : index
    %c0_12 = arith.constant 0 : index
    %c0_13 = arith.constant 0 : index
    %11 = vector.load %arg1[%c1, %c0_12, %c0_13] : memref<4x12x8xf32, #tpu.memory_space<vmem>>, vector<1x12x8xf32>
    %12 = vector.shape_cast %11 : vector<1x12x8xf32> to vector<12x8xf32>
    %c0_14 = arith.constant 0 : index
    %c0_15 = arith.constant 0 : index
    %c0_16 = arith.constant 0 : index
    %13 = vector.load %arg8[%c0_14, %c0_15, %c0_16] : memref<3x8x64xf32, #tpu.memory_space<vmem>>, vector<1x8x64xf32>
    %14 = vector.shape_cast %13 : vector<1x8x64xf32> to vector<8x64xf32>
    %cst_17 = arith.constant dense<0.000000e+00> : vector<12x64xf32>
    %15 = tpu.matmul %12, %14, %cst_17 {dimension_numbers = #tpu.dot_dimension_numbers<[1], [0], [0], [1], [0, 0, 1, 1], [], []>} : vector<12x8xf32>, vector<8x64xf32>, vector<12x64xf32> -> vector<12x64xf32>
    %c2 = arith.constant 2 : index
    %c0_18 = arith.constant 0 : index
    %c0_19 = arith.constant 0 : index
    %16 = vector.load %arg1[%c2, %c0_18, %c0_19] : memref<4x12x8xf32, #tpu.memory_space<vmem>>, vector<1x12x8xf32>
    %17 = vector.shape_cast %16 : vector<1x12x8xf32> to vector<12x8xf32>
    %c0_20 = arith.constant 0 : index
    %c0_21 = arith.constant 0 : index
    %c0_22 = arith.constant 0 : index
    %18 = vector.load %arg8[%c0_20, %c0_21, %c0_22] : memref<3x8x64xf32, #tpu.memory_space<vmem>>, vector<1x8x64xf32>
    %19 = vector.shape_cast %18 : vector<1x8x64xf32> to vector<8x64xf32>
    %cst_23 = arith.constant dense<0.000000e+00> : vector<12x64xf32>
    %20 = tpu.matmul %17, %19, %cst_23 {dimension_numbers = #tpu.dot_dimension_numbers<[1], [0], [0], [1], [0, 0, 1, 1], [], []>} : vector<12x8xf32>, vector<8x64xf32>, vector<12x64xf32> -> vector<12x64xf32>
    %c3 = arith.constant 3 : index
    %c0_24 = arith.constant 0 : index
    %c0_25 = arith.constant 0 : index
    %21 = vector.load %arg1[%c3, %c0_24, %c0_25] : memref<4x12x8xf32, #tpu.memory_space<vmem>>, vector<1x12x8xf32>
    %22 = vector.shape_cast %21 : vector<1x12x8xf32> to vector<12x8xf32>
    %c0_26 = arith.constant 0 : index
    %c0_27 = arith.constant 0 : index
    %c0_28 = arith.constant 0 : index
    %23 = vector.load %arg8[%c0_26, %c0_27, %c0_28] : memref<3x8x64xf32, #tpu.memory_space<vmem>>, vector<1x8x64xf32>
    %24 = vector.shape_cast %23 : vector<1x8x64xf32> to vector<8x64xf32>
    %cst_29 = arith.constant dense<0.000000e+00> : vector<12x64xf32>
    %25 = tpu.matmul %22, %24, %cst_29 {dimension_numbers = #tpu.dot_dimension_numbers<[1], [0], [0], [1], [0, 0, 1, 1], [], []>} : vector<12x8xf32>, vector<8x64xf32>, vector<12x64xf32> -> vector<12x64xf32>
    %c0_30 = arith.constant 0 : index
    %c0_31 = arith.constant 0 : index
    %c0_32 = arith.constant 0 : index
    %26 = vector.load %arg1[%c0_30, %c0_31, %c0_32] : memref<4x12x8xf32, #tpu.memory_space<vmem>>, vector<1x12x8xf32>
    %27 = vector.shape_cast %26 : vector<1x12x8xf32> to vector<12x8xf32>
    %c1_33 = arith.constant 1 : index
    %c0_34 = arith.constant 0 : index
    %c0_35 = arith.constant 0 : index
    %28 = vector.load %arg8[%c1_33, %c0_34, %c0_35] : memref<3x8x64xf32, #tpu.memory_space<vmem>>, vector<1x8x64xf32>
    %29 = vector.shape_cast %28 : vector<1x8x64xf32> to vector<8x64xf32>
    %cst_36 = arith.constant dense<0.000000e+00> : vector<12x64xf32>
    %30 = tpu.matmul %27, %29, %cst_36 {dimension_numbers = #tpu.dot_dimension_numbers<[1], [0], [0], [1], [0, 0, 1, 1], [], []>} : vector<12x8xf32>, vector<8x64xf32>, vector<12x64xf32> -> vector<12x64xf32>
    %c1_37 = arith.constant 1 : index
    %c0_38 = arith.constant 0 : index
    %c0_39 = arith.constant 0 : index
    %31 = vector.load %arg1[%c1_37, %c0_38, %c0_39] : memref<4x12x8xf32, #tpu.memory_space<vmem>>, vector<1x12x8xf32>
    %32 = vector.shape_cast %31 : vector<1x12x8xf32> to vector<12x8xf32>
    %c1_40 = arith.constant 1 : index
    %c0_41 = arith.constant 0 : index
    %c0_42 = arith.constant 0 : index
    %33 = vector.load %arg8[%c1_40, %c0_41, %c0_42] : memref<3x8x64xf32, #tpu.memory_space<vmem>>, vector<1x8x64xf32>
    %34 = vector.shape_cast %33 : vector<1x8x64xf32> to vector<8x64xf32>
    %cst_43 = arith.constant dense<0.000000e+00> : vector<12x64xf32>
    %35 = tpu.matmul %32, %34, %cst_43 {dimension_numbers = #tpu.dot_dimension_numbers<[1], [0], [0], [1], [0, 0, 1, 1], [], []>} : vector<12x8xf32>, vector<8x64xf32>, vector<12x64xf32> -> vector<12x64xf32>
    %c2_44 = arith.constant 2 : index
    %c0_45 = arith.constant 0 : index
    %c0_46 = arith.constant 0 : index
    %36 = vector.load %arg1[%c2_44, %c0_45, %c0_46] : memref<4x12x8xf32, #tpu.memory_space<vmem>>, vector<1x12x8xf32>
    %37 = vector.shape_cast %36 : vector<1x12x8xf32> to vector<12x8xf32>
    %c1_47 = arith.constant 1 : index
    %c0_48 = arith.constant 0 : index
    %c0_49 = arith.constant 0 : index
    %38 = vector.load %arg8[%c1_47, %c0_48, %c0_49] : memref<3x8x64xf32, #tpu.memory_space<vmem>>, vector<1x8x64xf32>
    %39 = vector.shape_cast %38 : vector<1x8x64xf32> to vector<8x64xf32>
    %cst_50 = arith.constant dense<0.000000e+00> : vector<12x64xf32>
    %40 = tpu.matmul %37, %39, %cst_50 {dimension_numbers = #tpu.dot_dimension_numbers<[1], [0], [0], [1], [0, 0, 1, 1], [], []>} : vector<12x8xf32>, vector<8x64xf32>, vector<12x64xf32> -> vector<12x64xf32>
    %c3_51 = arith.constant 3 : index
    %c0_52 = arith.constant 0 : index
    %c0_53 = arith.constant 0 : index
    %41 = vector.load %arg1[%c3_51, %c0_52, %c0_53] : memref<4x12x8xf32, #tpu.memory_space<vmem>>, vector<1x12x8xf32>
    %42 = vector.shape_cast %41 : vector<1x12x8xf32> to vector<12x8xf32>
    %c1_54 = arith.constant 1 : index
    %c0_55 = arith.constant 0 : index
    %c0_56 = arith.constant 0 : index
    %43 = vector.load %arg8[%c1_54, %c0_55, %c0_56] : memref<3x8x64xf32, #tpu.memory_space<vmem>>, vector<1x8x64xf32>
    %44 = vector.shape_cast %43 : vector<1x8x64xf32> to vector<8x64xf32>
    %cst_57 = arith.constant dense<0.000000e+00> : vector<12x64xf32>
    %45 = tpu.matmul %42, %44, %cst_57 {dimension_numbers = #tpu.dot_dimension_numbers<[1], [0], [0], [1], [0, 0, 1, 1], [], []>} : vector<12x8xf32>, vector<8x64xf32>, vector<12x64xf32> -> vector<12x64xf32>
    %c0_58 = arith.constant 0 : index
    %c0_59 = arith.constant 0 : index
    %c0_60 = arith.constant 0 : index
    %46 = vector.load %arg1[%c0_58, %c0_59, %c0_60] : memref<4x12x8xf32, #tpu.memory_space<vmem>>, vector<1x12x8xf32>
    %47 = vector.shape_cast %46 : vector<1x12x8xf32> to vector<12x8xf32>
    %c2_61 = arith.constant 2 : index
    %c0_62 = arith.constant 0 : index
    %c0_63 = arith.constant 0 : index
    %48 = vector.load %arg8[%c2_61, %c0_62, %c0_63] : memref<3x8x64xf32, #tpu.memory_space<vmem>>, vector<1x8x64xf32>
    %49 = vector.shape_cast %48 : vector<1x8x64xf32> to vector<8x64xf32>
    %cst_64 = arith.constant dense<0.000000e+00> : vector<12x64xf32>
    %50 = tpu.matmul %47, %49, %cst_64 {dimension_numbers = #tpu.dot_dimension_numbers<[1], [0], [0], [1], [0, 0, 1, 1], [], []>} : vector<12x8xf32>, vector<8x64xf32>, vector<12x64xf32> -> vector<12x64xf32>
    %c1_65 = arith.constant 1 : index
    %c0_66 = arith.constant 0 : index
    %c0_67 = arith.constant 0 : index
    %51 = vector.load %arg1[%c1_65, %c0_66, %c0_67] : memref<4x12x8xf32, #tpu.memory_space<vmem>>, vector<1x12x8xf32>
    %52 = vector.shape_cast %51 : vector<1x12x8xf32> to vector<12x8xf32>
    %c2_68 = arith.constant 2 : index
    %c0_69 = arith.constant 0 : index
    %c0_70 = arith.constant 0 : index
    %53 = vector.load %arg8[%c2_68, %c0_69, %c0_70] : memref<3x8x64xf32, #tpu.memory_space<vmem>>, vector<1x8x64xf32>
    %54 = vector.shape_cast %53 : vector<1x8x64xf32> to vector<8x64xf32>
    %cst_71 = arith.constant dense<0.000000e+00> : vector<12x64xf32>
    %55 = tpu.matmul %52, %54, %cst_71 {dimension_numbers = #tpu.dot_dimension_numbers<[1], [0], [0], [1], [0, 0, 1, 1], [], []>} : vector<12x8xf32>, vector<8x64xf32>, vector<12x64xf32> -> vector<12x64xf32>
    %c2_72 = arith.constant 2 : index
    %c0_73 = arith.constant 0 : index
    %c0_74 = arith.constant 0 : index
    %56 = vector.load %arg1[%c2_72, %c0_73, %c0_74] : memref<4x12x8xf32, #tpu.memory_space<vmem>>, vector<1x12x8xf32>
    %57 = vector.shape_cast %56 : vector<1x12x8xf32> to vector<12x8xf32>
    %c2_75 = arith.constant 2 : index
    %c0_76 = arith.constant 0 : index
    %c0_77 = arith.constant 0 : index
    %58 = vector.load %arg8[%c2_75, %c0_76, %c0_77] : memref<3x8x64xf32, #tpu.memory_space<vmem>>, vector<1x8x64xf32>
    %59 = vector.shape_cast %58 : vector<1x8x64xf32> to vector<8x64xf32>
    %cst_78 = arith.constant dense<0.000000e+00> : vector<12x64xf32>
    %60 = tpu.matmul %57, %59, %cst_78 {dimension_numbers = #tpu.dot_dimension_numbers<[1], [0], [0], [1], [0, 0, 1, 1], [], []>} : vector<12x8xf32>, vector<8x64xf32>, vector<12x64xf32> -> vector<12x64xf32>
    %c3_79 = arith.constant 3 : index
    %c0_80 = arith.constant 0 : index
    %c0_81 = arith.constant 0 : index
    %61 = vector.load %arg1[%c3_79, %c0_80, %c0_81] : memref<4x12x8xf32, #tpu.memory_space<vmem>>, vector<1x12x8xf32>
    %62 = vector.shape_cast %61 : vector<1x12x8xf32> to vector<12x8xf32>
    %c2_82 = arith.constant 2 : index
    %c0_83 = arith.constant 0 : index
    %c0_84 = arith.constant 0 : index
    %63 = vector.load %arg8[%c2_82, %c0_83, %c0_84] : memref<3x8x64xf32, #tpu.memory_space<vmem>>, vector<1x8x64xf32>
    %64 = vector.shape_cast %63 : vector<1x8x64xf32> to vector<8x64xf32>
    %cst_85 = arith.constant dense<0.000000e+00> : vector<12x64xf32>
    %65 = tpu.matmul %62, %64, %cst_85 {dimension_numbers = #tpu.dot_dimension_numbers<[1], [0], [0], [1], [0, 0, 1, 1], [], []>} : vector<12x8xf32>, vector<8x64xf32>, vector<12x64xf32> -> vector<12x64xf32>
    %c0_86 = arith.constant 0 : index
    %c0_87 = arith.constant 0 : index
    %c0_88 = arith.constant 0 : index
    %66 = vector.load %arg6[%c0_86, %c0_87, %c0_88] : memref<3x32x64xf32, #tpu.memory_space<vmem>>, vector<1x32x64xf32>
    %67 = vector.shape_cast %66 : vector<1x32x64xf32> to vector<32x64xf32>
    %cst_89 = arith.constant dense<0.000000e+00> : vector<12x64xf32>
    %68 = tpu.matmul %5, %67, %cst_89 {dimension_numbers = #tpu.dot_dimension_numbers<[1], [0], [0], [1], [0, 0, 1, 1], [], []>} : vector<12x32xf32>, vector<32x64xf32>, vector<12x64xf32> -> vector<12x64xf32>
    %c0_90 = arith.constant 0 : index
    %c0_91 = arith.constant 0 : index
    %c0_92 = arith.constant 0 : index
    %69 = vector.load %arg9[%c0_90, %c0_91, %c0_92] : memref<3x1x64xf32, #tpu.memory_space<vmem>>, vector<1x1x64xf32>
    %70 = vector.shape_cast %69 : vector<1x1x64xf32> to vector<1x64xf32>
    %71 = vector.broadcast %70 : vector<1x64xf32> to vector<12x64xf32>
    %72 = arith.addf %68, %71 : vector<12x64xf32>
    %c0_93 = arith.constant 0 : index
    %c0_94 = arith.constant 0 : index
    %c0_95 = arith.constant 0 : index
    %73 = vector.load %arg7[%c0_93, %c0_94, %c0_95] : memref<3x32x64xf32, #tpu.memory_space<vmem>>, vector<1x32x64xf32>
    %74 = vector.shape_cast %73 : vector<1x32x64xf32> to vector<32x64xf32>
    %cst_96 = arith.constant dense<0.000000e+00> : vector<12x64xf32>
    %75 = tpu.matmul %5, %74, %cst_96 {dimension_numbers = #tpu.dot_dimension_numbers<[1], [0], [0], [1], [0, 0, 1, 1], [], []>} : vector<12x32xf32>, vector<32x64xf32>, vector<12x64xf32> -> vector<12x64xf32>
    %c0_97 = arith.constant 0 : index
    %c0_98 = arith.constant 0 : index
    %c0_99 = arith.constant 0 : index
    %76 = vector.load %arg2[%c0_97, %c0_98, %c0_99] : memref<4x12x12xf32, #tpu.memory_space<vmem>>, vector<1x12x12xf32>
    %77 = vector.shape_cast %76 : vector<1x12x12xf32> to vector<12x12xf32>
    %cst_100 = arith.constant dense<0.000000e+00> : vector<12x64xf32>
    %78 = tpu.matmul %77, %75, %cst_100 {dimension_numbers = #tpu.dot_dimension_numbers<[1], [0], [0], [1], [0, 0, 1, 1], [], []>} : vector<12x12xf32>, vector<12x64xf32>, vector<12x64xf32> -> vector<12x64xf32>
    %79 = arith.addf %72, %78 : vector<12x64xf32>
    %80 = arith.addf %79, %10 : vector<12x64xf32>
    %c1_101 = arith.constant 1 : index
    %c0_102 = arith.constant 0 : index
    %c0_103 = arith.constant 0 : index
    %81 = vector.load %arg2[%c1_101, %c0_102, %c0_103] : memref<4x12x12xf32, #tpu.memory_space<vmem>>, vector<1x12x12xf32>
    %82 = vector.shape_cast %81 : vector<1x12x12xf32> to vector<12x12xf32>
    %cst_104 = arith.constant dense<0.000000e+00> : vector<12x64xf32>
    %83 = tpu.matmul %82, %75, %cst_104 {dimension_numbers = #tpu.dot_dimension_numbers<[1], [0], [0], [1], [0, 0, 1, 1], [], []>} : vector<12x12xf32>, vector<12x64xf32>, vector<12x64xf32> -> vector<12x64xf32>
    %84 = arith.addf %72, %83 : vector<12x64xf32>
    %85 = arith.addf %84, %15 : vector<12x64xf32>
    %c2_105 = arith.constant 2 : index
    %c0_106 = arith.constant 0 : index
    %c0_107 = arith.constant 0 : index
    %86 = vector.load %arg2[%c2_105, %c0_106, %c0_107] : memref<4x12x12xf32, #tpu.memory_space<vmem>>, vector<1x12x12xf32>
    %87 = vector.shape_cast %86 : vector<1x12x12xf32> to vector<12x12xf32>
    %cst_108 = arith.constant dense<0.000000e+00> : vector<12x64xf32>
    %88 = tpu.matmul %87, %75, %cst_108 {dimension_numbers = #tpu.dot_dimension_numbers<[1], [0], [0], [1], [0, 0, 1, 1], [], []>} : vector<12x12xf32>, vector<12x64xf32>, vector<12x64xf32> -> vector<12x64xf32>
    %89 = arith.addf %72, %88 : vector<12x64xf32>
    %90 = arith.addf %89, %20 : vector<12x64xf32>
    %c3_109 = arith.constant 3 : index
    %c0_110 = arith.constant 0 : index
    %c0_111 = arith.constant 0 : index
    %91 = vector.load %arg2[%c3_109, %c0_110, %c0_111] : memref<4x12x12xf32, #tpu.memory_space<vmem>>, vector<1x12x12xf32>
    %92 = vector.shape_cast %91 : vector<1x12x12xf32> to vector<12x12xf32>
    %cst_112 = arith.constant dense<0.000000e+00> : vector<12x64xf32>
    %93 = tpu.matmul %92, %75, %cst_112 {dimension_numbers = #tpu.dot_dimension_numbers<[1], [0], [0], [1], [0, 0, 1, 1], [], []>} : vector<12x12xf32>, vector<12x64xf32>, vector<12x64xf32> -> vector<12x64xf32>
    %94 = arith.addf %72, %93 : vector<12x64xf32>
    %95 = arith.addf %94, %25 : vector<12x64xf32>
    %cst_113 = arith.constant dense<0.000000e+00> : vector<64xf32>
    %96 = vector.multi_reduction <add>, %80, %cst_113 [0] : vector<12x64xf32> to vector<64xf32>
    %97 = vector.shape_cast %96 : vector<64xf32> to vector<1x64xf32>
    %cst_114 = arith.constant 0.000000e+00 : f32
    %98 = vector.broadcast %cst_114 : f32 to vector<1x64xf32>
    %99 = arith.addf %98, %97 : vector<1x64xf32>
    %cst_115 = arith.constant dense<0.000000e+00> : vector<64xf32>
    %100 = vector.multi_reduction <add>, %85, %cst_115 [0] : vector<12x64xf32> to vector<64xf32>
    %101 = vector.shape_cast %100 : vector<64xf32> to vector<1x64xf32>
    %102 = arith.addf %99, %101 : vector<1x64xf32>
    %cst_116 = arith.constant dense<0.000000e+00> : vector<64xf32>
    %103 = vector.multi_reduction <add>, %90, %cst_116 [0] : vector<12x64xf32> to vector<64xf32>
    %104 = vector.shape_cast %103 : vector<64xf32> to vector<1x64xf32>
    %105 = arith.addf %102, %104 : vector<1x64xf32>
    %cst_117 = arith.constant dense<0.000000e+00> : vector<64xf32>
    %106 = vector.multi_reduction <add>, %95, %cst_117 [0] : vector<12x64xf32> to vector<64xf32>
    %107 = vector.shape_cast %106 : vector<64xf32> to vector<1x64xf32>
    %108 = arith.addf %105, %107 : vector<1x64xf32>
    %cst_118 = arith.constant 0.020833334 : f32
    %109 = vector.broadcast %cst_118 : f32 to vector<1x64xf32>
    %110 = arith.mulf %108, %109 : vector<1x64xf32>
    %111 = vector.broadcast %110 : vector<1x64xf32> to vector<12x64xf32>
    %112 = arith.subf %80, %111 : vector<12x64xf32>
    %113 = arith.mulf %112, %112 : vector<12x64xf32>
    %cst_119 = arith.constant dense<0.000000e+00> : vector<64xf32>
    %114 = vector.multi_reduction <add>, %113, %cst_119 [0] : vector<12x64xf32> to vector<64xf32>
    %115 = vector.shape_cast %114 : vector<64xf32> to vector<1x64xf32>
    %cst_120 = arith.constant 0.000000e+00 : f32
    %116 = vector.broadcast %cst_120 : f32 to vector<1x64xf32>
    %117 = arith.addf %116, %115 : vector<1x64xf32>
    %118 = vector.broadcast %110 : vector<1x64xf32> to vector<12x64xf32>
    %119 = arith.subf %85, %118 : vector<12x64xf32>
    %120 = arith.mulf %119, %119 : vector<12x64xf32>
    %cst_121 = arith.constant dense<0.000000e+00> : vector<64xf32>
    %121 = vector.multi_reduction <add>, %120, %cst_121 [0] : vector<12x64xf32> to vector<64xf32>
    %122 = vector.shape_cast %121 : vector<64xf32> to vector<1x64xf32>
    %123 = arith.addf %117, %122 : vector<1x64xf32>
    %124 = vector.broadcast %110 : vector<1x64xf32> to vector<12x64xf32>
    %125 = arith.subf %90, %124 : vector<12x64xf32>
    %126 = arith.mulf %125, %125 : vector<12x64xf32>
    %cst_122 = arith.constant dense<0.000000e+00> : vector<64xf32>
    %127 = vector.multi_reduction <add>, %126, %cst_122 [0] : vector<12x64xf32> to vector<64xf32>
    %128 = vector.shape_cast %127 : vector<64xf32> to vector<1x64xf32>
    %129 = arith.addf %123, %128 : vector<1x64xf32>
    %130 = vector.broadcast %110 : vector<1x64xf32> to vector<12x64xf32>
    %131 = arith.subf %95, %130 : vector<12x64xf32>
    %132 = arith.mulf %131, %131 : vector<12x64xf32>
    %cst_123 = arith.constant dense<0.000000e+00> : vector<64xf32>
    %133 = vector.multi_reduction <add>, %132, %cst_123 [0] : vector<12x64xf32> to vector<64xf32>
    %134 = vector.shape_cast %133 : vector<64xf32> to vector<1x64xf32>
    %135 = arith.addf %129, %134 : vector<1x64xf32>
    %cst_124 = arith.constant 0.020833334 : f32
    %136 = vector.broadcast %cst_124 : f32 to vector<1x64xf32>
    %137 = arith.mulf %135, %136 : vector<1x64xf32>
    %c0_125 = arith.constant 0 : index
    %c0_126 = arith.constant 0 : index
    %c0_127 = arith.constant 0 : index
    %138 = vector.load %arg10[%c0_125, %c0_126, %c0_127] : memref<3x1x64xf32, #tpu.memory_space<vmem>>, vector<1x1x64xf32>
    %139 = vector.shape_cast %138 : vector<1x1x64xf32> to vector<1x64xf32>
    %cst_128 = arith.constant 9.99999974E-6 : f32
    %140 = vector.broadcast %cst_128 : f32 to vector<1x64xf32>
    %141 = arith.addf %137, %140 : vector<1x64xf32>
    %142 = math.rsqrt %141 : vector<1x64xf32>
    %143 = arith.mulf %139, %142 : vector<1x64xf32>
    %c0_129 = arith.constant 0 : index
    %c0_130 = arith.constant 0 : index
    %c0_131 = arith.constant 0 : index
    %144 = vector.load %arg11[%c0_129, %c0_130, %c0_131] : memref<3x1x64xf32, #tpu.memory_space<vmem>>, vector<1x1x64xf32>
    %145 = vector.shape_cast %144 : vector<1x1x64xf32> to vector<1x64xf32>
    %146 = arith.mulf %110, %143 : vector<1x64xf32>
    %147 = arith.subf %145, %146 : vector<1x64xf32>
    %cst_132 = arith.constant 0.000000e+00 : f32
    %148 = vector.broadcast %cst_132 : f32 to vector<12x32xf32>
    %149 = vector.broadcast %143 : vector<1x64xf32> to vector<12x64xf32>
    %150 = arith.mulf %80, %149 : vector<12x64xf32>
    %151 = vector.broadcast %147 : vector<1x64xf32> to vector<12x64xf32>
    %152 = arith.addf %150, %151 : vector<12x64xf32>
    %153 = vector.extract_strided_slice %152 {offsets = [0, 0], sizes = [12, 32], strides = [1, 1]} : vector<12x64xf32> to vector<12x32xf32>
    %154 = math.absf %153 : vector<12x32xf32>
    %cst_133 = arith.constant 0.000000e+00 : f32
    %155 = vector.broadcast %cst_133 : f32 to vector<12x32xf32>
    %156 = arith.subf %155, %154 : vector<12x32xf32>
    %157 = math.exp %156 : vector<12x32xf32>
    %cst_134 = arith.constant 1.000000e+00 : f32
    %158 = vector.broadcast %cst_134 : f32 to vector<12x32xf32>
    %159 = arith.addf %158, %157 : vector<12x32xf32>
    %cst_135 = arith.constant 1.000000e+00 : f32
    %160 = vector.broadcast %cst_135 : f32 to vector<12x32xf32>
    %161 = arith.divf %160, %159 : vector<12x32xf32>
    %cst_136 = arith.constant 0.000000e+00 : f32
    %162 = vector.broadcast %cst_136 : f32 to vector<12x32xf32>
    %163 = arith.cmpf oge, %153, %162 : vector<12x32xf32>
    %164 = arith.mulf %157, %161 : vector<12x32xf32>
    %165 = arith.select %163, %161, %164 : vector<12x32xi1>, vector<12x32xf32>
    %166 = vector.extract_strided_slice %152 {offsets = [0, 32], sizes = [12, 32], strides = [1, 1]} : vector<12x64xf32> to vector<12x32xf32>
    %cst_137 = arith.constant 2.000000e+01 : f32
    %167 = vector.broadcast %cst_137 : f32 to vector<12x32xf32>
    %168 = arith.cmpf ogt, %166, %167 : vector<12x32xf32>
    %cst_138 = arith.constant 2.000000e+01 : f32
    %169 = vector.broadcast %cst_138 : f32 to vector<12x32xf32>
    %170 = arith.minimumf %166, %169 : vector<12x32xf32>
    %171 = math.exp %170 : vector<12x32xf32>
    %172 = math.log1p %171 : vector<12x32xf32>
    %173 = arith.select %168, %166, %172 : vector<12x32xi1>, vector<12x32xf32>
    %174 = arith.mulf %165, %173 : vector<12x32xf32>
    %175 = arith.addf %148, %174 : vector<12x32xf32>
    %176 = vector.broadcast %143 : vector<1x64xf32> to vector<12x64xf32>
    %177 = arith.mulf %85, %176 : vector<12x64xf32>
    %178 = vector.broadcast %147 : vector<1x64xf32> to vector<12x64xf32>
    %179 = arith.addf %177, %178 : vector<12x64xf32>
    %180 = vector.extract_strided_slice %179 {offsets = [0, 0], sizes = [12, 32], strides = [1, 1]} : vector<12x64xf32> to vector<12x32xf32>
    %181 = math.absf %180 : vector<12x32xf32>
    %cst_139 = arith.constant 0.000000e+00 : f32
    %182 = vector.broadcast %cst_139 : f32 to vector<12x32xf32>
    %183 = arith.subf %182, %181 : vector<12x32xf32>
    %184 = math.exp %183 : vector<12x32xf32>
    %cst_140 = arith.constant 1.000000e+00 : f32
    %185 = vector.broadcast %cst_140 : f32 to vector<12x32xf32>
    %186 = arith.addf %185, %184 : vector<12x32xf32>
    %cst_141 = arith.constant 1.000000e+00 : f32
    %187 = vector.broadcast %cst_141 : f32 to vector<12x32xf32>
    %188 = arith.divf %187, %186 : vector<12x32xf32>
    %cst_142 = arith.constant 0.000000e+00 : f32
    %189 = vector.broadcast %cst_142 : f32 to vector<12x32xf32>
    %190 = arith.cmpf oge, %180, %189 : vector<12x32xf32>
    %191 = arith.mulf %184, %188 : vector<12x32xf32>
    %192 = arith.select %190, %188, %191 : vector<12x32xi1>, vector<12x32xf32>
    %193 = vector.extract_strided_slice %179 {offsets = [0, 32], sizes = [12, 32], strides = [1, 1]} : vector<12x64xf32> to vector<12x32xf32>
    %cst_143 = arith.constant 2.000000e+01 : f32
    %194 = vector.broadcast %cst_143 : f32 to vector<12x32xf32>
    %195 = arith.cmpf ogt, %193, %194 : vector<12x32xf32>
    %cst_144 = arith.constant 2.000000e+01 : f32
    %196 = vector.broadcast %cst_144 : f32 to vector<12x32xf32>
    %197 = arith.minimumf %193, %196 : vector<12x32xf32>
    %198 = math.exp %197 : vector<12x32xf32>
    %199 = math.log1p %198 : vector<12x32xf32>
    %200 = arith.select %195, %193, %199 : vector<12x32xi1>, vector<12x32xf32>
    %201 = arith.mulf %192, %200 : vector<12x32xf32>
    %202 = arith.addf %175, %201 : vector<12x32xf32>
    %203 = vector.broadcast %143 : vector<1x64xf32> to vector<12x64xf32>
    %204 = arith.mulf %90, %203 : vector<12x64xf32>
    %205 = vector.broadcast %147 : vector<1x64xf32> to vector<12x64xf32>
    %206 = arith.addf %204, %205 : vector<12x64xf32>
    %207 = vector.extract_strided_slice %206 {offsets = [0, 0], sizes = [12, 32], strides = [1, 1]} : vector<12x64xf32> to vector<12x32xf32>
    %208 = math.absf %207 : vector<12x32xf32>
    %cst_145 = arith.constant 0.000000e+00 : f32
    %209 = vector.broadcast %cst_145 : f32 to vector<12x32xf32>
    %210 = arith.subf %209, %208 : vector<12x32xf32>
    %211 = math.exp %210 : vector<12x32xf32>
    %cst_146 = arith.constant 1.000000e+00 : f32
    %212 = vector.broadcast %cst_146 : f32 to vector<12x32xf32>
    %213 = arith.addf %212, %211 : vector<12x32xf32>
    %cst_147 = arith.constant 1.000000e+00 : f32
    %214 = vector.broadcast %cst_147 : f32 to vector<12x32xf32>
    %215 = arith.divf %214, %213 : vector<12x32xf32>
    %cst_148 = arith.constant 0.000000e+00 : f32
    %216 = vector.broadcast %cst_148 : f32 to vector<12x32xf32>
    %217 = arith.cmpf oge, %207, %216 : vector<12x32xf32>
    %218 = arith.mulf %211, %215 : vector<12x32xf32>
    %219 = arith.select %217, %215, %218 : vector<12x32xi1>, vector<12x32xf32>
    %220 = vector.extract_strided_slice %206 {offsets = [0, 32], sizes = [12, 32], strides = [1, 1]} : vector<12x64xf32> to vector<12x32xf32>
    %cst_149 = arith.constant 2.000000e+01 : f32
    %221 = vector.broadcast %cst_149 : f32 to vector<12x32xf32>
    %222 = arith.cmpf ogt, %220, %221 : vector<12x32xf32>
    %cst_150 = arith.constant 2.000000e+01 : f32
    %223 = vector.broadcast %cst_150 : f32 to vector<12x32xf32>
    %224 = arith.minimumf %220, %223 : vector<12x32xf32>
    %225 = math.exp %224 : vector<12x32xf32>
    %226 = math.log1p %225 : vector<12x32xf32>
    %227 = arith.select %222, %220, %226 : vector<12x32xi1>, vector<12x32xf32>
    %228 = arith.mulf %219, %227 : vector<12x32xf32>
    %229 = arith.addf %202, %228 : vector<12x32xf32>
    %230 = vector.broadcast %143 : vector<1x64xf32> to vector<12x64xf32>
    %231 = arith.mulf %95, %230 : vector<12x64xf32>
    %232 = vector.broadcast %147 : vector<1x64xf32> to vector<12x64xf32>
    %233 = arith.addf %231, %232 : vector<12x64xf32>
    %234 = vector.extract_strided_slice %233 {offsets = [0, 0], sizes = [12, 32], strides = [1, 1]} : vector<12x64xf32> to vector<12x32xf32>
    %235 = math.absf %234 : vector<12x32xf32>
    %cst_151 = arith.constant 0.000000e+00 : f32
    %236 = vector.broadcast %cst_151 : f32 to vector<12x32xf32>
    %237 = arith.subf %236, %235 : vector<12x32xf32>
    %238 = math.exp %237 : vector<12x32xf32>
    %cst_152 = arith.constant 1.000000e+00 : f32
    %239 = vector.broadcast %cst_152 : f32 to vector<12x32xf32>
    %240 = arith.addf %239, %238 : vector<12x32xf32>
    %cst_153 = arith.constant 1.000000e+00 : f32
    %241 = vector.broadcast %cst_153 : f32 to vector<12x32xf32>
    %242 = arith.divf %241, %240 : vector<12x32xf32>
    %cst_154 = arith.constant 0.000000e+00 : f32
    %243 = vector.broadcast %cst_154 : f32 to vector<12x32xf32>
    %244 = arith.cmpf oge, %234, %243 : vector<12x32xf32>
    %245 = arith.mulf %238, %242 : vector<12x32xf32>
    %246 = arith.select %244, %242, %245 : vector<12x32xi1>, vector<12x32xf32>
    %247 = vector.extract_strided_slice %233 {offsets = [0, 32], sizes = [12, 32], strides = [1, 1]} : vector<12x64xf32> to vector<12x32xf32>
    %cst_155 = arith.constant 2.000000e+01 : f32
    %248 = vector.broadcast %cst_155 : f32 to vector<12x32xf32>
    %249 = arith.cmpf ogt, %247, %248 : vector<12x32xf32>
    %cst_156 = arith.constant 2.000000e+01 : f32
    %250 = vector.broadcast %cst_156 : f32 to vector<12x32xf32>
    %251 = arith.minimumf %247, %250 : vector<12x32xf32>
    %252 = math.exp %251 : vector<12x32xf32>
    %253 = math.log1p %252 : vector<12x32xf32>
    %254 = arith.select %249, %247, %253 : vector<12x32xi1>, vector<12x32xf32>
    %255 = arith.mulf %246, %254 : vector<12x32xf32>
    %256 = arith.addf %229, %255 : vector<12x32xf32>
    %cst_157 = arith.constant dense<0.000000e+00> : vector<32xf32>
    %257 = vector.multi_reduction <add>, %256, %cst_157 [0] : vector<12x32xf32> to vector<32xf32>
    %258 = vector.shape_cast %257 : vector<32xf32> to vector<1x32xf32>
    %cst_158 = arith.constant 0.0833333358 : f32
    %259 = vector.broadcast %cst_158 : f32 to vector<1x32xf32>
    %260 = arith.mulf %258, %259 : vector<1x32xf32>
    %261 = vector.broadcast %260 : vector<1x32xf32> to vector<12x32xf32>
    %262 = arith.subf %256, %261 : vector<12x32xf32>
    %263 = arith.mulf %262, %262 : vector<12x32xf32>
    %cst_159 = arith.constant dense<0.000000e+00> : vector<32xf32>
    %264 = vector.multi_reduction <add>, %263, %cst_159 [0] : vector<12x32xf32> to vector<32xf32>
    %265 = vector.shape_cast %264 : vector<32xf32> to vector<1x32xf32>
    %cst_160 = arith.constant 0.0833333358 : f32
    %266 = vector.broadcast %cst_160 : f32 to vector<1x32xf32>
    %267 = arith.mulf %265, %266 : vector<1x32xf32>
    %268 = vector.broadcast %260 : vector<1x32xf32> to vector<12x32xf32>
    %269 = arith.subf %256, %268 : vector<12x32xf32>
    %c0_161 = arith.constant 0 : index
    %c0_162 = arith.constant 0 : index
    %c0_163 = arith.constant 0 : index
    %270 = vector.load %arg12[%c0_161, %c0_162, %c0_163] : memref<3x1x32xf32, #tpu.memory_space<vmem>>, vector<1x1x32xf32>
    %271 = vector.shape_cast %270 : vector<1x1x32xf32> to vector<1x32xf32>
    %cst_164 = arith.constant 9.99999974E-6 : f32
    %272 = vector.broadcast %cst_164 : f32 to vector<1x32xf32>
    %273 = arith.addf %267, %272 : vector<1x32xf32>
    %274 = math.rsqrt %273 : vector<1x32xf32>
    %275 = arith.mulf %271, %274 : vector<1x32xf32>
    %276 = vector.broadcast %275 : vector<1x32xf32> to vector<12x32xf32>
    %277 = arith.mulf %269, %276 : vector<12x32xf32>
    %c0_165 = arith.constant 0 : index
    %c0_166 = arith.constant 0 : index
    %c0_167 = arith.constant 0 : index
    %278 = vector.load %arg13[%c0_165, %c0_166, %c0_167] : memref<3x1x32xf32, #tpu.memory_space<vmem>>, vector<1x1x32xf32>
    %279 = vector.shape_cast %278 : vector<1x1x32xf32> to vector<1x32xf32>
    %280 = vector.broadcast %279 : vector<1x32xf32> to vector<12x32xf32>
    %281 = arith.addf %277, %280 : vector<12x32xf32>
    %282 = arith.addf %5, %281 : vector<12x32xf32>
    %cst_168 = arith.constant 2.000000e+01 : f32
    %283 = vector.broadcast %cst_168 : f32 to vector<12x32xf32>
    %284 = arith.cmpf ogt, %282, %283 : vector<12x32xf32>
    %cst_169 = arith.constant 2.000000e+01 : f32
    %285 = vector.broadcast %cst_169 : f32 to vector<12x32xf32>
    %286 = arith.minimumf %282, %285 : vector<12x32xf32>
    %287 = math.exp %286 : vector<12x32xf32>
    %288 = math.log1p %287 : vector<12x32xf32>
    %289 = arith.select %284, %282, %288 : vector<12x32xi1>, vector<12x32xf32>
    %c1_170 = arith.constant 1 : index
    %c0_171 = arith.constant 0 : index
    %c0_172 = arith.constant 0 : index
    %290 = vector.load %arg6[%c1_170, %c0_171, %c0_172] : memref<3x32x64xf32, #tpu.memory_space<vmem>>, vector<1x32x64xf32>
    %291 = vector.shape_cast %290 : vector<1x32x64xf32> to vector<32x64xf32>
    %cst_173 = arith.constant dense<0.000000e+00> : vector<12x64xf32>
    %292 = tpu.matmul %289, %291, %cst_173 {dimension_numbers = #tpu.dot_dimension_numbers<[1], [0], [0], [1], [0, 0, 1, 1], [], []>} : vector<12x32xf32>, vector<32x64xf32>, vector<12x64xf32> -> vector<12x64xf32>
    %c1_174 = arith.constant 1 : index
    %c0_175 = arith.constant 0 : index
    %c0_176 = arith.constant 0 : index
    %293 = vector.load %arg9[%c1_174, %c0_175, %c0_176] : memref<3x1x64xf32, #tpu.memory_space<vmem>>, vector<1x1x64xf32>
    %294 = vector.shape_cast %293 : vector<1x1x64xf32> to vector<1x64xf32>
    %295 = vector.broadcast %294 : vector<1x64xf32> to vector<12x64xf32>
    %296 = arith.addf %292, %295 : vector<12x64xf32>
    %c1_177 = arith.constant 1 : index
    %c0_178 = arith.constant 0 : index
    %c0_179 = arith.constant 0 : index
    %297 = vector.load %arg7[%c1_177, %c0_178, %c0_179] : memref<3x32x64xf32, #tpu.memory_space<vmem>>, vector<1x32x64xf32>
    %298 = vector.shape_cast %297 : vector<1x32x64xf32> to vector<32x64xf32>
    %cst_180 = arith.constant dense<0.000000e+00> : vector<12x64xf32>
    %299 = tpu.matmul %289, %298, %cst_180 {dimension_numbers = #tpu.dot_dimension_numbers<[1], [0], [0], [1], [0, 0, 1, 1], [], []>} : vector<12x32xf32>, vector<32x64xf32>, vector<12x64xf32> -> vector<12x64xf32>
    %c0_181 = arith.constant 0 : index
    %c0_182 = arith.constant 0 : index
    %c0_183 = arith.constant 0 : index
    %300 = vector.load %arg2[%c0_181, %c0_182, %c0_183] : memref<4x12x12xf32, #tpu.memory_space<vmem>>, vector<1x12x12xf32>
    %301 = vector.shape_cast %300 : vector<1x12x12xf32> to vector<12x12xf32>
    %cst_184 = arith.constant dense<0.000000e+00> : vector<12x64xf32>
    %302 = tpu.matmul %301, %299, %cst_184 {dimension_numbers = #tpu.dot_dimension_numbers<[1], [0], [0], [1], [0, 0, 1, 1], [], []>} : vector<12x12xf32>, vector<12x64xf32>, vector<12x64xf32> -> vector<12x64xf32>
    %303 = arith.addf %296, %302 : vector<12x64xf32>
    %304 = arith.addf %303, %30 : vector<12x64xf32>
    %c1_185 = arith.constant 1 : index
    %c0_186 = arith.constant 0 : index
    %c0_187 = arith.constant 0 : index
    %305 = vector.load %arg2[%c1_185, %c0_186, %c0_187] : memref<4x12x12xf32, #tpu.memory_space<vmem>>, vector<1x12x12xf32>
    %306 = vector.shape_cast %305 : vector<1x12x12xf32> to vector<12x12xf32>
    %cst_188 = arith.constant dense<0.000000e+00> : vector<12x64xf32>
    %307 = tpu.matmul %306, %299, %cst_188 {dimension_numbers = #tpu.dot_dimension_numbers<[1], [0], [0], [1], [0, 0, 1, 1], [], []>} : vector<12x12xf32>, vector<12x64xf32>, vector<12x64xf32> -> vector<12x64xf32>
    %308 = arith.addf %296, %307 : vector<12x64xf32>
    %309 = arith.addf %308, %35 : vector<12x64xf32>
    %c2_189 = arith.constant 2 : index
    %c0_190 = arith.constant 0 : index
    %c0_191 = arith.constant 0 : index
    %310 = vector.load %arg2[%c2_189, %c0_190, %c0_191] : memref<4x12x12xf32, #tpu.memory_space<vmem>>, vector<1x12x12xf32>
    %311 = vector.shape_cast %310 : vector<1x12x12xf32> to vector<12x12xf32>
    %cst_192 = arith.constant dense<0.000000e+00> : vector<12x64xf32>
    %312 = tpu.matmul %311, %299, %cst_192 {dimension_numbers = #tpu.dot_dimension_numbers<[1], [0], [0], [1], [0, 0, 1, 1], [], []>} : vector<12x12xf32>, vector<12x64xf32>, vector<12x64xf32> -> vector<12x64xf32>
    %313 = arith.addf %296, %312 : vector<12x64xf32>
    %314 = arith.addf %313, %40 : vector<12x64xf32>
    %c3_193 = arith.constant 3 : index
    %c0_194 = arith.constant 0 : index
    %c0_195 = arith.constant 0 : index
    %315 = vector.load %arg2[%c3_193, %c0_194, %c0_195] : memref<4x12x12xf32, #tpu.memory_space<vmem>>, vector<1x12x12xf32>
    %316 = vector.shape_cast %315 : vector<1x12x12xf32> to vector<12x12xf32>
    %cst_196 = arith.constant dense<0.000000e+00> : vector<12x64xf32>
    %317 = tpu.matmul %316, %299, %cst_196 {dimension_numbers = #tpu.dot_dimension_numbers<[1], [0], [0], [1], [0, 0, 1, 1], [], []>} : vector<12x12xf32>, vector<12x64xf32>, vector<12x64xf32> -> vector<12x64xf32>
    %318 = arith.addf %296, %317 : vector<12x64xf32>
    %319 = arith.addf %318, %45 : vector<12x64xf32>
    %cst_197 = arith.constant dense<0.000000e+00> : vector<64xf32>
    %320 = vector.multi_reduction <add>, %304, %cst_197 [0] : vector<12x64xf32> to vector<64xf32>
    %321 = vector.shape_cast %320 : vector<64xf32> to vector<1x64xf32>
    %cst_198 = arith.constant 0.000000e+00 : f32
    %322 = vector.broadcast %cst_198 : f32 to vector<1x64xf32>
    %323 = arith.addf %322, %321 : vector<1x64xf32>
    %cst_199 = arith.constant dense<0.000000e+00> : vector<64xf32>
    %324 = vector.multi_reduction <add>, %309, %cst_199 [0] : vector<12x64xf32> to vector<64xf32>
    %325 = vector.shape_cast %324 : vector<64xf32> to vector<1x64xf32>
    %326 = arith.addf %323, %325 : vector<1x64xf32>
    %cst_200 = arith.constant dense<0.000000e+00> : vector<64xf32>
    %327 = vector.multi_reduction <add>, %314, %cst_200 [0] : vector<12x64xf32> to vector<64xf32>
    %328 = vector.shape_cast %327 : vector<64xf32> to vector<1x64xf32>
    %329 = arith.addf %326, %328 : vector<1x64xf32>
    %cst_201 = arith.constant dense<0.000000e+00> : vector<64xf32>
    %330 = vector.multi_reduction <add>, %319, %cst_201 [0] : vector<12x64xf32> to vector<64xf32>
    %331 = vector.shape_cast %330 : vector<64xf32> to vector<1x64xf32>
    %332 = arith.addf %329, %331 : vector<1x64xf32>
    %cst_202 = arith.constant 0.020833334 : f32
    %333 = vector.broadcast %cst_202 : f32 to vector<1x64xf32>
    %334 = arith.mulf %332, %333 : vector<1x64xf32>
    %335 = vector.broadcast %334 : vector<1x64xf32> to vector<12x64xf32>
    %336 = arith.subf %304, %335 : vector<12x64xf32>
    %337 = arith.mulf %336, %336 : vector<12x64xf32>
    %cst_203 = arith.constant dense<0.000000e+00> : vector<64xf32>
    %338 = vector.multi_reduction <add>, %337, %cst_203 [0] : vector<12x64xf32> to vector<64xf32>
    %339 = vector.shape_cast %338 : vector<64xf32> to vector<1x64xf32>
    %cst_204 = arith.constant 0.000000e+00 : f32
    %340 = vector.broadcast %cst_204 : f32 to vector<1x64xf32>
    %341 = arith.addf %340, %339 : vector<1x64xf32>
    %342 = vector.broadcast %334 : vector<1x64xf32> to vector<12x64xf32>
    %343 = arith.subf %309, %342 : vector<12x64xf32>
    %344 = arith.mulf %343, %343 : vector<12x64xf32>
    %cst_205 = arith.constant dense<0.000000e+00> : vector<64xf32>
    %345 = vector.multi_reduction <add>, %344, %cst_205 [0] : vector<12x64xf32> to vector<64xf32>
    %346 = vector.shape_cast %345 : vector<64xf32> to vector<1x64xf32>
    %347 = arith.addf %341, %346 : vector<1x64xf32>
    %348 = vector.broadcast %334 : vector<1x64xf32> to vector<12x64xf32>
    %349 = arith.subf %314, %348 : vector<12x64xf32>
    %350 = arith.mulf %349, %349 : vector<12x64xf32>
    %cst_206 = arith.constant dense<0.000000e+00> : vector<64xf32>
    %351 = vector.multi_reduction <add>, %350, %cst_206 [0] : vector<12x64xf32> to vector<64xf32>
    %352 = vector.shape_cast %351 : vector<64xf32> to vector<1x64xf32>
    %353 = arith.addf %347, %352 : vector<1x64xf32>
    %354 = vector.broadcast %334 : vector<1x64xf32> to vector<12x64xf32>
    %355 = arith.subf %319, %354 : vector<12x64xf32>
    %356 = arith.mulf %355, %355 : vector<12x64xf32>
    %cst_207 = arith.constant dense<0.000000e+00> : vector<64xf32>
    %357 = vector.multi_reduction <add>, %356, %cst_207 [0] : vector<12x64xf32> to vector<64xf32>
    %358 = vector.shape_cast %357 : vector<64xf32> to vector<1x64xf32>
    %359 = arith.addf %353, %358 : vector<1x64xf32>
    %cst_208 = arith.constant 0.020833334 : f32
    %360 = vector.broadcast %cst_208 : f32 to vector<1x64xf32>
    %361 = arith.mulf %359, %360 : vector<1x64xf32>
    %c1_209 = arith.constant 1 : index
    %c0_210 = arith.constant 0 : index
    %c0_211 = arith.constant 0 : index
    %362 = vector.load %arg10[%c1_209, %c0_210, %c0_211] : memref<3x1x64xf32, #tpu.memory_space<vmem>>, vector<1x1x64xf32>
    %363 = vector.shape_cast %362 : vector<1x1x64xf32> to vector<1x64xf32>
    %cst_212 = arith.constant 9.99999974E-6 : f32
    %364 = vector.broadcast %cst_212 : f32 to vector<1x64xf32>
    %365 = arith.addf %361, %364 : vector<1x64xf32>
    %366 = math.rsqrt %365 : vector<1x64xf32>
    %367 = arith.mulf %363, %366 : vector<1x64xf32>
    %c1_213 = arith.constant 1 : index
    %c0_214 = arith.constant 0 : index
    %c0_215 = arith.constant 0 : index
    %368 = vector.load %arg11[%c1_213, %c0_214, %c0_215] : memref<3x1x64xf32, #tpu.memory_space<vmem>>, vector<1x1x64xf32>
    %369 = vector.shape_cast %368 : vector<1x1x64xf32> to vector<1x64xf32>
    %370 = arith.mulf %334, %367 : vector<1x64xf32>
    %371 = arith.subf %369, %370 : vector<1x64xf32>
    %cst_216 = arith.constant 0.000000e+00 : f32
    %372 = vector.broadcast %cst_216 : f32 to vector<12x32xf32>
    %373 = vector.broadcast %367 : vector<1x64xf32> to vector<12x64xf32>
    %374 = arith.mulf %304, %373 : vector<12x64xf32>
    %375 = vector.broadcast %371 : vector<1x64xf32> to vector<12x64xf32>
    %376 = arith.addf %374, %375 : vector<12x64xf32>
    %377 = vector.extract_strided_slice %376 {offsets = [0, 0], sizes = [12, 32], strides = [1, 1]} : vector<12x64xf32> to vector<12x32xf32>
    %378 = math.absf %377 : vector<12x32xf32>
    %cst_217 = arith.constant 0.000000e+00 : f32
    %379 = vector.broadcast %cst_217 : f32 to vector<12x32xf32>
    %380 = arith.subf %379, %378 : vector<12x32xf32>
    %381 = math.exp %380 : vector<12x32xf32>
    %cst_218 = arith.constant 1.000000e+00 : f32
    %382 = vector.broadcast %cst_218 : f32 to vector<12x32xf32>
    %383 = arith.addf %382, %381 : vector<12x32xf32>
    %cst_219 = arith.constant 1.000000e+00 : f32
    %384 = vector.broadcast %cst_219 : f32 to vector<12x32xf32>
    %385 = arith.divf %384, %383 : vector<12x32xf32>
    %cst_220 = arith.constant 0.000000e+00 : f32
    %386 = vector.broadcast %cst_220 : f32 to vector<12x32xf32>
    %387 = arith.cmpf oge, %377, %386 : vector<12x32xf32>
    %388 = arith.mulf %381, %385 : vector<12x32xf32>
    %389 = arith.select %387, %385, %388 : vector<12x32xi1>, vector<12x32xf32>
    %390 = vector.extract_strided_slice %376 {offsets = [0, 32], sizes = [12, 32], strides = [1, 1]} : vector<12x64xf32> to vector<12x32xf32>
    %cst_221 = arith.constant 2.000000e+01 : f32
    %391 = vector.broadcast %cst_221 : f32 to vector<12x32xf32>
    %392 = arith.cmpf ogt, %390, %391 : vector<12x32xf32>
    %cst_222 = arith.constant 2.000000e+01 : f32
    %393 = vector.broadcast %cst_222 : f32 to vector<12x32xf32>
    %394 = arith.minimumf %390, %393 : vector<12x32xf32>
    %395 = math.exp %394 : vector<12x32xf32>
    %396 = math.log1p %395 : vector<12x32xf32>
    %397 = arith.select %392, %390, %396 : vector<12x32xi1>, vector<12x32xf32>
    %398 = arith.mulf %389, %397 : vector<12x32xf32>
    %399 = arith.addf %372, %398 : vector<12x32xf32>
    %400 = vector.broadcast %367 : vector<1x64xf32> to vector<12x64xf32>
    %401 = arith.mulf %309, %400 : vector<12x64xf32>
    %402 = vector.broadcast %371 : vector<1x64xf32> to vector<12x64xf32>
    %403 = arith.addf %401, %402 : vector<12x64xf32>
    %404 = vector.extract_strided_slice %403 {offsets = [0, 0], sizes = [12, 32], strides = [1, 1]} : vector<12x64xf32> to vector<12x32xf32>
    %405 = math.absf %404 : vector<12x32xf32>
    %cst_223 = arith.constant 0.000000e+00 : f32
    %406 = vector.broadcast %cst_223 : f32 to vector<12x32xf32>
    %407 = arith.subf %406, %405 : vector<12x32xf32>
    %408 = math.exp %407 : vector<12x32xf32>
    %cst_224 = arith.constant 1.000000e+00 : f32
    %409 = vector.broadcast %cst_224 : f32 to vector<12x32xf32>
    %410 = arith.addf %409, %408 : vector<12x32xf32>
    %cst_225 = arith.constant 1.000000e+00 : f32
    %411 = vector.broadcast %cst_225 : f32 to vector<12x32xf32>
    %412 = arith.divf %411, %410 : vector<12x32xf32>
    %cst_226 = arith.constant 0.000000e+00 : f32
    %413 = vector.broadcast %cst_226 : f32 to vector<12x32xf32>
    %414 = arith.cmpf oge, %404, %413 : vector<12x32xf32>
    %415 = arith.mulf %408, %412 : vector<12x32xf32>
    %416 = arith.select %414, %412, %415 : vector<12x32xi1>, vector<12x32xf32>
    %417 = vector.extract_strided_slice %403 {offsets = [0, 32], sizes = [12, 32], strides = [1, 1]} : vector<12x64xf32> to vector<12x32xf32>
    %cst_227 = arith.constant 2.000000e+01 : f32
    %418 = vector.broadcast %cst_227 : f32 to vector<12x32xf32>
    %419 = arith.cmpf ogt, %417, %418 : vector<12x32xf32>
    %cst_228 = arith.constant 2.000000e+01 : f32
    %420 = vector.broadcast %cst_228 : f32 to vector<12x32xf32>
    %421 = arith.minimumf %417, %420 : vector<12x32xf32>
    %422 = math.exp %421 : vector<12x32xf32>
    %423 = math.log1p %422 : vector<12x32xf32>
    %424 = arith.select %419, %417, %423 : vector<12x32xi1>, vector<12x32xf32>
    %425 = arith.mulf %416, %424 : vector<12x32xf32>
    %426 = arith.addf %399, %425 : vector<12x32xf32>
    %427 = vector.broadcast %367 : vector<1x64xf32> to vector<12x64xf32>
    %428 = arith.mulf %314, %427 : vector<12x64xf32>
    %429 = vector.broadcast %371 : vector<1x64xf32> to vector<12x64xf32>
    %430 = arith.addf %428, %429 : vector<12x64xf32>
    %431 = vector.extract_strided_slice %430 {offsets = [0, 0], sizes = [12, 32], strides = [1, 1]} : vector<12x64xf32> to vector<12x32xf32>
    %432 = math.absf %431 : vector<12x32xf32>
    %cst_229 = arith.constant 0.000000e+00 : f32
    %433 = vector.broadcast %cst_229 : f32 to vector<12x32xf32>
    %434 = arith.subf %433, %432 : vector<12x32xf32>
    %435 = math.exp %434 : vector<12x32xf32>
    %cst_230 = arith.constant 1.000000e+00 : f32
    %436 = vector.broadcast %cst_230 : f32 to vector<12x32xf32>
    %437 = arith.addf %436, %435 : vector<12x32xf32>
    %cst_231 = arith.constant 1.000000e+00 : f32
    %438 = vector.broadcast %cst_231 : f32 to vector<12x32xf32>
    %439 = arith.divf %438, %437 : vector<12x32xf32>
    %cst_232 = arith.constant 0.000000e+00 : f32
    %440 = vector.broadcast %cst_232 : f32 to vector<12x32xf32>
    %441 = arith.cmpf oge, %431, %440 : vector<12x32xf32>
    %442 = arith.mulf %435, %439 : vector<12x32xf32>
    %443 = arith.select %441, %439, %442 : vector<12x32xi1>, vector<12x32xf32>
    %444 = vector.extract_strided_slice %430 {offsets = [0, 32], sizes = [12, 32], strides = [1, 1]} : vector<12x64xf32> to vector<12x32xf32>
    %cst_233 = arith.constant 2.000000e+01 : f32
    %445 = vector.broadcast %cst_233 : f32 to vector<12x32xf32>
    %446 = arith.cmpf ogt, %444, %445 : vector<12x32xf32>
    %cst_234 = arith.constant 2.000000e+01 : f32
    %447 = vector.broadcast %cst_234 : f32 to vector<12x32xf32>
    %448 = arith.minimumf %444, %447 : vector<12x32xf32>
    %449 = math.exp %448 : vector<12x32xf32>
    %450 = math.log1p %449 : vector<12x32xf32>
    %451 = arith.select %446, %444, %450 : vector<12x32xi1>, vector<12x32xf32>
    %452 = arith.mulf %443, %451 : vector<12x32xf32>
    %453 = arith.addf %426, %452 : vector<12x32xf32>
    %454 = vector.broadcast %367 : vector<1x64xf32> to vector<12x64xf32>
    %455 = arith.mulf %319, %454 : vector<12x64xf32>
    %456 = vector.broadcast %371 : vector<1x64xf32> to vector<12x64xf32>
    %457 = arith.addf %455, %456 : vector<12x64xf32>
    %458 = vector.extract_strided_slice %457 {offsets = [0, 0], sizes = [12, 32], strides = [1, 1]} : vector<12x64xf32> to vector<12x32xf32>
    %459 = math.absf %458 : vector<12x32xf32>
    %cst_235 = arith.constant 0.000000e+00 : f32
    %460 = vector.broadcast %cst_235 : f32 to vector<12x32xf32>
    %461 = arith.subf %460, %459 : vector<12x32xf32>
    %462 = math.exp %461 : vector<12x32xf32>
    %cst_236 = arith.constant 1.000000e+00 : f32
    %463 = vector.broadcast %cst_236 : f32 to vector<12x32xf32>
    %464 = arith.addf %463, %462 : vector<12x32xf32>
    %cst_237 = arith.constant 1.000000e+00 : f32
    %465 = vector.broadcast %cst_237 : f32 to vector<12x32xf32>
    %466 = arith.divf %465, %464 : vector<12x32xf32>
    %cst_238 = arith.constant 0.000000e+00 : f32
    %467 = vector.broadcast %cst_238 : f32 to vector<12x32xf32>
    %468 = arith.cmpf oge, %458, %467 : vector<12x32xf32>
    %469 = arith.mulf %462, %466 : vector<12x32xf32>
    %470 = arith.select %468, %466, %469 : vector<12x32xi1>, vector<12x32xf32>
    %471 = vector.extract_strided_slice %457 {offsets = [0, 32], sizes = [12, 32], strides = [1, 1]} : vector<12x64xf32> to vector<12x32xf32>
    %cst_239 = arith.constant 2.000000e+01 : f32
    %472 = vector.broadcast %cst_239 : f32 to vector<12x32xf32>
    %473 = arith.cmpf ogt, %471, %472 : vector<12x32xf32>
    %cst_240 = arith.constant 2.000000e+01 : f32
    %474 = vector.broadcast %cst_240 : f32 to vector<12x32xf32>
    %475 = arith.minimumf %471, %474 : vector<12x32xf32>
    %476 = math.exp %475 : vector<12x32xf32>
    %477 = math.log1p %476 : vector<12x32xf32>
    %478 = arith.select %473, %471, %477 : vector<12x32xi1>, vector<12x32xf32>
    %479 = arith.mulf %470, %478 : vector<12x32xf32>
    %480 = arith.addf %453, %479 : vector<12x32xf32>
    %cst_241 = arith.constant dense<0.000000e+00> : vector<32xf32>
    %481 = vector.multi_reduction <add>, %480, %cst_241 [0] : vector<12x32xf32> to vector<32xf32>
    %482 = vector.shape_cast %481 : vector<32xf32> to vector<1x32xf32>
    %cst_242 = arith.constant 0.0833333358 : f32
    %483 = vector.broadcast %cst_242 : f32 to vector<1x32xf32>
    %484 = arith.mulf %482, %483 : vector<1x32xf32>
    %485 = vector.broadcast %484 : vector<1x32xf32> to vector<12x32xf32>
    %486 = arith.subf %480, %485 : vector<12x32xf32>
    %487 = arith.mulf %486, %486 : vector<12x32xf32>
    %cst_243 = arith.constant dense<0.000000e+00> : vector<32xf32>
    %488 = vector.multi_reduction <add>, %487, %cst_243 [0] : vector<12x32xf32> to vector<32xf32>
    %489 = vector.shape_cast %488 : vector<32xf32> to vector<1x32xf32>
    %cst_244 = arith.constant 0.0833333358 : f32
    %490 = vector.broadcast %cst_244 : f32 to vector<1x32xf32>
    %491 = arith.mulf %489, %490 : vector<1x32xf32>
    %492 = vector.broadcast %484 : vector<1x32xf32> to vector<12x32xf32>
    %493 = arith.subf %480, %492 : vector<12x32xf32>
    %c1_245 = arith.constant 1 : index
    %c0_246 = arith.constant 0 : index
    %c0_247 = arith.constant 0 : index
    %494 = vector.load %arg12[%c1_245, %c0_246, %c0_247] : memref<3x1x32xf32, #tpu.memory_space<vmem>>, vector<1x1x32xf32>
    %495 = vector.shape_cast %494 : vector<1x1x32xf32> to vector<1x32xf32>
    %cst_248 = arith.constant 9.99999974E-6 : f32
    %496 = vector.broadcast %cst_248 : f32 to vector<1x32xf32>
    %497 = arith.addf %491, %496 : vector<1x32xf32>
    %498 = math.rsqrt %497 : vector<1x32xf32>
    %499 = arith.mulf %495, %498 : vector<1x32xf32>
    %500 = vector.broadcast %499 : vector<1x32xf32> to vector<12x32xf32>
    %501 = arith.mulf %493, %500 : vector<12x32xf32>
    %c1_249 = arith.constant 1 : index
    %c0_250 = arith.constant 0 : index
    %c0_251 = arith.constant 0 : index
    %502 = vector.load %arg13[%c1_249, %c0_250, %c0_251] : memref<3x1x32xf32, #tpu.memory_space<vmem>>, vector<1x1x32xf32>
    %503 = vector.shape_cast %502 : vector<1x1x32xf32> to vector<1x32xf32>
    %504 = vector.broadcast %503 : vector<1x32xf32> to vector<12x32xf32>
    %505 = arith.addf %501, %504 : vector<12x32xf32>
    %506 = arith.addf %289, %505 : vector<12x32xf32>
    %cst_252 = arith.constant 2.000000e+01 : f32
    %507 = vector.broadcast %cst_252 : f32 to vector<12x32xf32>
    %508 = arith.cmpf ogt, %506, %507 : vector<12x32xf32>
    %cst_253 = arith.constant 2.000000e+01 : f32
    %509 = vector.broadcast %cst_253 : f32 to vector<12x32xf32>
    %510 = arith.minimumf %506, %509 : vector<12x32xf32>
    %511 = math.exp %510 : vector<12x32xf32>
    %512 = math.log1p %511 : vector<12x32xf32>
    %513 = arith.select %508, %506, %512 : vector<12x32xi1>, vector<12x32xf32>
    %c2_254 = arith.constant 2 : index
    %c0_255 = arith.constant 0 : index
    %c0_256 = arith.constant 0 : index
    %514 = vector.load %arg6[%c2_254, %c0_255, %c0_256] : memref<3x32x64xf32, #tpu.memory_space<vmem>>, vector<1x32x64xf32>
    %515 = vector.shape_cast %514 : vector<1x32x64xf32> to vector<32x64xf32>
    %cst_257 = arith.constant dense<0.000000e+00> : vector<12x64xf32>
    %516 = tpu.matmul %513, %515, %cst_257 {dimension_numbers = #tpu.dot_dimension_numbers<[1], [0], [0], [1], [0, 0, 1, 1], [], []>} : vector<12x32xf32>, vector<32x64xf32>, vector<12x64xf32> -> vector<12x64xf32>
    %c2_258 = arith.constant 2 : index
    %c0_259 = arith.constant 0 : index
    %c0_260 = arith.constant 0 : index
    %517 = vector.load %arg9[%c2_258, %c0_259, %c0_260] : memref<3x1x64xf32, #tpu.memory_space<vmem>>, vector<1x1x64xf32>
    %518 = vector.shape_cast %517 : vector<1x1x64xf32> to vector<1x64xf32>
    %519 = vector.broadcast %518 : vector<1x64xf32> to vector<12x64xf32>
    %520 = arith.addf %516, %519 : vector<12x64xf32>
    %c2_261 = arith.constant 2 : index
    %c0_262 = arith.constant 0 : index
    %c0_263 = arith.constant 0 : index
    %521 = vector.load %arg7[%c2_261, %c0_262, %c0_263] : memref<3x32x64xf32, #tpu.memory_space<vmem>>, vector<1x32x64xf32>
    %522 = vector.shape_cast %521 : vector<1x32x64xf32> to vector<32x64xf32>
    %cst_264 = arith.constant dense<0.000000e+00> : vector<12x64xf32>
    %523 = tpu.matmul %513, %522, %cst_264 {dimension_numbers = #tpu.dot_dimension_numbers<[1], [0], [0], [1], [0, 0, 1, 1], [], []>} : vector<12x32xf32>, vector<32x64xf32>, vector<12x64xf32> -> vector<12x64xf32>
    %c0_265 = arith.constant 0 : index
    %c0_266 = arith.constant 0 : index
    %c0_267 = arith.constant 0 : index
    %524 = vector.load %arg2[%c0_265, %c0_266, %c0_267] : memref<4x12x12xf32, #tpu.memory_space<vmem>>, vector<1x12x12xf32>
    %525 = vector.shape_cast %524 : vector<1x12x12xf32> to vector<12x12xf32>
    %cst_268 = arith.constant dense<0.000000e+00> : vector<12x64xf32>
    %526 = tpu.matmul %525, %523, %cst_268 {dimension_numbers = #tpu.dot_dimension_numbers<[1], [0], [0], [1], [0, 0, 1, 1], [], []>} : vector<12x12xf32>, vector<12x64xf32>, vector<12x64xf32> -> vector<12x64xf32>
    %527 = arith.addf %520, %526 : vector<12x64xf32>
    %528 = arith.addf %527, %50 : vector<12x64xf32>
    %c1_269 = arith.constant 1 : index
    %c0_270 = arith.constant 0 : index
    %c0_271 = arith.constant 0 : index
    %529 = vector.load %arg2[%c1_269, %c0_270, %c0_271] : memref<4x12x12xf32, #tpu.memory_space<vmem>>, vector<1x12x12xf32>
    %530 = vector.shape_cast %529 : vector<1x12x12xf32> to vector<12x12xf32>
    %cst_272 = arith.constant dense<0.000000e+00> : vector<12x64xf32>
    %531 = tpu.matmul %530, %523, %cst_272 {dimension_numbers = #tpu.dot_dimension_numbers<[1], [0], [0], [1], [0, 0, 1, 1], [], []>} : vector<12x12xf32>, vector<12x64xf32>, vector<12x64xf32> -> vector<12x64xf32>
    %532 = arith.addf %520, %531 : vector<12x64xf32>
    %533 = arith.addf %532, %55 : vector<12x64xf32>
    %c2_273 = arith.constant 2 : index
    %c0_274 = arith.constant 0 : index
    %c0_275 = arith.constant 0 : index
    %534 = vector.load %arg2[%c2_273, %c0_274, %c0_275] : memref<4x12x12xf32, #tpu.memory_space<vmem>>, vector<1x12x12xf32>
    %535 = vector.shape_cast %534 : vector<1x12x12xf32> to vector<12x12xf32>
    %cst_276 = arith.constant dense<0.000000e+00> : vector<12x64xf32>
    %536 = tpu.matmul %535, %523, %cst_276 {dimension_numbers = #tpu.dot_dimension_numbers<[1], [0], [0], [1], [0, 0, 1, 1], [], []>} : vector<12x12xf32>, vector<12x64xf32>, vector<12x64xf32> -> vector<12x64xf32>
    %537 = arith.addf %520, %536 : vector<12x64xf32>
    %538 = arith.addf %537, %60 : vector<12x64xf32>
    %c3_277 = arith.constant 3 : index
    %c0_278 = arith.constant 0 : index
    %c0_279 = arith.constant 0 : index
    %539 = vector.load %arg2[%c3_277, %c0_278, %c0_279] : memref<4x12x12xf32, #tpu.memory_space<vmem>>, vector<1x12x12xf32>
    %540 = vector.shape_cast %539 : vector<1x12x12xf32> to vector<12x12xf32>
    %cst_280 = arith.constant dense<0.000000e+00> : vector<12x64xf32>
    %541 = tpu.matmul %540, %523, %cst_280 {dimension_numbers = #tpu.dot_dimension_numbers<[1], [0], [0], [1], [0, 0, 1, 1], [], []>} : vector<12x12xf32>, vector<12x64xf32>, vector<12x64xf32> -> vector<12x64xf32>
    %542 = arith.addf %520, %541 : vector<12x64xf32>
    %543 = arith.addf %542, %65 : vector<12x64xf32>
    %cst_281 = arith.constant dense<0.000000e+00> : vector<64xf32>
    %544 = vector.multi_reduction <add>, %528, %cst_281 [0] : vector<12x64xf32> to vector<64xf32>
    %545 = vector.shape_cast %544 : vector<64xf32> to vector<1x64xf32>
    %cst_282 = arith.constant 0.000000e+00 : f32
    %546 = vector.broadcast %cst_282 : f32 to vector<1x64xf32>
    %547 = arith.addf %546, %545 : vector<1x64xf32>
    %cst_283 = arith.constant dense<0.000000e+00> : vector<64xf32>
    %548 = vector.multi_reduction <add>, %533, %cst_283 [0] : vector<12x64xf32> to vector<64xf32>
    %549 = vector.shape_cast %548 : vector<64xf32> to vector<1x64xf32>
    %550 = arith.addf %547, %549 : vector<1x64xf32>
    %cst_284 = arith.constant dense<0.000000e+00> : vector<64xf32>
    %551 = vector.multi_reduction <add>, %538, %cst_284 [0] : vector<12x64xf32> to vector<64xf32>
    %552 = vector.shape_cast %551 : vector<64xf32> to vector<1x64xf32>
    %553 = arith.addf %550, %552 : vector<1x64xf32>
    %cst_285 = arith.constant dense<0.000000e+00> : vector<64xf32>
    %554 = vector.multi_reduction <add>, %543, %cst_285 [0] : vector<12x64xf32> to vector<64xf32>
    %555 = vector.shape_cast %554 : vector<64xf32> to vector<1x64xf32>
    %556 = arith.addf %553, %555 : vector<1x64xf32>
    %cst_286 = arith.constant 0.020833334 : f32
    %557 = vector.broadcast %cst_286 : f32 to vector<1x64xf32>
    %558 = arith.mulf %556, %557 : vector<1x64xf32>
    %559 = vector.broadcast %558 : vector<1x64xf32> to vector<12x64xf32>
    %560 = arith.subf %528, %559 : vector<12x64xf32>
    %561 = arith.mulf %560, %560 : vector<12x64xf32>
    %cst_287 = arith.constant dense<0.000000e+00> : vector<64xf32>
    %562 = vector.multi_reduction <add>, %561, %cst_287 [0] : vector<12x64xf32> to vector<64xf32>
    %563 = vector.shape_cast %562 : vector<64xf32> to vector<1x64xf32>
    %cst_288 = arith.constant 0.000000e+00 : f32
    %564 = vector.broadcast %cst_288 : f32 to vector<1x64xf32>
    %565 = arith.addf %564, %563 : vector<1x64xf32>
    %566 = vector.broadcast %558 : vector<1x64xf32> to vector<12x64xf32>
    %567 = arith.subf %533, %566 : vector<12x64xf32>
    %568 = arith.mulf %567, %567 : vector<12x64xf32>
    %cst_289 = arith.constant dense<0.000000e+00> : vector<64xf32>
    %569 = vector.multi_reduction <add>, %568, %cst_289 [0] : vector<12x64xf32> to vector<64xf32>
    %570 = vector.shape_cast %569 : vector<64xf32> to vector<1x64xf32>
    %571 = arith.addf %565, %570 : vector<1x64xf32>
    %572 = vector.broadcast %558 : vector<1x64xf32> to vector<12x64xf32>
    %573 = arith.subf %538, %572 : vector<12x64xf32>
    %574 = arith.mulf %573, %573 : vector<12x64xf32>
    %cst_290 = arith.constant dense<0.000000e+00> : vector<64xf32>
    %575 = vector.multi_reduction <add>, %574, %cst_290 [0] : vector<12x64xf32> to vector<64xf32>
    %576 = vector.shape_cast %575 : vector<64xf32> to vector<1x64xf32>
    %577 = arith.addf %571, %576 : vector<1x64xf32>
    %578 = vector.broadcast %558 : vector<1x64xf32> to vector<12x64xf32>
    %579 = arith.subf %543, %578 : vector<12x64xf32>
    %580 = arith.mulf %579, %579 : vector<12x64xf32>
    %cst_291 = arith.constant dense<0.000000e+00> : vector<64xf32>
    %581 = vector.multi_reduction <add>, %580, %cst_291 [0] : vector<12x64xf32> to vector<64xf32>
    %582 = vector.shape_cast %581 : vector<64xf32> to vector<1x64xf32>
    %583 = arith.addf %577, %582 : vector<1x64xf32>
    %cst_292 = arith.constant 0.020833334 : f32
    %584 = vector.broadcast %cst_292 : f32 to vector<1x64xf32>
    %585 = arith.mulf %583, %584 : vector<1x64xf32>
    %c2_293 = arith.constant 2 : index
    %c0_294 = arith.constant 0 : index
    %c0_295 = arith.constant 0 : index
    %586 = vector.load %arg10[%c2_293, %c0_294, %c0_295] : memref<3x1x64xf32, #tpu.memory_space<vmem>>, vector<1x1x64xf32>
    %587 = vector.shape_cast %586 : vector<1x1x64xf32> to vector<1x64xf32>
    %cst_296 = arith.constant 9.99999974E-6 : f32
    %588 = vector.broadcast %cst_296 : f32 to vector<1x64xf32>
    %589 = arith.addf %585, %588 : vector<1x64xf32>
    %590 = math.rsqrt %589 : vector<1x64xf32>
    %591 = arith.mulf %587, %590 : vector<1x64xf32>
    %c2_297 = arith.constant 2 : index
    %c0_298 = arith.constant 0 : index
    %c0_299 = arith.constant 0 : index
    %592 = vector.load %arg11[%c2_297, %c0_298, %c0_299] : memref<3x1x64xf32, #tpu.memory_space<vmem>>, vector<1x1x64xf32>
    %593 = vector.shape_cast %592 : vector<1x1x64xf32> to vector<1x64xf32>
    %594 = arith.mulf %558, %591 : vector<1x64xf32>
    %595 = arith.subf %593, %594 : vector<1x64xf32>
    %cst_300 = arith.constant 0.000000e+00 : f32
    %596 = vector.broadcast %cst_300 : f32 to vector<12x32xf32>
    %597 = vector.broadcast %591 : vector<1x64xf32> to vector<12x64xf32>
    %598 = arith.mulf %528, %597 : vector<12x64xf32>
    %599 = vector.broadcast %595 : vector<1x64xf32> to vector<12x64xf32>
    %600 = arith.addf %598, %599 : vector<12x64xf32>
    %601 = vector.extract_strided_slice %600 {offsets = [0, 0], sizes = [12, 32], strides = [1, 1]} : vector<12x64xf32> to vector<12x32xf32>
    %602 = math.absf %601 : vector<12x32xf32>
    %cst_301 = arith.constant 0.000000e+00 : f32
    %603 = vector.broadcast %cst_301 : f32 to vector<12x32xf32>
    %604 = arith.subf %603, %602 : vector<12x32xf32>
    %605 = math.exp %604 : vector<12x32xf32>
    %cst_302 = arith.constant 1.000000e+00 : f32
    %606 = vector.broadcast %cst_302 : f32 to vector<12x32xf32>
    %607 = arith.addf %606, %605 : vector<12x32xf32>
    %cst_303 = arith.constant 1.000000e+00 : f32
    %608 = vector.broadcast %cst_303 : f32 to vector<12x32xf32>
    %609 = arith.divf %608, %607 : vector<12x32xf32>
    %cst_304 = arith.constant 0.000000e+00 : f32
    %610 = vector.broadcast %cst_304 : f32 to vector<12x32xf32>
    %611 = arith.cmpf oge, %601, %610 : vector<12x32xf32>
    %612 = arith.mulf %605, %609 : vector<12x32xf32>
    %613 = arith.select %611, %609, %612 : vector<12x32xi1>, vector<12x32xf32>
    %614 = vector.extract_strided_slice %600 {offsets = [0, 32], sizes = [12, 32], strides = [1, 1]} : vector<12x64xf32> to vector<12x32xf32>
    %cst_305 = arith.constant 2.000000e+01 : f32
    %615 = vector.broadcast %cst_305 : f32 to vector<12x32xf32>
    %616 = arith.cmpf ogt, %614, %615 : vector<12x32xf32>
    %cst_306 = arith.constant 2.000000e+01 : f32
    %617 = vector.broadcast %cst_306 : f32 to vector<12x32xf32>
    %618 = arith.minimumf %614, %617 : vector<12x32xf32>
    %619 = math.exp %618 : vector<12x32xf32>
    %620 = math.log1p %619 : vector<12x32xf32>
    %621 = arith.select %616, %614, %620 : vector<12x32xi1>, vector<12x32xf32>
    %622 = arith.mulf %613, %621 : vector<12x32xf32>
    %623 = arith.addf %596, %622 : vector<12x32xf32>
    %624 = vector.broadcast %591 : vector<1x64xf32> to vector<12x64xf32>
    %625 = arith.mulf %533, %624 : vector<12x64xf32>
    %626 = vector.broadcast %595 : vector<1x64xf32> to vector<12x64xf32>
    %627 = arith.addf %625, %626 : vector<12x64xf32>
    %628 = vector.extract_strided_slice %627 {offsets = [0, 0], sizes = [12, 32], strides = [1, 1]} : vector<12x64xf32> to vector<12x32xf32>
    %629 = math.absf %628 : vector<12x32xf32>
    %cst_307 = arith.constant 0.000000e+00 : f32
    %630 = vector.broadcast %cst_307 : f32 to vector<12x32xf32>
    %631 = arith.subf %630, %629 : vector<12x32xf32>
    %632 = math.exp %631 : vector<12x32xf32>
    %cst_308 = arith.constant 1.000000e+00 : f32
    %633 = vector.broadcast %cst_308 : f32 to vector<12x32xf32>
    %634 = arith.addf %633, %632 : vector<12x32xf32>
    %cst_309 = arith.constant 1.000000e+00 : f32
    %635 = vector.broadcast %cst_309 : f32 to vector<12x32xf32>
    %636 = arith.divf %635, %634 : vector<12x32xf32>
    %cst_310 = arith.constant 0.000000e+00 : f32
    %637 = vector.broadcast %cst_310 : f32 to vector<12x32xf32>
    %638 = arith.cmpf oge, %628, %637 : vector<12x32xf32>
    %639 = arith.mulf %632, %636 : vector<12x32xf32>
    %640 = arith.select %638, %636, %639 : vector<12x32xi1>, vector<12x32xf32>
    %641 = vector.extract_strided_slice %627 {offsets = [0, 32], sizes = [12, 32], strides = [1, 1]} : vector<12x64xf32> to vector<12x32xf32>
    %cst_311 = arith.constant 2.000000e+01 : f32
    %642 = vector.broadcast %cst_311 : f32 to vector<12x32xf32>
    %643 = arith.cmpf ogt, %641, %642 : vector<12x32xf32>
    %cst_312 = arith.constant 2.000000e+01 : f32
    %644 = vector.broadcast %cst_312 : f32 to vector<12x32xf32>
    %645 = arith.minimumf %641, %644 : vector<12x32xf32>
    %646 = math.exp %645 : vector<12x32xf32>
    %647 = math.log1p %646 : vector<12x32xf32>
    %648 = arith.select %643, %641, %647 : vector<12x32xi1>, vector<12x32xf32>
    %649 = arith.mulf %640, %648 : vector<12x32xf32>
    %650 = arith.addf %623, %649 : vector<12x32xf32>
    %651 = vector.broadcast %591 : vector<1x64xf32> to vector<12x64xf32>
    %652 = arith.mulf %538, %651 : vector<12x64xf32>
    %653 = vector.broadcast %595 : vector<1x64xf32> to vector<12x64xf32>
    %654 = arith.addf %652, %653 : vector<12x64xf32>
    %655 = vector.extract_strided_slice %654 {offsets = [0, 0], sizes = [12, 32], strides = [1, 1]} : vector<12x64xf32> to vector<12x32xf32>
    %656 = math.absf %655 : vector<12x32xf32>
    %cst_313 = arith.constant 0.000000e+00 : f32
    %657 = vector.broadcast %cst_313 : f32 to vector<12x32xf32>
    %658 = arith.subf %657, %656 : vector<12x32xf32>
    %659 = math.exp %658 : vector<12x32xf32>
    %cst_314 = arith.constant 1.000000e+00 : f32
    %660 = vector.broadcast %cst_314 : f32 to vector<12x32xf32>
    %661 = arith.addf %660, %659 : vector<12x32xf32>
    %cst_315 = arith.constant 1.000000e+00 : f32
    %662 = vector.broadcast %cst_315 : f32 to vector<12x32xf32>
    %663 = arith.divf %662, %661 : vector<12x32xf32>
    %cst_316 = arith.constant 0.000000e+00 : f32
    %664 = vector.broadcast %cst_316 : f32 to vector<12x32xf32>
    %665 = arith.cmpf oge, %655, %664 : vector<12x32xf32>
    %666 = arith.mulf %659, %663 : vector<12x32xf32>
    %667 = arith.select %665, %663, %666 : vector<12x32xi1>, vector<12x32xf32>
    %668 = vector.extract_strided_slice %654 {offsets = [0, 32], sizes = [12, 32], strides = [1, 1]} : vector<12x64xf32> to vector<12x32xf32>
    %cst_317 = arith.constant 2.000000e+01 : f32
    %669 = vector.broadcast %cst_317 : f32 to vector<12x32xf32>
    %670 = arith.cmpf ogt, %668, %669 : vector<12x32xf32>
    %cst_318 = arith.constant 2.000000e+01 : f32
    %671 = vector.broadcast %cst_318 : f32 to vector<12x32xf32>
    %672 = arith.minimumf %668, %671 : vector<12x32xf32>
    %673 = math.exp %672 : vector<12x32xf32>
    %674 = math.log1p %673 : vector<12x32xf32>
    %675 = arith.select %670, %668, %674 : vector<12x32xi1>, vector<12x32xf32>
    %676 = arith.mulf %667, %675 : vector<12x32xf32>
    %677 = arith.addf %650, %676 : vector<12x32xf32>
    %678 = vector.broadcast %591 : vector<1x64xf32> to vector<12x64xf32>
    %679 = arith.mulf %543, %678 : vector<12x64xf32>
    %680 = vector.broadcast %595 : vector<1x64xf32> to vector<12x64xf32>
    %681 = arith.addf %679, %680 : vector<12x64xf32>
    %682 = vector.extract_strided_slice %681 {offsets = [0, 0], sizes = [12, 32], strides = [1, 1]} : vector<12x64xf32> to vector<12x32xf32>
    %683 = math.absf %682 : vector<12x32xf32>
    %cst_319 = arith.constant 0.000000e+00 : f32
    %684 = vector.broadcast %cst_319 : f32 to vector<12x32xf32>
    %685 = arith.subf %684, %683 : vector<12x32xf32>
    %686 = math.exp %685 : vector<12x32xf32>
    %cst_320 = arith.constant 1.000000e+00 : f32
    %687 = vector.broadcast %cst_320 : f32 to vector<12x32xf32>
    %688 = arith.addf %687, %686 : vector<12x32xf32>
    %cst_321 = arith.constant 1.000000e+00 : f32
    %689 = vector.broadcast %cst_321 : f32 to vector<12x32xf32>
    %690 = arith.divf %689, %688 : vector<12x32xf32>
    %cst_322 = arith.constant 0.000000e+00 : f32
    %691 = vector.broadcast %cst_322 : f32 to vector<12x32xf32>
    %692 = arith.cmpf oge, %682, %691 : vector<12x32xf32>
    %693 = arith.mulf %686, %690 : vector<12x32xf32>
    %694 = arith.select %692, %690, %693 : vector<12x32xi1>, vector<12x32xf32>
    %695 = vector.extract_strided_slice %681 {offsets = [0, 32], sizes = [12, 32], strides = [1, 1]} : vector<12x64xf32> to vector<12x32xf32>
    %cst_323 = arith.constant 2.000000e+01 : f32
    %696 = vector.broadcast %cst_323 : f32 to vector<12x32xf32>
    %697 = arith.cmpf ogt, %695, %696 : vector<12x32xf32>
    %cst_324 = arith.constant 2.000000e+01 : f32
    %698 = vector.broadcast %cst_324 : f32 to vector<12x32xf32>
    %699 = arith.minimumf %695, %698 : vector<12x32xf32>
    %700 = math.exp %699 : vector<12x32xf32>
    %701 = math.log1p %700 : vector<12x32xf32>
    %702 = arith.select %697, %695, %701 : vector<12x32xi1>, vector<12x32xf32>
    %703 = arith.mulf %694, %702 : vector<12x32xf32>
    %704 = arith.addf %677, %703 : vector<12x32xf32>
    %cst_325 = arith.constant dense<0.000000e+00> : vector<32xf32>
    %705 = vector.multi_reduction <add>, %704, %cst_325 [0] : vector<12x32xf32> to vector<32xf32>
    %706 = vector.shape_cast %705 : vector<32xf32> to vector<1x32xf32>
    %cst_326 = arith.constant 0.0833333358 : f32
    %707 = vector.broadcast %cst_326 : f32 to vector<1x32xf32>
    %708 = arith.mulf %706, %707 : vector<1x32xf32>
    %709 = vector.broadcast %708 : vector<1x32xf32> to vector<12x32xf32>
    %710 = arith.subf %704, %709 : vector<12x32xf32>
    %711 = arith.mulf %710, %710 : vector<12x32xf32>
    %cst_327 = arith.constant dense<0.000000e+00> : vector<32xf32>
    %712 = vector.multi_reduction <add>, %711, %cst_327 [0] : vector<12x32xf32> to vector<32xf32>
    %713 = vector.shape_cast %712 : vector<32xf32> to vector<1x32xf32>
    %cst_328 = arith.constant 0.0833333358 : f32
    %714 = vector.broadcast %cst_328 : f32 to vector<1x32xf32>
    %715 = arith.mulf %713, %714 : vector<1x32xf32>
    %716 = vector.broadcast %708 : vector<1x32xf32> to vector<12x32xf32>
    %717 = arith.subf %704, %716 : vector<12x32xf32>
    %c2_329 = arith.constant 2 : index
    %c0_330 = arith.constant 0 : index
    %c0_331 = arith.constant 0 : index
    %718 = vector.load %arg12[%c2_329, %c0_330, %c0_331] : memref<3x1x32xf32, #tpu.memory_space<vmem>>, vector<1x1x32xf32>
    %719 = vector.shape_cast %718 : vector<1x1x32xf32> to vector<1x32xf32>
    %cst_332 = arith.constant 9.99999974E-6 : f32
    %720 = vector.broadcast %cst_332 : f32 to vector<1x32xf32>
    %721 = arith.addf %715, %720 : vector<1x32xf32>
    %722 = math.rsqrt %721 : vector<1x32xf32>
    %723 = arith.mulf %719, %722 : vector<1x32xf32>
    %724 = vector.broadcast %723 : vector<1x32xf32> to vector<12x32xf32>
    %725 = arith.mulf %717, %724 : vector<12x32xf32>
    %c2_333 = arith.constant 2 : index
    %c0_334 = arith.constant 0 : index
    %c0_335 = arith.constant 0 : index
    %726 = vector.load %arg13[%c2_333, %c0_334, %c0_335] : memref<3x1x32xf32, #tpu.memory_space<vmem>>, vector<1x1x32xf32>
    %727 = vector.shape_cast %726 : vector<1x1x32xf32> to vector<1x32xf32>
    %728 = vector.broadcast %727 : vector<1x32xf32> to vector<12x32xf32>
    %729 = arith.addf %725, %728 : vector<12x32xf32>
    %730 = arith.addf %513, %729 : vector<12x32xf32>
    %cst_336 = arith.constant 2.000000e+01 : f32
    %731 = vector.broadcast %cst_336 : f32 to vector<12x32xf32>
    %732 = arith.cmpf ogt, %730, %731 : vector<12x32xf32>
    %cst_337 = arith.constant 2.000000e+01 : f32
    %733 = vector.broadcast %cst_337 : f32 to vector<12x32xf32>
    %734 = arith.minimumf %730, %733 : vector<12x32xf32>
    %735 = math.exp %734 : vector<12x32xf32>
    %736 = math.log1p %735 : vector<12x32xf32>
    %737 = arith.select %732, %730, %736 : vector<12x32xi1>, vector<12x32xf32>
    %c0_338 = arith.constant 0 : index
    %c0_339 = arith.constant 0 : index
    %738 = vector.load %arg3[%c0_338, %c0_339] : memref<2x12xf32, #tpu.memory_space<vmem>>, vector<2x12xf32>
    %cst_340 = arith.constant dense<0.000000e+00> : vector<2x32xf32>
    %739 = tpu.matmul %738, %737, %cst_340 {dimension_numbers = #tpu.dot_dimension_numbers<[1], [0], [0], [1], [0, 0, 1, 1], [], []>} : vector<2x12xf32>, vector<12x32xf32>, vector<2x32xf32> -> vector<2x32xf32>
    %cst_341 = arith.constant 2.000000e+01 : f32
    %740 = vector.broadcast %cst_341 : f32 to vector<2x32xf32>
    %741 = arith.cmpf ogt, %739, %740 : vector<2x32xf32>
    %cst_342 = arith.constant 2.000000e+01 : f32
    %742 = vector.broadcast %cst_342 : f32 to vector<2x32xf32>
    %743 = arith.minimumf %739, %742 : vector<2x32xf32>
    %744 = math.exp %743 : vector<2x32xf32>
    %745 = math.log1p %744 : vector<2x32xf32>
    %746 = arith.select %741, %739, %745 : vector<2x32xi1>, vector<2x32xf32>
    %c0_343 = arith.constant 0 : index
    %c0_344 = arith.constant 0 : index
    %747 = vector.load %arg14[%c0_343, %c0_344] : memref<32x64xf32, #tpu.memory_space<vmem>>, vector<32x64xf32>
    %cst_345 = arith.constant dense<0.000000e+00> : vector<2x64xf32>
    %748 = tpu.matmul %746, %747, %cst_345 {dimension_numbers = #tpu.dot_dimension_numbers<[1], [0], [0], [1], [0, 0, 1, 1], [], []>} : vector<2x32xf32>, vector<32x64xf32>, vector<2x64xf32> -> vector<2x64xf32>
    %c0_346 = arith.constant 0 : index
    %c0_347 = arith.constant 0 : index
    %749 = vector.load %arg15[%c0_346, %c0_347] : memref<1x64xf32, #tpu.memory_space<vmem>>, vector<1x64xf32>
    %750 = vector.broadcast %749 : vector<1x64xf32> to vector<2x64xf32>
    %751 = arith.addf %748, %750 : vector<2x64xf32>
    %cst_348 = arith.constant 2.000000e+01 : f32
    %752 = vector.broadcast %cst_348 : f32 to vector<2x64xf32>
    %753 = arith.cmpf ogt, %751, %752 : vector<2x64xf32>
    %cst_349 = arith.constant 2.000000e+01 : f32
    %754 = vector.broadcast %cst_349 : f32 to vector<2x64xf32>
    %755 = arith.minimumf %751, %754 : vector<2x64xf32>
    %756 = math.exp %755 : vector<2x64xf32>
    %757 = math.log1p %756 : vector<2x64xf32>
    %758 = arith.select %753, %751, %757 : vector<2x64xi1>, vector<2x64xf32>
    %c0_350 = arith.constant 0 : index
    %c0_351 = arith.constant 0 : index
    %759 = vector.load %arg16[%c0_350, %c0_351] : memref<64x128xf32, #tpu.memory_space<vmem>>, vector<64x128xf32>
    %cst_352 = arith.constant dense<0.000000e+00> : vector<2x128xf32>
    %760 = tpu.matmul %758, %759, %cst_352 {dimension_numbers = #tpu.dot_dimension_numbers<[1], [0], [0], [1], [0, 0, 1, 1], [], []>} : vector<2x64xf32>, vector<64x128xf32>, vector<2x128xf32> -> vector<2x128xf32>
    %c0_353 = arith.constant 0 : index
    %c0_354 = arith.constant 0 : index
    %761 = vector.load %arg17[%c0_353, %c0_354] : memref<1x128xf32, #tpu.memory_space<vmem>>, vector<1x128xf32>
    %762 = vector.broadcast %761 : vector<1x128xf32> to vector<2x128xf32>
    %763 = arith.addf %760, %762 : vector<2x128xf32>
    %c0_355 = arith.constant 0 : index
    %c0_356 = arith.constant 0 : index
    %764 = vector.load %arg18[%c0_355, %c0_356] : memref<2x128xf32, #tpu.memory_space<vmem>>, vector<2x128xf32>
    tpu.vector_store %arg18[%c0_355, %c0_356], %763 {strides = array<i32>} : memref<2x128xf32, #tpu.memory_space<vmem>>, vector<2x128xf32>,
    return
  }
}

</mosaic_0001>

<llo_original>
// kernel: tpu_custom_call.1
$region0: #{tpu_custom_call.1}
  #allocation0 [shape = 'u32[]', space=smem, size = 0x4, offset = 0x4, fixed_abs, tag = 'smem constant byte address 0x4 - core index']
  #allocation1 [shape = 'u32[144,128]{1,0:T(1,128)}', space=vmem, size = 0x12000, scoped, tag = 'internal scratch']
  %s0 = inlined_call_operand.hbm [shape: f32[12,16], index: 0, kind: input, shape index: {}]
  %s1 = inlined_call_operand.vmem [shape: f32[4,12,8], index: 1, kind: input, shape index: {}]
  %s2 = inlined_call_operand.vmem [shape: f32[4,12,12], index: 2, kind: input, shape index: {}]
  %s3 = inlined_call_operand.vmem [shape: f32[2,12], index: 3, kind: input, shape index: {}]
  %s4 = inlined_call_operand.hbm [shape: f32[16,32], index: 4, kind: input, shape index: {}]
  %s5 = inlined_call_operand.hbm [shape: f32[1,32], index: 5, kind: input, shape index: {}]
  %s6 = inlined_call_operand.vmem [shape: f32[3,32,64], index: 6, kind: input, shape index: {}]
  %s7 = inlined_call_operand.vmem [shape: f32[3,32,64], index: 7, kind: input, shape index: {}]
  %s8 = inlined_call_operand.hbm [shape: f32[3,8,64], index: 8, kind: input, shape index: {}]
  %s9 = inlined_call_operand.hbm [shape: f32[3,1,64], index: 9, kind: input, shape index: {}]
  %s10 = inlined_call_operand.hbm [shape: f32[3,1,64], index: 10, kind: input, shape index: {}]
  %s11 = inlined_call_operand.hbm [shape: f32[3,1,64], index: 11, kind: input, shape index: {}]
  %s12 = inlined_call_operand.vmem [shape: f32[3,1,32], index: 12, kind: input, shape index: {}]
  %s13 = inlined_call_operand.hbm [shape: f32[3,1,32], index: 13, kind: input, shape index: {}]
  %s14 = inlined_call_operand.vmem [shape: f32[32,64], index: 14, kind: input, shape index: {}]
  %s15 = inlined_call_operand.vmem [shape: f32[1,64], index: 15, kind: input, shape index: {}]
  %s16 = inlined_call_operand.hbm [shape: f32[64,128], index: 16, kind: input, shape index: {}]
  %s17 = inlined_call_operand.vmem [shape: f32[1,128], index: 17, kind: input, shape index: {}]
  %s18 = inlined_call_operand.hbm [shape: f32[2,128], index: 18, kind: output, shape index: {}]
  %s19 = sld [smem:[#allocation0]]
  $region118: #{tpu_custom_call.1} parent=0
    _
  %s21 = ssub.s32 1, %s19
  %s22 = scalar_select 0, %s21, %s19
  $region1: #{tpu_custom_call.1} parent=0
    #allocation2 [shape = 'u8[8192]{0}', space=vmem, size = 0x2000, scoped, tag = 'input window, operand 0, single buffered']
    #allocation3 [shape = 's32[1]{0}', space=sflag, size = 0x4, scoped, tag = 'scoped memory for tpu_custom_call.1']
    #allocation4 [shape = 's32[1]{0}', space=sflag, size = 0x4, scoped, tag = 'scoped memory for tpu_custom_call.1']
    #allocation5 [shape = 'u8[8192]{0}', space=vmem, size = 0x2000, scoped, tag = 'input window, operand 4, single buffered']
    #allocation6 [shape = 's32[1]{0}', space=sflag, size = 0x4, scoped, tag = 'scoped memory for tpu_custom_call.1']
    #allocation7 [shape = 'u8[512]{0}', space=vmem, size = 0x400, scoped, tag = 'input window, operand 5, single buffered']
    #allocation8 [shape = 'u8[12288]{0}', space=vmem, size = 0x3000, scoped, tag = 'input window, operand 8, single buffered']
    #allocation9 [shape = 's32[1]{0}', space=sflag, size = 0x4, scoped, tag = 'scoped memory for tpu_custom_call.1']
    #allocation10 [shape = 'u8[1536]{0}', space=vmem, size = 0x800, scoped, tag = 'input window, operand 9, single buffered']
    #allocation11 [shape = 'u8[1536]{0}', space=vmem, size = 0x800, scoped, tag = 'input window, operand 10, single buffered']
    #allocation12 [shape = 's32[1]{0}', space=sflag, size = 0x4, scoped, tag = 'scoped memory for tpu_custom_call.1']
    #allocation13 [shape = 'u8[1536]{0}', space=vmem, size = 0x800, scoped, tag = 'input window, operand 11, single buffered']
    #allocation14 [shape = 'u8[1536]{0}', space=vmem, size = 0x800, scoped, tag = 'input window, operand 13, single buffered']
    #allocation15 [shape = 's32[1]{0}', space=sflag, size = 0x4, scoped, tag = 'scoped memory for tpu_custom_call.1']
    #allocation16 [shape = 'u8[32768]{0}', space=vmem, size = 0x8000, scoped, tag = 'input window, operand 16, single buffered']
    #allocation17 [shape = 'u8[1024]{0}', space=vmem, size = 0x400, scoped, tag = 'output window, operand 0, single buffered']
    %23 = vsyncpa [#allocation3], 0
    %24 = vsyncpa [#allocation6], 0
    %25 = vsyncpa [#allocation9], 0
    %26 = vsyncpa [#allocation12], 0
    %27 = vsyncpa [#allocation15], 0
    %28 = vsyncpa [#allocation4], 0
    // Predicated region
    $region2: #{tpu_custom_call.1} parent=1 // pred_check
      _
    $region3: #{tpu_custom_call.1} parent=1 // pred_check_branch
      %30 = sbr.rel (0) target = $region5
    $region4: #{tpu_custom_call.1} parent=1 // pred_region
      %s32 = ssub.s32 256, 256
      %33 = vsyncadd [#allocation3], %s32
      %s34 = sshll.u32 [#allocation2], 4
      %s35 = int_to_ptr.vmem [resolvable:$true] %s34
      %40 = dma.hbm_to_vmem [thread:$0]  %s0, 256, %s35, [#allocation3], 128, 128, 8
    $region5: #{tpu_custom_call.1} parent=1 // pred_fallthru
      _
    // Predicated region
    $region6: #{tpu_custom_call.1} parent=1 // pred_check
      _
    $region7: #{tpu_custom_call.1} parent=1 // pred_check_branch
      %42 = sbr.rel (0) target = $region9
    $region8: #{tpu_custom_call.1} parent=1 // pred_region
      _
    $region9: #{tpu_custom_call.1} parent=1 // pred_fallthru
      _
    // Predicated region
    $region10: #{tpu_custom_call.1} parent=1 // pred_check
      _
    $region11: #{tpu_custom_call.1} parent=1 // pred_check_branch
      %44 = sbr.rel (0) target = $region13
    $region12: #{tpu_custom_call.1} parent=1 // pred_region
      _
    $region13: #{tpu_custom_call.1} parent=1 // pred_fallthru
      _
    // Predicated region
    $region14: #{tpu_custom_call.1} parent=1 // pred_check
      _
    $region15: #{tpu_custom_call.1} parent=1 // pred_check_branch
      %46 = sbr.rel (0) target = $region17
    $region16: #{tpu_custom_call.1} parent=1 // pred_region
      _
    $region17: #{tpu_custom_call.1} parent=1 // pred_fallthru
      _
    // Predicated region
    $region18: #{tpu_custom_call.1} parent=1 // pred_check
      _
    $region19: #{tpu_custom_call.1} parent=1 // pred_check_branch
      %48 = sbr.rel (0) target = $region21
    $region20: #{tpu_custom_call.1} parent=1 // pred_region
      %s50 = ssub.s32 256, 256
      %51 = vsyncadd [#allocation6], %s50
      %s52 = sshll.u32 [#allocation5], 4
      %s53 = int_to_ptr.vmem [resolvable:$true] %s52
      %58 = dma.hbm_to_vmem [thread:$0]  %s4, 256, %s53, [#allocation6], 128, 128, 8
    $region21: #{tpu_custom_call.1} parent=1 // pred_fallthru
      _
    // Predicated region
    $region22: #{tpu_custom_call.1} parent=1 // pred_check
      _
    $region23: #{tpu_custom_call.1} parent=1 // pred_check_branch
      %60 = sbr.rel (0) target = $region25
    $region24: #{tpu_custom_call.1} parent=1 // pred_region
      %s62 = ssub.s32 16, 16
      %63 = vsyncadd [#allocation6], %s62
      %s65 = sshll.u32 [#allocation7], 4
      %s66 = int_to_ptr.vmem [resolvable:$true] %s65
      %68 = dma.hbm_to_vmem [thread:$0]  %s5, 16, %s66, [#allocation6]
    $region25: #{tpu_custom_call.1} parent=1 // pred_fallthru
      _
    // Predicated region
    $region26: #{tpu_custom_call.1} parent=1 // pred_check
      _
    $region27: #{tpu_custom_call.1} parent=1 // pred_check_branch
      %70 = sbr.rel (0) target = $region29
    $region28: #{tpu_custom_call.1} parent=1 // pred_region
      _
    $region29: #{tpu_custom_call.1} parent=1 // pred_fallthru
      _
    // Predicated region
    $region30: #{tpu_custom_call.1} parent=1 // pred_check
      _
    $region31: #{tpu_custom_call.1} parent=1 // pred_check_branch
      %72 = sbr.rel (0) target = $region33
    $region32: #{tpu_custom_call.1} parent=1 // pred_region
      _
    $region33: #{tpu_custom_call.1} parent=1 // pred_fallthru
      _
    // Predicated region
    $region34: #{tpu_custom_call.1} parent=1 // pred_check
      _
    $region35: #{tpu_custom_call.1} parent=1 // pred_check_branch
      %74 = sbr.rel (0) target = $region37
    $region36: #{tpu_custom_call.1} parent=1 // pred_region
      %s76 = ssub.s32 384, 384
      %77 = vsyncadd [#allocation9], %s76
      %s78 = sshll.u32 [#allocation8], 4
      %s79 = int_to_ptr.vmem [resolvable:$true] %s78
      %84 = dma.hbm_to_vmem [thread:$0]  %s8, 384, %s79, [#allocation9], 128, 128, 8
    $region37: #{tpu_custom_call.1} parent=1 // pred_fallthru
      _
    // Predicated region
    $region38: #{tpu_custom_call.1} parent=1 // pred_check
      _
    $region39: #{tpu_custom_call.1} parent=1 // pred_check_branch
      %86 = sbr.rel (0) target = $region41
    $region40: #{tpu_custom_call.1} parent=1 // pred_region
      %s88 = ssub.s32 48, 48
      %89 = vsyncadd [#allocation9], %s88
      %s90 = sshll.u32 [#allocation10], 4
      %s91 = int_to_ptr.vmem [resolvable:$true] %s90
      %96 = dma.hbm_to_vmem [thread:$0]  %s9, 48, %s91, [#allocation9], 16, 16, 1
    $region41: #{tpu_custom_call.1} parent=1 // pred_fallthru
      _
    // Predicated region
    $region42: #{tpu_custom_call.1} parent=1 // pred_check
      _
    $region43: #{tpu_custom_call.1} parent=1 // pred_check_branch
      %98 = sbr.rel (0) target = $region45
    $region44: #{tpu_custom_call.1} parent=1 // pred_region
      %s100 = ssub.s32 48, 48
      %101 = vsyncadd [#allocation12], %s100
      %s102 = sshll.u32 [#allocation11], 4
      %s103 = int_to_ptr.vmem [resolvable:$true] %s102
      %108 = dma.hbm_to_vmem [thread:$0]  %s10, 48, %s103, [#allocation12], 16, 16, 1
    $region45: #{tpu_custom_call.1} parent=1 // pred_fallthru
      _
    // Predicated region
    $region46: #{tpu_custom_call.1} parent=1 // pred_check
      _
    $region47: #{tpu_custom_call.1} parent=1 // pred_check_branch
      %110 = sbr.rel (0) target = $region49
    $region48: #{tpu_custom_call.1} parent=1 // pred_region
      %s112 = ssub.s32 48, 48
      %113 = vsyncadd [#allocation12], %s112
      %s114 = sshll.u32 [#allocation13], 4
      %s115 = int_to_ptr.vmem [resolvable:$true] %s114
      %120 = dma.hbm_to_vmem [thread:$0]  %s11, 48, %s115, [#allocation12], 16, 16, 1
    $region49: #{tpu_custom_call.1} parent=1 // pred_fallthru
      _
    // Predicated region
    $region50: #{tpu_custom_call.1} parent=1 // pred_check
      _
    $region51: #{tpu_custom_call.1} parent=1 // pred_check_branch
      %122 = sbr.rel (0) target = $region53
    $region52: #{tpu_custom_call.1} parent=1 // pred_region
      _
    $region53: #{tpu_custom_call.1} parent=1 // pred_fallthru
      _
    // Predicated region
    $region54: #{tpu_custom_call.1} parent=1 // pred_check
      _
    $region55: #{tpu_custom_call.1} parent=1 // pred_check_branch
      %124 = sbr.rel (0) target = $region57
    $region56: #{tpu_custom_call.1} parent=1 // pred_region
      %s126 = ssub.s32 48, 48
      %127 = vsyncadd [#allocation15], %s126
      %s128 = sshll.u32 [#allocation14], 4
      %s129 = int_to_ptr.vmem [resolvable:$true] %s128
      %134 = dma.hbm_to_vmem [thread:$0]  %s13, 48, %s129, [#allocation15], 16, 16, 1
    $region57: #{tpu_custom_call.1} parent=1 // pred_fallthru
      _
    // Predicated region
    $region58: #{tpu_custom_call.1} parent=1 // pred_check
      _
    $region59: #{tpu_custom_call.1} parent=1 // pred_check_branch
      %136 = sbr.rel (0) target = $region61
    $region60: #{tpu_custom_call.1} parent=1 // pred_region
      _
    $region61: #{tpu_custom_call.1} parent=1 // pred_fallthru
      _
    // Predicated region
    $region62: #{tpu_custom_call.1} parent=1 // pred_check
      _
    $region63: #{tpu_custom_call.1} parent=1 // pred_check_branch
      %138 = sbr.rel (0) target = $region65
    $region64: #{tpu_custom_call.1} parent=1 // pred_region
      _
    $region65: #{tpu_custom_call.1} parent=1 // pred_fallthru
      _
    // Predicated region
    $region66: #{tpu_custom_call.1} parent=1 // pred_check
      _
    $region67: #{tpu_custom_call.1} parent=1 // pred_check_branch
      %140 = sbr.rel (0) target = $region69
    $region68: #{tpu_custom_call.1} parent=1 // pred_region
      %s142 = ssub.s32 1024, 1024
      %143 = vsyncadd [#allocation15], %s142
      %s144 = sshll.u32 [#allocation16], 4
      %s145 = int_to_ptr.vmem [resolvable:$true] %s144
      %150 = dma.hbm_to_vmem [thread:$0]  %s16, 1024, %s145, [#allocation15], 128, 128, 8
    $region69: #{tpu_custom_call.1} parent=1 // pred_fallthru
      _
    // Predicated region
    $region70: #{tpu_custom_call.1} parent=1 // pred_check
      _
    $region71: #{tpu_custom_call.1} parent=1 // pred_check_branch
      %152 = sbr.rel (0) target = $region73
    $region72: #{tpu_custom_call.1} parent=1 // pred_region
      _
    $region73: #{tpu_custom_call.1} parent=1 // pred_fallthru
      _
    // Predicated region
    $region74: #{tpu_custom_call.1} parent=1 // pred_check
      _
    $region75: #{tpu_custom_call.1} parent=1 // pred_check_branch
      %154 = sbr.rel (0) target = $region77
    $region76: #{tpu_custom_call.1} parent=1 // pred_region
      %155 = dma.done [#allocation3], 256
    $region77: #{tpu_custom_call.1} parent=1 // pred_fallthru
      _
    // Predicated region
    $region78: #{tpu_custom_call.1} parent=1 // pred_check
      _
    $region79: #{tpu_custom_call.1} parent=1 // pred_check_branch
      %157 = sbr.rel (0) target = $region81
    $region80: #{tpu_custom_call.1} parent=1 // pred_region
      %158 = dma.done [#allocation6], 256
    $region81: #{tpu_custom_call.1} parent=1 // pred_fallthru
      _
    // Predicated region
    $region82: #{tpu_custom_call.1} parent=1 // pred_check
      _
    $region83: #{tpu_custom_call.1} parent=1 // pred_check_branch
      %160 = sbr.rel (0) target = $region85
    $region84: #{tpu_custom_call.1} parent=1 // pred_region
      %161 = dma.done [#allocation6], 16
    $region85: #{tpu_custom_call.1} parent=1 // pred_fallthru
      _
    // Predicated region
    $region86: #{tpu_custom_call.1} parent=1 // pred_check
      _
    $region87: #{tpu_custom_call.1} parent=1 // pred_check_branch
      %163 = sbr.rel (0) target = $region89
    $region88: #{tpu_custom_call.1} parent=1 // pred_region
      %164 = dma.done [#allocation9], 384
    $region89: #{tpu_custom_call.1} parent=1 // pred_fallthru
      _
    // Predicated region
    $region90: #{tpu_custom_call.1} parent=1 // pred_check
      _
    $region91: #{tpu_custom_call.1} parent=1 // pred_check_branch
      %166 = sbr.rel (0) target = $region93
    $region92: #{tpu_custom_call.1} parent=1 // pred_region
      %167 = dma.done [#allocation9], 48
    $region93: #{tpu_custom_call.1} parent=1 // pred_fallthru
      _
    // Predicated region
    $region94: #{tpu_custom_call.1} parent=1 // pred_check
      _
    $region95: #{tpu_custom_call.1} parent=1 // pred_check_branch
      %169 = sbr.rel (0) target = $region97
    $region96: #{tpu_custom_call.1} parent=1 // pred_region
      %170 = dma.done [#allocation12], 48
    $region97: #{tpu_custom_call.1} parent=1 // pred_fallthru
      _
    // Predicated region
    $region98: #{tpu_custom_call.1} parent=1 // pred_check
      _
    $region99: #{tpu_custom_call.1} parent=1 // pred_check_branch
      %172 = sbr.rel (0) target = $region101
    $region100: #{tpu_custom_call.1} parent=1 // pred_region
      %173 = dma.done [#allocation12], 48
    $region101: #{tpu_custom_call.1} parent=1 // pred_fallthru
      _
    // Predicated region
    $region102: #{tpu_custom_call.1} parent=1 // pred_check
      _
    $region103: #{tpu_custom_call.1} parent=1 // pred_check_branch
      %175 = sbr.rel (0) target = $region105
    $region104: #{tpu_custom_call.1} parent=1 // pred_region
      %176 = dma.done [#allocation15], 48
    $region105: #{tpu_custom_call.1} parent=1 // pred_fallthru
      _
    // Predicated region
    $region106: #{tpu_custom_call.1} parent=1 // pred_check
      _
    $region107: #{tpu_custom_call.1} parent=1 // pred_check_branch
      %178 = sbr.rel (0) target = $region109
    $region108: #{tpu_custom_call.1} parent=1 // pred_region
      %179 = dma.done [#allocation15], 1024
    $region109: #{tpu_custom_call.1} parent=1 // pred_fallthru
      _
    %v180 = vld [vmem:[#allocation2] sm:$0xff]
    %v181 = vld [vmem:[#allocation2 + $0x8] sm:$0xf]
    %v182 = vld [vmem:[#allocation5] sm:$0xff]
    %v183 = vld [vmem:[#allocation5 + $0x8] sm:$0xff]
    %v184 = vld [vmem:[#allocation7] sm:$0x1]
    %v186 = vlaneseq
    %v187 = vshrl.u32 %v186, 7
    %v188 = vsub.s32 0, %v187
    %v189 = vrot.slane %v184, %v188
    %vm191 = vcmask 130048
    %v193 = vsel %vm191, %v180, 0
    %v196 = vsel %vm191, %v181, 0
    %198 = vmatprep.subr.mxu0 0.0
    %199 = vmatpush1.msra.mxu0 0.0
    %200 = vmatprep.subr.mxu0 0.0
    %201 = vmatpush1.msra.mxu0 0.0
    %202 = vmatprep.subr.mxu0 0.0
    %203 = vmatpush1.msra.mxu0 0.0
    %204 = vmatprep.subr.mxu0 0.0
    %205 = vmatpush1.msra.mxu0 0.0
    %206 = vmatprep.subr.mxu0 0.0
    %207 = vmatpush1.msra.mxu0 0.0
    %208 = vmatprep.subr.mxu0 0.0
    %209 = vmatpush1.msra.mxu0 0.0
    %210 = vmatprep.subr.mxu0 0.0
    %211 = vmatpush1.msra.mxu0 0.0
    %212 = vmatprep.subr.mxu0 0.0
    %213 = vmatpush1.msra.mxu0 0.0
    %214 = vmatprep.subr.mxu0 0.0
    %215 = vmatpush1.msra.mxu0 0.0
    %216 = vmatprep.subr.mxu0 0.0
    %217 = vmatpush1.msra.mxu0 0.0
    %218 = vmatprep.subr.mxu0 0.0
    %219 = vmatpush1.msra.mxu0 0.0
    %220 = vmatprep.subr.mxu0 0.0
    %221 = vmatpush1.msra.mxu0 0.0
    %222 = vmatprep.subr.mxu0 0.0
    %223 = vmatpush1.msra.mxu0 0.0
    %224 = vmatprep.subr.mxu0 0.0
    %225 = vmatpush1.msra.mxu0 0.0
    %226 = vmatprep.subr.mxu0 0.0
    %227 = vmatpush1.msra.mxu0 %v183
    %228 = vmatprep.subr.mxu0 0.0
    %229 = vmatpush1.msra.mxu0 %v182
    %230 = vmatprep.subr.mxu0 0.0
    %231 = vmatpush2.msra.mxu0 0.0
    %232 = vmatprep.subr.mxu0 0.0
    %233 = vmatpush2.msra.mxu0 0.0
    %234 = vmatprep.subr.mxu0 0.0
    %235 = vmatpush2.msra.mxu0 0.0
    %236 = vmatprep.subr.mxu0 0.0
    %237 = vmatpush2.msra.mxu0 0.0
    %238 = vmatprep.subr.mxu0 0.0
    %239 = vmatpush2.msra.mxu0 0.0
    %240 = vmatprep.subr.mxu0 0.0
    %241 = vmatpush2.msra.mxu0 0.0
    %242 = vmatprep.subr.mxu0 0.0
    %243 = vmatpush2.msra.mxu0 0.0
    %244 = vmatprep.subr.mxu0 0.0
    %245 = vmatpush2.msra.mxu0 0.0
    %246 = vmatprep.subr.mxu0 0.0
    %247 = vmatpush2.msra.mxu0 0.0
    %248 = vmatprep.subr.mxu0 0.0
    %249 = vmatpush2.msra.mxu0 0.0
    %250 = vmatprep.subr.mxu0 0.0
    %251 = vmatpush2.msra.mxu0 0.0
    %252 = vmatprep.subr.mxu0 0.0
    %253 = vmatpush2.msra.mxu0 0.0
    %254 = vmatprep.subr.mxu0 0.0
    %255 = vmatpush2.msra.mxu0 0.0
    %256 = vmatprep.subr.mxu0 0.0
    %257 = vmatpush2.msra.mxu0 0.0
    %258 = vmatprep.subr.mxu0 0.0
    %259 = vmatpush2.msra.mxu0 0.0
    %260 = vmatprep.subr.mxu0 0.0
    %261 = vmatpush2.msra.mxu0 0.0
    %262 = vmatprep.mubr.f32.mxu0 0.0
    %263 = vmatmul.mubr.f32.gmra.mxu0 %v193
    %v264 = vpop.f32.mrf.mxu0
    %v265 = vadd.f32 %v189, %v264
    %v266 = vpop.f32.mrf.mxu0
    %267 = vmatprep.mubr.f32.mxu0 0.0
    %268 = vmatmul.mubr.f32.gmra.mxu0 %v196
    %v269 = vpop.f32.mrf.mxu0
    %v270 = vadd.f32 %v189, %v269
    %v271 = vpop.f32.mrf.mxu0
    %272 = vdwg.mxu0
    %v273 = vld [vmem:[%s1] sm:$0xff]
    %v274 = vld [vmem:[%s1 + $0x8] sm:$0xf]
    %v275 = vld [vmem:[#allocation8] sm:$0xff]
    %vm276 = vcmask 64512
    %v278 = vsel %vm276, %v273, 0
    %v281 = vsel %vm276, %v274, 0
    %283 = vmatprep.subr.mxu0 0.0
    %284 = vmatpush1.msra.mxu0 0.0
    %285 = vmatprep.subr.mxu0 0.0
    %286 = vmatpush1.msra.mxu0 0.0
    %287 = vmatprep.subr.mxu0 0.0
    %288 = vmatpush1.msra.mxu0 0.0
    %289 = vmatprep.subr.mxu0 0.0
    %290 = vmatpush1.msra.mxu0 0.0
    %291 = vmatprep.subr.mxu0 0.0
    %292 = vmatpush1.msra.mxu0 0.0
    %293 = vmatprep.subr.mxu0 0.0
    %294 = vmatpush1.msra.mxu0 0.0
    %295 = vmatprep.subr.mxu0 0.0
    %296 = vmatpush1.msra.mxu0 0.0
    %297 = vmatprep.subr.mxu0 0.0
    %298 = vmatpush1.msra.mxu0 0.0
    %299 = vmatprep.subr.mxu0 0.0
    %300 = vmatpush1.msra.mxu0 0.0
    %301 = vmatprep.subr.mxu0 0.0
    %302 = vmatpush1.msra.mxu0 0.0
    %303 = vmatprep.subr.mxu0 0.0
    %304 = vmatpush1.msra.mxu0 0.0
    %305 = vmatprep.subr.mxu0 0.0
    %306 = vmatpush1.msra.mxu0 0.0
    %307 = vmatprep.subr.mxu0 0.0
    %308 = vmatpush1.msra.mxu0 0.0
    %309 = vmatprep.subr.mxu0 0.0
    %310 = vmatpush1.msra.mxu0 0.0
    %311 = vmatprep.subr.mxu0 0.0
    %312 = vmatpush1.msra.mxu0 0.0
    %313 = vmatprep.subr.mxu0 0.0
    %314 = vmatpush1.msra.mxu0 %v275
    %315 = vmatprep.subr.mxu0 0.0
    %316 = vmatpush2.msra.mxu0 0.0
    %317 = vmatprep.subr.mxu0 0.0
    %318 = vmatpush2.msra.mxu0 0.0
    %319 = vmatprep.subr.mxu0 0.0
    %320 = vmatpush2.msra.mxu0 0.0
    %321 = vmatprep.subr.mxu0 0.0
    %322 = vmatpush2.msra.mxu0 0.0
    %323 = vmatprep.subr.mxu0 0.0
    %324 = vmatpush2.msra.mxu0 0.0
    %325 = vmatprep.subr.mxu0 0.0
    %326 = vmatpush2.msra.mxu0 0.0
    %327 = vmatprep.subr.mxu0 0.0
    %328 = vmatpush2.msra.mxu0 0.0
    %329 = vmatprep.subr.mxu0 0.0
    %330 = vmatpush2.msra.mxu0 0.0
    %331 = vmatprep.subr.mxu0 0.0
    %332 = vmatpush2.msra.mxu0 0.0
    %333 = vmatprep.subr.mxu0 0.0
    %334 = vmatpush2.msra.mxu0 0.0
    %335 = vmatprep.subr.mxu0 0.0
    %336 = vmatpush2.msra.mxu0 0.0
    %337 = vmatprep.subr.mxu0 0.0
    %338 = vmatpush2.msra.mxu0 0.0
    %339 = vmatprep.subr.mxu0 0.0
    %340 = vmatpush2.msra.mxu0 0.0
    %341 = vmatprep.subr.mxu0 0.0
    %342 = vmatpush2.msra.mxu0 0.0
    %343 = vmatprep.subr.mxu0 0.0
    %344 = vmatpush2.msra.mxu0 0.0
    %345 = vmatprep.subr.mxu0 0.0
    %346 = vmatpush2.msra.mxu0 0.0
    %347 = vmatprep.mubr.f32.mxu0 0.0
    %348 = vmatmul.mubr.f32.gmra.mxu0 %v278
    %v349 = vpop.f32.mrf.mxu0
    %v350 = vadd.f32 0.0, %v349
    %v351 = vpop.f32.mrf.mxu0
    %352 = vmatprep.mubr.f32.mxu0 0.0
    %353 = vmatmul.mubr.f32.gmra.mxu0 %v281
    %v354 = vpop.f32.mrf.mxu0
    %v355 = vadd.f32 0.0, %v354
    %v356 = vpop.f32.mrf.mxu0
    %357 = vdwg.mxu0
    %s358 = scalar_lea.vmem %s1, 16
    %v359 = vld [vmem:[%s358] sm:$0xff]
    %v360 = vld [vmem:[%s358 + $0x8] sm:$0xf]
    %v362 = vsel %vm276, %v359, 0
    %v365 = vsel %vm276, %v360, 0
    %367 = vmatprep.subr.mxu0 0.0
    %368 = vmatpush1.msra.mxu0 0.0
    %369 = vmatprep.subr.mxu0 0.0
    %370 = vmatpush1.msra.mxu0 0.0
    %371 = vmatprep.subr.mxu0 0.0
    %372 = vmatpush1.msra.mxu0 0.0
    %373 = vmatprep.subr.mxu0 0.0
    %374 = vmatpush1.msra.mxu0 0.0
    %375 = vmatprep.subr.mxu0 0.0
    %376 = vmatpush1.msra.mxu0 0.0
    %377 = vmatprep.subr.mxu0 0.0
    %378 = vmatpush1.msra.mxu0 0.0
    %379 = vmatprep.subr.mxu0 0.0
    %380 = vmatpush1.msra.mxu0 0.0
    %381 = vmatprep.subr.mxu0 0.0
    %382 = vmatpush1.msra.mxu0 0.0
    %383 = vmatprep.subr.mxu0 0.0
    %384 = vmatpush1.msra.mxu0 0.0
    %385 = vmatprep.subr.mxu0 0.0
    %386 = vmatpush1.msra.mxu0 0.0
    %387 = vmatprep.subr.mxu0 0.0
    %388 = vmatpush1.msra.mxu0 0.0
    %389 = vmatprep.subr.mxu0 0.0
    %390 = vmatpush1.msra.mxu0 0.0
    %391 = vmatprep.subr.mxu0 0.0
    %392 = vmatpush1.msra.mxu0 0.0
    %393 = vmatprep.subr.mxu0 0.0
    %394 = vmatpush1.msra.mxu0 0.0
    %395 = vmatprep.subr.mxu0 0.0
    %396 = vmatpush1.msra.mxu0 0.0
    %397 = vmatprep.subr.mxu0 0.0
    %398 = vmatpush1.msra.mxu0 %v275
    %399 = vmatprep.subr.mxu0 0.0
    %400 = vmatpush2.msra.mxu0 0.0
    %401 = vmatprep.subr.mxu0 0.0
    %402 = vmatpush2.msra.mxu0 0.0
    %403 = vmatprep.subr.mxu0 0.0
    %404 = vmatpush2.msra.mxu0 0.0
    %405 = vmatprep.subr.mxu0 0.0
    %406 = vmatpush2.msra.mxu0 0.0
    %407 = vmatprep.subr.mxu0 0.0
    %408 = vmatpush2.msra.mxu0 0.0
    %409 = vmatprep.subr.mxu0 0.0
    %410 = vmatpush2.msra.mxu0 0.0
    %411 = vmatprep.subr.mxu0 0.0
    %412 = vmatpush2.msra.mxu0 0.0
    %413 = vmatprep.subr.mxu0 0.0
    %414 = vmatpush2.msra.mxu0 0.0
    %415 = vmatprep.subr.mxu0 0.0
    %416 = vmatpush2.msra.mxu0 0.0
    %417 = vmatprep.subr.mxu0 0.0
    %418 = vmatpush2.msra.mxu0 0.0
    %419 = vmatprep.subr.mxu0 0.0
    %420 = vmatpush2.msra.mxu0 0.0
    %421 = vmatprep.subr.mxu0 0.0
    %422 = vmatpush2.msra.mxu0 0.0
    %423 = vmatprep.subr.mxu0 0.0
    %424 = vmatpush2.msra.mxu0 0.0
    %425 = vmatprep.subr.mxu0 0.0
    %426 = vmatpush2.msra.mxu0 0.0
    %427 = vmatprep.subr.mxu0 0.0
    %428 = vmatpush2.msra.mxu0 0.0
    %429 = vmatprep.subr.mxu0 0.0
    %430 = vmatpush2.msra.mxu0 0.0
    %431 = vmatprep.mubr.f32.mxu0 0.0
    %432 = vmatmul.mubr.f32.gmra.mxu0 %v362
    %v433 = vpop.f32.mrf.mxu0
    %v434 = vadd.f32 0.0, %v433
    %v435 = vpop.f32.mrf.mxu0
    %436 = vmatprep.mubr.f32.mxu0 0.0
    %437 = vmatmul.mubr.f32.gmra.mxu0 %v365
    %v438 = vpop.f32.mrf.mxu0
    %v439 = vadd.f32 0.0, %v438
    %v440 = vpop.f32.mrf.mxu0
    %441 = vdwg.mxu0
    %s442 = scalar_lea.vmem %s1, 32
    %v443 = vld [vmem:[%s442] sm:$0xff]
    %v444 = vld [vmem:[%s442 + $0x8] sm:$0xf]
    %v446 = vsel %vm276, %v443, 0
    %v449 = vsel %vm276, %v444, 0
    %451 = vmatprep.subr.mxu0 0.0
    %452 = vmatpush1.msra.mxu0 0.0
    %453 = vmatprep.subr.mxu0 0.0
    %454 = vmatpush1.msra.mxu0 0.0
    %455 = vmatprep.subr.mxu0 0.0
    %456 = vmatpush1.msra.mxu0 0.0
    %457 = vmatprep.subr.mxu0 0.0
    %458 = vmatpush1.msra.mxu0 0.0
    %459 = vmatprep.subr.mxu0 0.0
    %460 = vmatpush1.msra.mxu0 0.0
    %461 = vmatprep.subr.mxu0 0.0
    %462 = vmatpush1.msra.mxu0 0.0
    %463 = vmatprep.subr.mxu0 0.0
    %464 = vmatpush1.msra.mxu0 0.0
    %465 = vmatprep.subr.mxu0 0.0
    %466 = vmatpush1.msra.mxu0 0.0
    %467 = vmatprep.subr.mxu0 0.0
    %468 = vmatpush1.msra.mxu0 0.0
    %469 = vmatprep.subr.mxu0 0.0
    %470 = vmatpush1.msra.mxu0 0.0
    %471 = vmatprep.subr.mxu0 0.0
    %472 = vmatpush1.msra.mxu0 0.0
    %473 = vmatprep.subr.mxu0 0.0
    %474 = vmatpush1.msra.mxu0 0.0
    %475 = vmatprep.subr.mxu0 0.0
    %476 = vmatpush1.msra.mxu0 0.0
    %477 = vmatprep.subr.mxu0 0.0
    %478 = vmatpush1.msra.mxu0 0.0
    %479 = vmatprep.subr.mxu0 0.0
    %480 = vmatpush1.msra.mxu0 0.0
    %481 = vmatprep.subr.mxu0 0.0
    %482 = vmatpush1.msra.mxu0 %v275
    %483 = vmatprep.subr.mxu0 0.0
    %484 = vmatpush2.msra.mxu0 0.0
    %485 = vmatprep.subr.mxu0 0.0
    %486 = vmatpush2.msra.mxu0 0.0
    %487 = vmatprep.subr.mxu0 0.0
    %488 = vmatpush2.msra.mxu0 0.0
    %489 = vmatprep.subr.mxu0 0.0
    %490 = vmatpush2.msra.mxu0 0.0
    %491 = vmatprep.subr.mxu0 0.0
    %492 = vmatpush2.msra.mxu0 0.0
    %493 = vmatprep.subr.mxu0 0.0
    %494 = vmatpush2.msra.mxu0 0.0
    %495 = vmatprep.subr.mxu0 0.0
    %496 = vmatpush2.msra.mxu0 0.0
    %497 = vmatprep.subr.mxu0 0.0
    %498 = vmatpush2.msra.mxu0 0.0
    %499 = vmatprep.subr.mxu0 0.0
    %500 = vmatpush2.msra.mxu0 0.0
    %501 = vmatprep.subr.mxu0 0.0
    %502 = vmatpush2.msra.mxu0 0.0
    %503 = vmatprep.subr.mxu0 0.0
    %504 = vmatpush2.msra.mxu0 0.0
    %505 = vmatprep.subr.mxu0 0.0
    %506 = vmatpush2.msra.mxu0 0.0
    %507 = vmatprep.subr.mxu0 0.0
    %508 = vmatpush2.msra.mxu0 0.0
    %509 = vmatprep.subr.mxu0 0.0
    %510 = vmatpush2.msra.mxu0 0.0
    %511 = vmatprep.subr.mxu0 0.0
    %512 = vmatpush2.msra.mxu0 0.0
    %513 = vmatprep.subr.mxu0 0.0
    %514 = vmatpush2.msra.mxu0 0.0
    %515 = vmatprep.mubr.f32.mxu0 0.0
    %516 = vmatmul.mubr.f32.gmra.mxu0 %v446
    %v517 = vpop.f32.mrf.mxu0
    %v518 = vadd.f32 0.0, %v517
    %v519 = vpop.f32.mrf.mxu0
    %520 = vmatprep.mubr.f32.mxu0 0.0
    %521 = vmatmul.mubr.f32.gmra.mxu0 %v449
    %v522 = vpop.f32.mrf.mxu0
    %v523 = vadd.f32 0.0, %v522
    %v524 = vpop.f32.mrf.mxu0
    %525 = vdwg.mxu0
    %s526 = scalar_lea.vmem %s1, 48
    %v527 = vld [vmem:[%s526] sm:$0xff]
    %v528 = vld [vmem:[%s526 + $0x8] sm:$0xf]
    %v530 = vsel %vm276, %v527, 0
    %v533 = vsel %vm276, %v528, 0
    %535 = vmatprep.subr.mxu0 0.0
    %536 = vmatpush1.msra.mxu0 0.0
    %537 = vmatprep.subr.mxu0 0.0
    %538 = vmatpush1.msra.mxu0 0.0
    %539 = vmatprep.subr.mxu0 0.0
    %540 = vmatpush1.msra.mxu0 0.0
    %541 = vmatprep.subr.mxu0 0.0
    %542 = vmatpush1.msra.mxu0 0.0
    %543 = vmatprep.subr.mxu0 0.0
    %544 = vmatpush1.msra.mxu0 0.0
    %545 = vmatprep.subr.mxu0 0.0
    %546 = vmatpush1.msra.mxu0 0.0
    %547 = vmatprep.subr.mxu0 0.0
    %548 = vmatpush1.msra.mxu0 0.0
    %549 = vmatprep.subr.mxu0 0.0
    %550 = vmatpush1.msra.mxu0 0.0
    %551 = vmatprep.subr.mxu0 0.0
    %552 = vmatpush1.msra.mxu0 0.0
    %553 = vmatprep.subr.mxu0 0.0
    %554 = vmatpush1.msra.mxu0 0.0
    %555 = vmatprep.subr.mxu0 0.0
    %556 = vmatpush1.msra.mxu0 0.0
    %557 = vmatprep.subr.mxu0 0.0
    %558 = vmatpush1.msra.mxu0 0.0
    %559 = vmatprep.subr.mxu0 0.0
    %560 = vmatpush1.msra.mxu0 0.0
    %561 = vmatprep.subr.mxu0 0.0
    %562 = vmatpush1.msra.mxu0 0.0
    %563 = vmatprep.subr.mxu0 0.0
    %564 = vmatpush1.msra.mxu0 0.0
    %565 = vmatprep.subr.mxu0 0.0
    %566 = vmatpush1.msra.mxu0 %v275
    %567 = vmatprep.subr.mxu0 0.0
    %568 = vmatpush2.msra.mxu0 0.0
    %569 = vmatprep.subr.mxu0 0.0
    %570 = vmatpush2.msra.mxu0 0.0
    %571 = vmatprep.subr.mxu0 0.0
    %572 = vmatpush2.msra.mxu0 0.0
    %573 = vmatprep.subr.mxu0 0.0
    %574 = vmatpush2.msra.mxu0 0.0
    %575 = vmatprep.subr.mxu0 0.0
    %576 = vmatpush2.msra.mxu0 0.0
    %577 = vmatprep.subr.mxu0 0.0
    %578 = vmatpush2.msra.mxu0 0.0
    %579 = vmatprep.subr.mxu0 0.0
    %580 = vmatpush2.msra.mxu0 0.0
    %581 = vmatprep.subr.mxu0 0.0
    %582 = vmatpush2.msra.mxu0 0.0
    %583 = vmatprep.subr.mxu0 0.0
    %584 = vmatpush2.msra.mxu0 0.0
    %585 = vmatprep.subr.mxu0 0.0
    %586 = vmatpush2.msra.mxu0 0.0
    %587 = vmatprep.subr.mxu0 0.0
    %588 = vmatpush2.msra.mxu0 0.0
    %589 = vmatprep.subr.mxu0 0.0
    %590 = vmatpush2.msra.mxu0 0.0
    %591 = vmatprep.subr.mxu0 0.0
    %592 = vmatpush2.msra.mxu0 0.0
    %593 = vmatprep.subr.mxu0 0.0
    %594 = vmatpush2.msra.mxu0 0.0
    %595 = vmatprep.subr.mxu0 0.0
    %596 = vmatpush2.msra.mxu0 0.0
    %597 = vmatprep.subr.mxu0 0.0
    %598 = vmatpush2.msra.mxu0 0.0
    %599 = vmatprep.mubr.f32.mxu0 0.0
    %600 = vmatmul.mubr.f32.gmra.mxu0 %v530
    %v601 = vpop.f32.mrf.mxu0
    %v602 = vadd.f32 0.0, %v601
    %v603 = vpop.f32.mrf.mxu0
    %604 = vmatprep.mubr.f32.mxu0 0.0
    %605 = vmatmul.mubr.f32.gmra.mxu0 %v533
    %v606 = vpop.f32.mrf.mxu0
    %v607 = vadd.f32 0.0, %v606
    %v608 = vpop.f32.mrf.mxu0
    %609 = vdwg.mxu0
    %s610 = scalar_lea.vmem [#allocation8], 8
    %v611 = vld [vmem:[%s610] sm:$0xff]
    %612 = vmatprep.subr.mxu0 0.0
    %613 = vmatpush1.msra.mxu0 0.0
    %614 = vmatprep.subr.mxu0 0.0
    %615 = vmatpush1.msra.mxu0 0.0
    %616 = vmatprep.subr.mxu0 0.0
    %617 = vmatpush1.msra.mxu0 0.0
    %618 = vmatprep.subr.mxu0 0.0
    %619 = vmatpush1.msra.mxu0 0.0
    %620 = vmatprep.subr.mxu0 0.0
    %621 = vmatpush1.msra.mxu0 0.0
    %622 = vmatprep.subr.mxu0 0.0
    %623 = vmatpush1.msra.mxu0 0.0
    %624 = vmatprep.subr.mxu0 0.0
    %625 = vmatpush1.msra.mxu0 0.0
    %626 = vmatprep.subr.mxu0 0.0
    %627 = vmatpush1.msra.mxu0 0.0
    %628 = vmatprep.subr.mxu0 0.0
    %629 = vmatpush1.msra.mxu0 0.0
    %630 = vmatprep.subr.mxu0 0.0
    %631 = vmatpush1.msra.mxu0 0.0
    %632 = vmatprep.subr.mxu0 0.0
    %633 = vmatpush1.msra.mxu0 0.0
    %634 = vmatprep.subr.mxu0 0.0
    %635 = vmatpush1.msra.mxu0 0.0
    %636 = vmatprep.subr.mxu0 0.0
    %637 = vmatpush1.msra.mxu0 0.0
    %638 = vmatprep.subr.mxu0 0.0
    %639 = vmatpush1.msra.mxu0 0.0
    %640 = vmatprep.subr.mxu0 0.0
    %641 = vmatpush1.msra.mxu0 0.0
    %642 = vmatprep.subr.mxu0 0.0
    %643 = vmatpush1.msra.mxu0 %v611
    %644 = vmatprep.subr.mxu0 0.0
    %645 = vmatpush2.msra.mxu0 0.0
    %646 = vmatprep.subr.mxu0 0.0
    %647 = vmatpush2.msra.mxu0 0.0
    %648 = vmatprep.subr.mxu0 0.0
    %649 = vmatpush2.msra.mxu0 0.0
    %650 = vmatprep.subr.mxu0 0.0
    %651 = vmatpush2.msra.mxu0 0.0
    %652 = vmatprep.subr.mxu0 0.0
    %653 = vmatpush2.msra.mxu0 0.0
    %654 = vmatprep.subr.mxu0 0.0
    %655 = vmatpush2.msra.mxu0 0.0
    %656 = vmatprep.subr.mxu0 0.0
    %657 = vmatpush2.msra.mxu0 0.0
    %658 = vmatprep.subr.mxu0 0.0
    %659 = vmatpush2.msra.mxu0 0.0
    %660 = vmatprep.subr.mxu0 0.0
    %661 = vmatpush2.msra.mxu0 0.0
    %662 = vmatprep.subr.mxu0 0.0
    %663 = vmatpush2.msra.mxu0 0.0
    %664 = vmatprep.subr.mxu0 0.0
    %665 = vmatpush2.msra.mxu0 0.0
    %666 = vmatprep.subr.mxu0 0.0
    %667 = vmatpush2.msra.mxu0 0.0
    %668 = vmatprep.subr.mxu0 0.0
    %669 = vmatpush2.msra.mxu0 0.0
    %670 = vmatprep.subr.mxu0 0.0
    %671 = vmatpush2.msra.mxu0 0.0
    %672 = vmatprep.subr.mxu0 0.0
    %673 = vmatpush2.msra.mxu0 0.0
    %674 = vmatprep.subr.mxu0 0.0
    %675 = vmatpush2.msra.mxu0 0.0
    %676 = vmatprep.mubr.f32.mxu0 0.0
    %677 = vmatmul.mubr.f32.gmra.mxu0 %v278
    %v678 = vpop.f32.mrf.mxu0
    %v679 = vadd.f32 0.0, %v678
    %v680 = vpop.f32.mrf.mxu0
    %681 = vmatprep.mubr.f32.mxu0 0.0
    %682 = vmatmul.mubr.f32.gmra.mxu0 %v281
    %v683 = vpop.f32.mrf.mxu0
    %v684 = vadd.f32 0.0, %v683
    %v685 = vpop.f32.mrf.mxu0
    %686 = vdwg.mxu0
    %687 = vmatprep.subr.mxu0 0.0
    %688 = vmatpush1.msra.mxu0 0.0
    %689 = vmatprep.subr.mxu0 0.0
    %690 = vmatpush1.msra.mxu0 0.0
    %691 = vmatprep.subr.mxu0 0.0
    %692 = vmatpush1.msra.mxu0 0.0
    %693 = vmatprep.subr.mxu0 0.0
    %694 = vmatpush1.msra.mxu0 0.0
    %695 = vmatprep.subr.mxu0 0.0
    %696 = vmatpush1.msra.mxu0 0.0
    %697 = vmatprep.subr.mxu0 0.0
    %698 = vmatpush1.msra.mxu0 0.0
    %699 = vmatprep.subr.mxu0 0.0
    %700 = vmatpush1.msra.mxu0 0.0
    %701 = vmatprep.subr.mxu0 0.0
    %702 = vmatpush1.msra.mxu0 0.0
    %703 = vmatprep.subr.mxu0 0.0
    %704 = vmatpush1.msra.mxu0 0.0
    %705 = vmatprep.subr.mxu0 0.0
    %706 = vmatpush1.msra.mxu0 0.0
    %707 = vmatprep.subr.mxu0 0.0
    %708 = vmatpush1.msra.mxu0 0.0
    %709 = vmatprep.subr.mxu0 0.0
    %710 = vmatpush1.msra.mxu0 0.0
    %711 = vmatprep.subr.mxu0 0.0
    %712 = vmatpush1.msra.mxu0 0.0
    %713 = vmatprep.subr.mxu0 0.0
    %714 = vmatpush1.msra.mxu0 0.0
    %715 = vmatprep.subr.mxu0 0.0
    %716 = vmatpush1.msra.mxu0 0.0
    %717 = vmatprep.subr.mxu0 0.0
    %718 = vmatpush1.msra.mxu0 %v611
    %719 = vmatprep.subr.mxu0 0.0
    %720 = vmatpush2.msra.mxu0 0.0
    %721 = vmatprep.subr.mxu0 0.0
    %722 = vmatpush2.msra.mxu0 0.0
    %723 = vmatprep.subr.mxu0 0.0
    %724 = vmatpush2.msra.mxu0 0.0
    %725 = vmatprep.subr.mxu0 0.0
    %726 = vmatpush2.msra.mxu0 0.0
    %727 = vmatprep.subr.mxu0 0.0
    %728 = vmatpush2.msra.mxu0 0.0
    %729 = vmatprep.subr.mxu0 0.0
    %730 = vmatpush2.msra.mxu0 0.0
    %731 = vmatprep.subr.mxu0 0.0
    %732 = vmatpush2.msra.mxu0 0.0
    %733 = vmatprep.subr.mxu0 0.0
    %734 = vmatpush2.msra.mxu0 0.0
    %735 = vmatprep.subr.mxu0 0.0
    %736 = vmatpush2.msra.mxu0 0.0
    %737 = vmatprep.subr.mxu0 0.0
    %738 = vmatpush2.msra.mxu0 0.0
    %739 = vmatprep.subr.mxu0 0.0
    %740 = vmatpush2.msra.mxu0 0.0
    %741 = vmatprep.subr.mxu0 0.0
    %742 = vmatpush2.msra.mxu0 0.0
    %743 = vmatprep.subr.mxu0 0.0
    %744 = vmatpush2.msra.mxu0 0.0
    %745 = vmatprep.subr.mxu0 0.0
    %746 = vmatpush2.msra.mxu0 0.0
    %747 = vmatprep.subr.mxu0 0.0
    %748 = vmatpush2.msra.mxu0 0.0
    %749 = vmatprep.subr.mxu0 0.0
    %750 = vmatpush2.msra.mxu0 0.0
    %751 = vmatprep.mubr.f32.mxu0 0.0
    %752 = vmatmul.mubr.f32.gmra.mxu0 %v362
    %v753 = vpop.f32.mrf.mxu0
    %v754 = vadd.f32 0.0, %v753
    %v755 = vpop.f32.mrf.mxu0
    %756 = vmatprep.mubr.f32.mxu0 0.0
    %757 = vmatmul.mubr.f32.gmra.mxu0 %v365
    %v758 = vpop.f32.mrf.mxu0
    %v759 = vadd.f32 0.0, %v758
    %v760 = vpop.f32.mrf.mxu0
    %761 = vdwg.mxu0
    %762 = vmatprep.subr.mxu0 0.0
    %763 = vmatpush1.msra.mxu0 0.0
    %764 = vmatprep.subr.mxu0 0.0
    %765 = vmatpush1.msra.mxu0 0.0
    %766 = vmatprep.subr.mxu0 0.0
    %767 = vmatpush1.msra.mxu0 0.0
    %768 = vmatprep.subr.mxu0 0.0
    %769 = vmatpush1.msra.mxu0 0.0
    %770 = vmatprep.subr.mxu0 0.0
    %771 = vmatpush1.msra.mxu0 0.0
    %772 = vmatprep.subr.mxu0 0.0
    %773 = vmatpush1.msra.mxu0 0.0
    %774 = vmatprep.subr.mxu0 0.0
    %775 = vmatpush1.msra.mxu0 0.0
    %776 = vmatprep.subr.mxu0 0.0
    %777 = vmatpush1.msra.mxu0 0.0
    %778 = vmatprep.subr.mxu0 0.0
    %779 = vmatpush1.msra.mxu0 0.0
    %780 = vmatprep.subr.mxu0 0.0
    %781 = vmatpush1.msra.mxu0 0.0
    %782 = vmatprep.subr.mxu0 0.0
    %783 = vmatpush1.msra.mxu0 0.0
    %784 = vmatprep.subr.mxu0 0.0
    %785 = vmatpush1.msra.mxu0 0.0
    %786 = vmatprep.subr.mxu0 0.0
    %787 = vmatpush1.msra.mxu0 0.0
    %788 = vmatprep.subr.mxu0 0.0
    %789 = vmatpush1.msra.mxu0 0.0
    %790 = vmatprep.subr.mxu0 0.0
    %791 = vmatpush1.msra.mxu0 0.0
    %792 = vmatprep.subr.mxu0 0.0
    %793 = vmatpush1.msra.mxu0 %v611
    %794 = vmatprep.subr.mxu0 0.0
    %795 = vmatpush2.msra.mxu0 0.0
    %796 = vmatprep.subr.mxu0 0.0
    %797 = vmatpush2.msra.mxu0 0.0
    %798 = vmatprep.subr.mxu0 0.0
    %799 = vmatpush2.msra.mxu0 0.0
    %800 = vmatprep.subr.mxu0 0.0
    %801 = vmatpush2.msra.mxu0 0.0
    %802 = vmatprep.subr.mxu0 0.0
    %803 = vmatpush2.msra.mxu0 0.0
    %804 = vmatprep.subr.mxu0 0.0
    %805 = vmatpush2.msra.mxu0 0.0
    %806 = vmatprep.subr.mxu0 0.0
    %807 = vmatpush2.msra.mxu0 0.0
    %808 = vmatprep.subr.mxu0 0.0
    %809 = vmatpush2.msra.mxu0 0.0
    %810 = vmatprep.subr.mxu0 0.0
    %811 = vmatpush2.msra.mxu0 0.0
    %812 = vmatprep.subr.mxu0 0.0
    %813 = vmatpush2.msra.mxu0 0.0
    %814 = vmatprep.subr.mxu0 0.0
    %815 = vmatpush2.msra.mxu0 0.0
    %816 = vmatprep.subr.mxu0 0.0
    %817 = vmatpush2.msra.mxu0 0.0
    %818 = vmatprep.subr.mxu0 0.0
    %819 = vmatpush2.msra.mxu0 0.0
    %820 = vmatprep.subr.mxu0 0.0
    %821 = vmatpush2.msra.mxu0 0.0
    %822 = vmatprep.subr.mxu0 0.0
    %823 = vmatpush2.msra.mxu0 0.0
    %824 = vmatprep.subr.mxu0 0.0
    %825 = vmatpush2.msra.mxu0 0.0
    %826 = vmatprep.mubr.f32.mxu0 0.0
    %827 = vmatmul.mubr.f32.gmra.mxu0 %v446
    %v828 = vpop.f32.mrf.mxu0
    %v829 = vadd.f32 0.0, %v828
    %v830 = vpop.f32.mrf.mxu0
    %831 = vmatprep.mubr.f32.mxu0 0.0
    %832 = vmatmul.mubr.f32.gmra.mxu0 %v449
    %v833 = vpop.f32.mrf.mxu0
    %v834 = vadd.f32 0.0, %v833
    %v835 = vpop.f32.mrf.mxu0
    %836 = vdwg.mxu0
    %837 = vmatprep.subr.mxu0 0.0
    %838 = vmatpush1.msra.mxu0 0.0
    %839 = vmatprep.subr.mxu0 0.0
    %840 = vmatpush1.msra.mxu0 0.0
    %841 = vmatprep.subr.mxu0 0.0
    %842 = vmatpush1.msra.mxu0 0.0
    %843 = vmatprep.subr.mxu0 0.0
    %844 = vmatpush1.msra.mxu0 0.0
    %845 = vmatprep.subr.mxu0 0.0
    %846 = vmatpush1.msra.mxu0 0.0
    %847 = vmatprep.subr.mxu0 0.0
    %848 = vmatpush1.msra.mxu0 0.0
    %849 = vmatprep.subr.mxu0 0.0
    %850 = vmatpush1.msra.mxu0 0.0
    %851 = vmatprep.subr.mxu0 0.0
    %852 = vmatpush1.msra.mxu0 0.0
    %853 = vmatprep.subr.mxu0 0.0
    %854 = vmatpush1.msra.mxu0 0.0
    %855 = vmatprep.subr.mxu0 0.0
    %856 = vmatpush1.msra.mxu0 0.0
    %857 = vmatprep.subr.mxu0 0.0
    %858 = vmatpush1.msra.mxu0 0.0
    %859 = vmatprep.subr.mxu0 0.0
    %860 = vmatpush1.msra.mxu0 0.0
    %861 = vmatprep.subr.mxu0 0.0
    %862 = vmatpush1.msra.mxu0 0.0
    %863 = vmatprep.subr.mxu0 0.0
    %864 = vmatpush1.msra.mxu0 0.0
    %865 = vmatprep.subr.mxu0 0.0
    %866 = vmatpush1.msra.mxu0 0.0
    %867 = vmatprep.subr.mxu0 0.0
    %868 = vmatpush1.msra.mxu0 %v611
    %869 = vmatprep.subr.mxu0 0.0
    %870 = vmatpush2.msra.mxu0 0.0
    %871 = vmatprep.subr.mxu0 0.0
    %872 = vmatpush2.msra.mxu0 0.0
    %873 = vmatprep.subr.mxu0 0.0
    %874 = vmatpush2.msra.mxu0 0.0
    %875 = vmatprep.subr.mxu0 0.0
    %876 = vmatpush2.msra.mxu0 0.0
    %877 = vmatprep.subr.mxu0 0.0
    %878 = vmatpush2.msra.mxu0 0.0
    %879 = vmatprep.subr.mxu0 0.0
    %880 = vmatpush2.msra.mxu0 0.0
    %881 = vmatprep.subr.mxu0 0.0
    %882 = vmatpush2.msra.mxu0 0.0
    %883 = vmatprep.subr.mxu0 0.0
    %884 = vmatpush2.msra.mxu0 0.0
    %885 = vmatprep.subr.mxu0 0.0
    %886 = vmatpush2.msra.mxu0 0.0
    %887 = vmatprep.subr.mxu0 0.0
    %888 = vmatpush2.msra.mxu0 0.0
    %889 = vmatprep.subr.mxu0 0.0
    %890 = vmatpush2.msra.mxu0 0.0
    %891 = vmatprep.subr.mxu0 0.0
    %892 = vmatpush2.msra.mxu0 0.0
    %893 = vmatprep.subr.mxu0 0.0
    %894 = vmatpush2.msra.mxu0 0.0
    %895 = vmatprep.subr.mxu0 0.0
    %896 = vmatpush2.msra.mxu0 0.0
    %897 = vmatprep.subr.mxu0 0.0
    %898 = vmatpush2.msra.mxu0 0.0
    %899 = vmatprep.subr.mxu0 0.0
    %900 = vmatpush2.msra.mxu0 0.0
    %901 = vmatprep.mubr.f32.mxu0 0.0
    %902 = vmatmul.mubr.f32.gmra.mxu0 %v530
    %v903 = vpop.f32.mrf.mxu0
    %v904 = vadd.f32 0.0, %v903
    %v905 = vpop.f32.mrf.mxu0
    %906 = vmatprep.mubr.f32.mxu0 0.0
    %907 = vmatmul.mubr.f32.gmra.mxu0 %v533
    %v908 = vpop.f32.mrf.mxu0
    %v909 = vadd.f32 0.0, %v908
    %v910 = vpop.f32.mrf.mxu0
    %911 = vdwg.mxu0
    %s912 = scalar_lea.vmem [#allocation8], 16
    %v913 = vld [vmem:[%s912] sm:$0xff]
    %914 = vmatprep.subr.mxu0 0.0
    %915 = vmatpush1.msra.mxu0 0.0
    %916 = vmatprep.subr.mxu0 0.0
    %917 = vmatpush1.msra.mxu0 0.0
    %918 = vmatprep.subr.mxu0 0.0
    %919 = vmatpush1.msra.mxu0 0.0
    %920 = vmatprep.subr.mxu0 0.0
    %921 = vmatpush1.msra.mxu0 0.0
    %922 = vmatprep.subr.mxu0 0.0
    %923 = vmatpush1.msra.mxu0 0.0
    %924 = vmatprep.subr.mxu0 0.0
    %925 = vmatpush1.msra.mxu0 0.0
    %926 = vmatprep.subr.mxu0 0.0
    %927 = vmatpush1.msra.mxu0 0.0
    %928 = vmatprep.subr.mxu0 0.0
    %929 = vmatpush1.msra.mxu0 0.0
    %930 = vmatprep.subr.mxu0 0.0
    %931 = vmatpush1.msra.mxu0 0.0
    %932 = vmatprep.subr.mxu0 0.0
    %933 = vmatpush1.msra.mxu0 0.0
    %934 = vmatprep.subr.mxu0 0.0
    %935 = vmatpush1.msra.mxu0 0.0
    %936 = vmatprep.subr.mxu0 0.0
    %937 = vmatpush1.msra.mxu0 0.0
    %938 = vmatprep.subr.mxu0 0.0
    %939 = vmatpush1.msra.mxu0 0.0
    %940 = vmatprep.subr.mxu0 0.0
    %941 = vmatpush1.msra.mxu0 0.0
    %942 = vmatprep.subr.mxu0 0.0
    %943 = vmatpush1.msra.mxu0 0.0
    %944 = vmatprep.subr.mxu0 0.0
    %945 = vmatpush1.msra.mxu0 %v913
    %946 = vmatprep.subr.mxu0 0.0
    %947 = vmatpush2.msra.mxu0 0.0
    %948 = vmatprep.subr.mxu0 0.0
    %949 = vmatpush2.msra.mxu0 0.0
    %950 = vmatprep.subr.mxu0 0.0
    %951 = vmatpush2.msra.mxu0 0.0
    %952 = vmatprep.subr.mxu0 0.0
    %953 = vmatpush2.msra.mxu0 0.0
    %954 = vmatprep.subr.mxu0 0.0
    %955 = vmatpush2.msra.mxu0 0.0
    %956 = vmatprep.subr.mxu0 0.0
    %957 = vmatpush2.msra.mxu0 0.0
    %958 = vmatprep.subr.mxu0 0.0
    %959 = vmatpush2.msra.mxu0 0.0
    %960 = vmatprep.subr.mxu0 0.0
    %961 = vmatpush2.msra.mxu0 0.0
    %962 = vmatprep.subr.mxu0 0.0
    %963 = vmatpush2.msra.mxu0 0.0
    %964 = vmatprep.subr.mxu0 0.0
    %965 = vmatpush2.msra.mxu0 0.0
    %966 = vmatprep.subr.mxu0 0.0
    %967 = vmatpush2.msra.mxu0 0.0
    %968 = vmatprep.subr.mxu0 0.0
    %969 = vmatpush2.msra.mxu0 0.0
    %970 = vmatprep.subr.mxu0 0.0
    %971 = vmatpush2.msra.mxu0 0.0
    %972 = vmatprep.subr.mxu0 0.0
    %973 = vmatpush2.msra.mxu0 0.0
    %974 = vmatprep.subr.mxu0 0.0
    %975 = vmatpush2.msra.mxu0 0.0
    %976 = vmatprep.subr.mxu0 0.0
    %977 = vmatpush2.msra.mxu0 0.0
    %978 = vmatprep.mubr.f32.mxu0 0.0
    %979 = vmatmul.mubr.f32.gmra.mxu0 %v278
    %v980 = vpop.f32.mrf.mxu0
    %v981 = vadd.f32 0.0, %v980
    %v982 = vpop.f32.mrf.mxu0
    %983 = vmatprep.mubr.f32.mxu0 0.0
    %984 = vmatmul.mubr.f32.gmra.mxu0 %v281
    %v985 = vpop.f32.mrf.mxu0
    %v986 = vadd.f32 0.0, %v985
    %v987 = vpop.f32.mrf.mxu0
    %988 = vdwg.mxu0
    %989 = vmatprep.subr.mxu0 0.0
    %990 = vmatpush1.msra.mxu0 0.0
    %991 = vmatprep.subr.mxu0 0.0
    %992 = vmatpush1.msra.mxu0 0.0
    %993 = vmatprep.subr.mxu0 0.0
    %994 = vmatpush1.msra.mxu0 0.0
    %995 = vmatprep.subr.mxu0 0.0
    %996 = vmatpush1.msra.mxu0 0.0
    %997 = vmatprep.subr.mxu0 0.0
    %998 = vmatpush1.msra.mxu0 0.0
    %999 = vmatprep.subr.mxu0 0.0
    %1000 = vmatpush1.msra.mxu0 0.0
    %1001 = vmatprep.subr.mxu0 0.0
    %1002 = vmatpush1.msra.mxu0 0.0
    %1003 = vmatprep.subr.mxu0 0.0
    %1004 = vmatpush1.msra.mxu0 0.0
    %1005 = vmatprep.subr.mxu0 0.0
    %1006 = vmatpush1.msra.mxu0 0.0
    %1007 = vmatprep.subr.mxu0 0.0
    %1008 = vmatpush1.msra.mxu0 0.0
    %1009 = vmatprep.subr.mxu0 0.0
    %1010 = vmatpush1.msra.mxu0 0.0
    %1011 = vmatprep.subr.mxu0 0.0
    %1012 = vmatpush1.msra.mxu0 0.0
    %1013 = vmatprep.subr.mxu0 0.0
    %1014 = vmatpush1.msra.mxu0 0.0
    %1015 = vmatprep.subr.mxu0 0.0
    %1016 = vmatpush1.msra.mxu0 0.0
    %1017 = vmatprep.subr.mxu0 0.0
    %1018 = vmatpush1.msra.mxu0 0.0
    %1019 = vmatprep.subr.mxu0 0.0
    %1020 = vmatpush1.msra.mxu0 %v913
    %1021 = vmatprep.subr.mxu0 0.0
    %1022 = vmatpush2.msra.mxu0 0.0
    %1023 = vmatprep.subr.mxu0 0.0
    %1024 = vmatpush2.msra.mxu0 0.0
    %1025 = vmatprep.subr.mxu0 0.0
    %1026 = vmatpush2.msra.mxu0 0.0
    %1027 = vmatprep.subr.mxu0 0.0
    %1028 = vmatpush2.msra.mxu0 0.0
    %1029 = vmatprep.subr.mxu0 0.0
    %1030 = vmatpush2.msra.mxu0 0.0
    %1031 = vmatprep.subr.mxu0 0.0
    %1032 = vmatpush2.msra.mxu0 0.0
    %1033 = vmatprep.subr.mxu0 0.0
    %1034 = vmatpush2.msra.mxu0 0.0
    %1035 = vmatprep.subr.mxu0 0.0
    %1036 = vmatpush2.msra.mxu0 0.0
    %1037 = vmatprep.subr.mxu0 0.0
    %1038 = vmatpush2.msra.mxu0 0.0
    %1039 = vmatprep.subr.mxu0 0.0
    %1040 = vmatpush2.msra.mxu0 0.0
    %1041 = vmatprep.subr.mxu0 0.0
    %1042 = vmatpush2.msra.mxu0 0.0
    %1043 = vmatprep.subr.mxu0 0.0
    %1044 = vmatpush2.msra.mxu0 0.0
    %1045 = vmatprep.subr.mxu0 0.0
    %1046 = vmatpush2.msra.mxu0 0.0
    %1047 = vmatprep.subr.mxu0 0.0
    %1048 = vmatpush2.msra.mxu0 0.0
    %1049 = vmatprep.subr.mxu0 0.0
    %1050 = vmatpush2.msra.mxu0 0.0
    %1051 = vmatprep.subr.mxu0 0.0
    %1052 = vmatpush2.msra.mxu0 0.0
    %1053 = vmatprep.mubr.f32.mxu0 0.0
    %1054 = vmatmul.mubr.f32.gmra.mxu0 %v362
    %v1055 = vpop.f32.mrf.mxu0
    %v1056 = vadd.f32 0.0, %v1055
    %v1057 = vpop.f32.mrf.mxu0
    %1058 = vmatprep.mubr.f32.mxu0 0.0
    %1059 = vmatmul.mubr.f32.gmra.mxu0 %v365
    %v1060 = vpop.f32.mrf.mxu0
    %v1061 = vadd.f32 0.0, %v1060
    %v1062 = vpop.f32.mrf.mxu0
    %1063 = vdwg.mxu0
    %1064 = vmatprep.subr.mxu0 0.0
    %1065 = vmatpush1.msra.mxu0 0.0
    %1066 = vmatprep.subr.mxu0 0.0
    %1067 = vmatpush1.msra.mxu0 0.0
    %1068 = vmatprep.subr.mxu0 0.0
    %1069 = vmatpush1.msra.mxu0 0.0
    %1070 = vmatprep.subr.mxu0 0.0
    %1071 = vmatpush1.msra.mxu0 0.0
    %1072 = vmatprep.subr.mxu0 0.0
    %1073 = vmatpush1.msra.mxu0 0.0
    %1074 = vmatprep.subr.mxu0 0.0
    %1075 = vmatpush1.msra.mxu0 0.0
    %1076 = vmatprep.subr.mxu0 0.0
    %1077 = vmatpush1.msra.mxu0 0.0
    %1078 = vmatprep.subr.mxu0 0.0
    %1079 = vmatpush1.msra.mxu0 0.0
    %1080 = vmatprep.subr.mxu0 0.0
    %1081 = vmatpush1.msra.mxu0 0.0
    %1082 = vmatprep.subr.mxu0 0.0
    %1083 = vmatpush1.msra.mxu0 0.0
    %1084 = vmatprep.subr.mxu0 0.0
    %1085 = vmatpush1.msra.mxu0 0.0
    %1086 = vmatprep.subr.mxu0 0.0
    %1087 = vmatpush1.msra.mxu0 0.0
    %1088 = vmatprep.subr.mxu0 0.0
    %1089 = vmatpush1.msra.mxu0 0.0
    %1090 = vmatprep.subr.mxu0 0.0
    %1091 = vmatpush1.msra.mxu0 0.0
    %1092 = vmatprep.subr.mxu0 0.0
    %1093 = vmatpush1.msra.mxu0 0.0
    %1094 = vmatprep.subr.mxu0 0.0
    %1095 = vmatpush1.msra.mxu0 %v913
    %1096 = vmatprep.subr.mxu0 0.0
    %1097 = vmatpush2.msra.mxu0 0.0
    %1098 = vmatprep.subr.mxu0 0.0
    %1099 = vmatpush2.msra.mxu0 0.0
    %1100 = vmatprep.subr.mxu0 0.0
    %1101 = vmatpush2.msra.mxu0 0.0
    %1102 = vmatprep.subr.mxu0 0.0
    %1103 = vmatpush2.msra.mxu0 0.0
    %1104 = vmatprep.subr.mxu0 0.0
    %1105 = vmatpush2.msra.mxu0 0.0
    %1106 = vmatprep.subr.mxu0 0.0
    %1107 = vmatpush2.msra.mxu0 0.0
    %1108 = vmatprep.subr.mxu0 0.0
    %1109 = vmatpush2.msra.mxu0 0.0
    %1110 = vmatprep.subr.mxu0 0.0
    %1111 = vmatpush2.msra.mxu0 0.0
    %1112 = vmatprep.subr.mxu0 0.0
    %1113 = vmatpush2.msra.mxu0 0.0
    %1114 = vmatprep.subr.mxu0 0.0
    %1115 = vmatpush2.msra.mxu0 0.0
    %1116 = vmatprep.subr.mxu0 0.0
    %1117 = vmatpush2.msra.mxu0 0.0
    %1118 = vmatprep.subr.mxu0 0.0
    %1119 = vmatpush2.msra.mxu0 0.0
    %1120 = vmatprep.subr.mxu0 0.0
    %1121 = vmatpush2.msra.mxu0 0.0
    %1122 = vmatprep.subr.mxu0 0.0
    %1123 = vmatpush2.msra.mxu0 0.0
    %1124 = vmatprep.subr.mxu0 0.0
    %1125 = vmatpush2.msra.mxu0 0.0
    %1126 = vmatprep.subr.mxu0 0.0
    %1127 = vmatpush2.msra.mxu0 0.0
    %1128 = vmatprep.mubr.f32.mxu0 0.0
    %1129 = vmatmul.mubr.f32.gmra.mxu0 %v446
    %v1130 = vpop.f32.mrf.mxu0
    %v1131 = vadd.f32 0.0, %v1130
    %v1132 = vpop.f32.mrf.mxu0
    %1133 = vmatprep.mubr.f32.mxu0 0.0
    %1134 = vmatmul.mubr.f32.gmra.mxu0 %v449
    %v1135 = vpop.f32.mrf.mxu0
    %v1136 = vadd.f32 0.0, %v1135
    %v1137 = vpop.f32.mrf.mxu0
    %1138 = vdwg.mxu0
    %1139 = vmatprep.subr.mxu0 0.0
    %1140 = vmatpush1.msra.mxu0 0.0
    %1141 = vmatprep.subr.mxu0 0.0
    %1142 = vmatpush1.msra.mxu0 0.0
    %1143 = vmatprep.subr.mxu0 0.0
    %1144 = vmatpush1.msra.mxu0 0.0
    %1145 = vmatprep.subr.mxu0 0.0
    %1146 = vmatpush1.msra.mxu0 0.0
    %1147 = vmatprep.subr.mxu0 0.0
    %1148 = vmatpush1.msra.mxu0 0.0
    %1149 = vmatprep.subr.mxu0 0.0
    %1150 = vmatpush1.msra.mxu0 0.0
    %1151 = vmatprep.subr.mxu0 0.0
    %1152 = vmatpush1.msra.mxu0 0.0
    %1153 = vmatprep.subr.mxu0 0.0
    %1154 = vmatpush1.msra.mxu0 0.0
    %1155 = vmatprep.subr.mxu0 0.0
    %1156 = vmatpush1.msra.mxu0 0.0
    %1157 = vmatprep.subr.mxu0 0.0
    %1158 = vmatpush1.msra.mxu0 0.0
    %1159 = vmatprep.subr.mxu0 0.0
    %1160 = vmatpush1.msra.mxu0 0.0
    %1161 = vmatprep.subr.mxu0 0.0
    %1162 = vmatpush1.msra.mxu0 0.0
    %1163 = vmatprep.subr.mxu0 0.0
    %1164 = vmatpush1.msra.mxu0 0.0
    %1165 = vmatprep.subr.mxu0 0.0
    %1166 = vmatpush1.msra.mxu0 0.0
    %1167 = vmatprep.subr.mxu0 0.0
    %1168 = vmatpush1.msra.mxu0 0.0
    %1169 = vmatprep.subr.mxu0 0.0
    %1170 = vmatpush1.msra.mxu0 %v913
    %1171 = vmatprep.subr.mxu0 0.0
    %1172 = vmatpush2.msra.mxu0 0.0
    %1173 = vmatprep.subr.mxu0 0.0
    %1174 = vmatpush2.msra.mxu0 0.0
    %1175 = vmatprep.subr.mxu0 0.0
    %1176 = vmatpush2.msra.mxu0 0.0
    %1177 = vmatprep.subr.mxu0 0.0
    %1178 = vmatpush2.msra.mxu0 0.0
    %1179 = vmatprep.subr.mxu0 0.0
    %1180 = vmatpush2.msra.mxu0 0.0
    %1181 = vmatprep.subr.mxu0 0.0
    %1182 = vmatpush2.msra.mxu0 0.0
    %1183 = vmatprep.subr.mxu0 0.0
    %1184 = vmatpush2.msra.mxu0 0.0
    %1185 = vmatprep.subr.mxu0 0.0
    %1186 = vmatpush2.msra.mxu0 0.0
    %1187 = vmatprep.subr.mxu0 0.0
    %1188 = vmatpush2.msra.mxu0 0.0
    %1189 = vmatprep.subr.mxu0 0.0
    %1190 = vmatpush2.msra.mxu0 0.0
    %1191 = vmatprep.subr.mxu0 0.0
    %1192 = vmatpush2.msra.mxu0 0.0
    %1193 = vmatprep.subr.mxu0 0.0
    %1194 = vmatpush2.msra.mxu0 0.0
    %1195 = vmatprep.subr.mxu0 0.0
    %1196 = vmatpush2.msra.mxu0 0.0
    %1197 = vmatprep.subr.mxu0 0.0
    %1198 = vmatpush2.msra.mxu0 0.0
    %1199 = vmatprep.subr.mxu0 0.0
    %1200 = vmatpush2.msra.mxu0 0.0
    %1201 = vmatprep.subr.mxu0 0.0
    %1202 = vmatpush2.msra.mxu0 0.0
    %1203 = vmatprep.mubr.f32.mxu0 0.0
    %1204 = vmatmul.mubr.f32.gmra.mxu0 %v530
    %v1205 = vpop.f32.mrf.mxu0
    %v1206 = vadd.f32 0.0, %v1205
    %v1207 = vpop.f32.mrf.mxu0
    %1208 = vmatprep.mubr.f32.mxu0 0.0
    %1209 = vmatmul.mubr.f32.gmra.mxu0 %v533
    %v1210 = vpop.f32.mrf.mxu0
    %v1211 = vadd.f32 0.0, %v1210
    %v1212 = vpop.f32.mrf.mxu0
    %1213 = vdwg.mxu0
    %v1214 = vld [vmem:[%s6] sm:$0xff]
    %v1215 = vld [vmem:[%s6 + $0x8] sm:$0xff]
    %v1216 = vld [vmem:[%s6 + $0x10] sm:$0xff]
    %v1217 = vld [vmem:[%s6 + $0x18] sm:$0xff]
    %v1218 = vld [vmem:[#allocation10] sm:$0x1]
    %v1220 = vlaneseq
    %v1221 = vshrl.u32 %v1220, 7
    %v1222 = vsub.s32 0, %v1221
    %v1223 = vrot.slane %v1218, %v1222
    %vm1225 = vcmask 261120
    %v1227 = vsel %vm1225, %v265, 0
    %v1230 = vsel %vm1225, %v270, 0
    %1232 = vmatprep.subr.mxu0 0.0
    %1233 = vmatpush1.msra.mxu0 0.0
    %1234 = vmatprep.subr.mxu0 0.0
    %1235 = vmatpush1.msra.mxu0 0.0
    %1236 = vmatprep.subr.mxu0 0.0
    %1237 = vmatpush1.msra.mxu0 0.0
    %1238 = vmatprep.subr.mxu0 0.0
    %1239 = vmatpush1.msra.mxu0 0.0
    %1240 = vmatprep.subr.mxu0 0.0
    %1241 = vmatpush1.msra.mxu0 0.0
    %1242 = vmatprep.subr.mxu0 0.0
    %1243 = vmatpush1.msra.mxu0 0.0
    %1244 = vmatprep.subr.mxu0 0.0
    %1245 = vmatpush1.msra.mxu0 0.0
    %1246 = vmatprep.subr.mxu0 0.0
    %1247 = vmatpush1.msra.mxu0 0.0
    %1248 = vmatprep.subr.mxu0 0.0
    %1249 = vmatpush1.msra.mxu0 0.0
    %1250 = vmatprep.subr.mxu0 0.0
    %1251 = vmatpush1.msra.mxu0 0.0
    %1252 = vmatprep.subr.mxu0 0.0
    %1253 = vmatpush1.msra.mxu0 0.0
    %1254 = vmatprep.subr.mxu0 0.0
    %1255 = vmatpush1.msra.mxu0 0.0
    %1256 = vmatprep.subr.mxu0 0.0
    %1257 = vmatpush1.msra.mxu0 %v1217
    %1258 = vmatprep.subr.mxu0 0.0
    %1259 = vmatpush1.msra.mxu0 %v1216
    %1260 = vmatprep.subr.mxu0 0.0
    %1261 = vmatpush1.msra.mxu0 %v1215
    %1262 = vmatprep.subr.mxu0 0.0
    %1263 = vmatpush1.msra.mxu0 %v1214
    %1264 = vmatprep.subr.mxu0 0.0
    %1265 = vmatpush2.msra.mxu0 0.0
    %1266 = vmatprep.subr.mxu0 0.0
    %1267 = vmatpush2.msra.mxu0 0.0
    %1268 = vmatprep.subr.mxu0 0.0
    %1269 = vmatpush2.msra.mxu0 0.0
    %1270 = vmatprep.subr.mxu0 0.0
    %1271 = vmatpush2.msra.mxu0 0.0
    %1272 = vmatprep.subr.mxu0 0.0
    %1273 = vmatpush2.msra.mxu0 0.0
    %1274 = vmatprep.subr.mxu0 0.0
    %1275 = vmatpush2.msra.mxu0 0.0
    %1276 = vmatprep.subr.mxu0 0.0
    %1277 = vmatpush2.msra.mxu0 0.0
    %1278 = vmatprep.subr.mxu0 0.0
    %1279 = vmatpush2.msra.mxu0 0.0
    %1280 = vmatprep.subr.mxu0 0.0
    %1281 = vmatpush2.msra.mxu0 0.0
    %1282 = vmatprep.subr.mxu0 0.0
    %1283 = vmatpush2.msra.mxu0 0.0
    %1284 = vmatprep.subr.mxu0 0.0
    %1285 = vmatpush2.msra.mxu0 0.0
    %1286 = vmatprep.subr.mxu0 0.0
    %1287 = vmatpush2.msra.mxu0 0.0
    %1288 = vmatprep.subr.mxu0 0.0
    %1289 = vmatpush2.msra.mxu0 0.0
    %1290 = vmatprep.subr.mxu0 0.0
    %1291 = vmatpush2.msra.mxu0 0.0
    %1292 = vmatprep.subr.mxu0 0.0
    %1293 = vmatpush2.msra.mxu0 0.0
    %1294 = vmatprep.subr.mxu0 0.0
    %1295 = vmatpush2.msra.mxu0 0.0
    %1296 = vmatprep.mubr.f32.mxu0 0.0
    %1297 = vmatmul.mubr.f32.gmra.mxu0 %v1227
    %v1298 = vpop.f32.mrf.mxu0
    %v1299 = vadd.f32 %v1223, %v1298
    %v1300 = vpop.f32.mrf.mxu0
    %1301 = vmatprep.mubr.f32.mxu0 0.0
    %1302 = vmatmul.mubr.f32.gmra.mxu0 %v1230
    %v1303 = vpop.f32.mrf.mxu0
    %v1304 = vadd.f32 %v1223, %v1303
    %v1305 = vpop.f32.mrf.mxu0
    %1306 = vdwg.mxu0
    %v1307 = vld [vmem:[%s7] sm:$0xff]
    %v1308 = vld [vmem:[%s7 + $0x8] sm:$0xff]
    %v1309 = vld [vmem:[%s7 + $0x10] sm:$0xff]
    %v1310 = vld [vmem:[%s7 + $0x18] sm:$0xff]
    %1311 = vmatprep.subr.mxu0 0.0
    %1312 = vmatpush1.msra.mxu0 0.0
    %1313 = vmatprep.subr.mxu0 0.0
    %1314 = vmatpush1.msra.mxu0 0.0
    %1315 = vmatprep.subr.mxu0 0.0
    %1316 = vmatpush1.msra.mxu0 0.0
    %1317 = vmatprep.subr.mxu0 0.0
    %1318 = vmatpush1.msra.mxu0 0.0
    %1319 = vmatprep.subr.mxu0 0.0
    %1320 = vmatpush1.msra.mxu0 0.0
    %1321 = vmatprep.subr.mxu0 0.0
    %1322 = vmatpush1.msra.mxu0 0.0
    %1323 = vmatprep.subr.mxu0 0.0
    %1324 = vmatpush1.msra.mxu0 0.0
    %1325 = vmatprep.subr.mxu0 0.0
    %1326 = vmatpush1.msra.mxu0 0.0
    %1327 = vmatprep.subr.mxu0 0.0
    %1328 = vmatpush1.msra.mxu0 0.0
    %1329 = vmatprep.subr.mxu0 0.0
    %1330 = vmatpush1.msra.mxu0 0.0
    %1331 = vmatprep.subr.mxu0 0.0
    %1332 = vmatpush1.msra.mxu0 0.0
    %1333 = vmatprep.subr.mxu0 0.0
    %1334 = vmatpush1.msra.mxu0 0.0
    %1335 = vmatprep.subr.mxu0 0.0
    %1336 = vmatpush1.msra.mxu0 %v1310
    %1337 = vmatprep.subr.mxu0 0.0
    %1338 = vmatpush1.msra.mxu0 %v1309
    %1339 = vmatprep.subr.mxu0 0.0
    %1340 = vmatpush1.msra.mxu0 %v1308
    %1341 = vmatprep.subr.mxu0 0.0
    %1342 = vmatpush1.msra.mxu0 %v1307
    %1343 = vmatprep.subr.mxu0 0.0
    %1344 = vmatpush2.msra.mxu0 0.0
    %1345 = vmatprep.subr.mxu0 0.0
    %1346 = vmatpush2.msra.mxu0 0.0
    %1347 = vmatprep.subr.mxu0 0.0
    %1348 = vmatpush2.msra.mxu0 0.0
    %1349 = vmatprep.subr.mxu0 0.0
    %1350 = vmatpush2.msra.mxu0 0.0
    %1351 = vmatprep.subr.mxu0 0.0
    %1352 = vmatpush2.msra.mxu0 0.0
    %1353 = vmatprep.subr.mxu0 0.0
    %1354 = vmatpush2.msra.mxu0 0.0
    %1355 = vmatprep.subr.mxu0 0.0
    %1356 = vmatpush2.msra.mxu0 0.0
    %1357 = vmatprep.subr.mxu0 0.0
    %1358 = vmatpush2.msra.mxu0 0.0
    %1359 = vmatprep.subr.mxu0 0.0
    %1360 = vmatpush2.msra.mxu0 0.0
    %1361 = vmatprep.subr.mxu0 0.0
    %1362 = vmatpush2.msra.mxu0 0.0
    %1363 = vmatprep.subr.mxu0 0.0
    %1364 = vmatpush2.msra.mxu0 0.0
    %1365 = vmatprep.subr.mxu0 0.0
    %1366 = vmatpush2.msra.mxu0 0.0
    %1367 = vmatprep.subr.mxu0 0.0
    %1368 = vmatpush2.msra.mxu0 0.0
    %1369 = vmatprep.subr.mxu0 0.0
    %1370 = vmatpush2.msra.mxu0 0.0
    %1371 = vmatprep.subr.mxu0 0.0
    %1372 = vmatpush2.msra.mxu0 0.0
    %1373 = vmatprep.subr.mxu0 0.0
    %1374 = vmatpush2.msra.mxu0 0.0
    %1375 = vmatprep.mubr.f32.mxu0 0.0
    %1376 = vmatmul.mubr.f32.gmra.mxu0 %v1227
    %v1377 = vpop.f32.mrf.mxu0
    %v1378 = vadd.f32 0.0, %v1377
    %v1379 = vpop.f32.mrf.mxu0
    %1380 = vmatprep.mubr.f32.mxu0 0.0
    %1381 = vmatmul.mubr.f32.gmra.mxu0 %v1230
    %v1382 = vpop.f32.mrf.mxu0
    %v1383 = vadd.f32 0.0, %v1382
    %v1384 = vpop.f32.mrf.mxu0
    %1385 = vdwg.mxu0
    %v1386 = vld [vmem:[%s2] sm:$0xff]
    %v1387 = vld [vmem:[%s2 + $0x8] sm:$0xf]
    %vm1388 = vcmask 97280
    %v1390 = vsel %vm1388, %v1386, 0
    %v1393 = vsel %vm1388, %v1387, 0
    %vm1395 = vcmask 1043456
    %v1397 = vsel %vm1395, %v1383, 0
    %1399 = vmatprep.subr.mxu0 0.0
    %1400 = vmatpush1.msra.mxu0 0.0
    %1401 = vmatprep.subr.mxu0 0.0
    %1402 = vmatpush1.msra.mxu0 0.0
    %1403 = vmatprep.subr.mxu0 0.0
    %1404 = vmatpush1.msra.mxu0 0.0
    %1405 = vmatprep.subr.mxu0 0.0
    %1406 = vmatpush1.msra.mxu0 0.0
    %1407 = vmatprep.subr.mxu0 0.0
    %1408 = vmatpush1.msra.mxu0 0.0
    %1409 = vmatprep.subr.mxu0 0.0
    %1410 = vmatpush1.msra.mxu0 0.0
    %1411 = vmatprep.subr.mxu0 0.0
    %1412 = vmatpush1.msra.mxu0 0.0
    %1413 = vmatprep.subr.mxu0 0.0
    %1414 = vmatpush1.msra.mxu0 0.0
    %1415 = vmatprep.subr.mxu0 0.0
    %1416 = vmatpush1.msra.mxu0 0.0
    %1417 = vmatprep.subr.mxu0 0.0
    %1418 = vmatpush1.msra.mxu0 0.0
    %1419 = vmatprep.subr.mxu0 0.0
    %1420 = vmatpush1.msra.mxu0 0.0
    %1421 = vmatprep.subr.mxu0 0.0
    %1422 = vmatpush1.msra.mxu0 0.0
    %1423 = vmatprep.subr.mxu0 0.0
    %1424 = vmatpush1.msra.mxu0 0.0
    %1425 = vmatprep.subr.mxu0 0.0
    %1426 = vmatpush1.msra.mxu0 0.0
    %1427 = vmatprep.subr.mxu0 0.0
    %1428 = vmatpush1.msra.mxu0 %v1397
    %1429 = vmatprep.subr.mxu0 0.0
    %1430 = vmatpush1.msra.mxu0 %v1378
    %1431 = vmatprep.subr.mxu0 0.0
    %1432 = vmatpush2.msra.mxu0 0.0
    %1433 = vmatprep.subr.mxu0 0.0
    %1434 = vmatpush2.msra.mxu0 0.0
    %1435 = vmatprep.subr.mxu0 0.0
    %1436 = vmatpush2.msra.mxu0 0.0
    %1437 = vmatprep.subr.mxu0 0.0
    %1438 = vmatpush2.msra.mxu0 0.0
    %1439 = vmatprep.subr.mxu0 0.0
    %1440 = vmatpush2.msra.mxu0 0.0
    %1441 = vmatprep.subr.mxu0 0.0
    %1442 = vmatpush2.msra.mxu0 0.0
    %1443 = vmatprep.subr.mxu0 0.0
    %1444 = vmatpush2.msra.mxu0 0.0
    %1445 = vmatprep.subr.mxu0 0.0
    %1446 = vmatpush2.msra.mxu0 0.0
    %1447 = vmatprep.subr.mxu0 0.0
    %1448 = vmatpush2.msra.mxu0 0.0
    %1449 = vmatprep.subr.mxu0 0.0
    %1450 = vmatpush2.msra.mxu0 0.0
    %1451 = vmatprep.subr.mxu0 0.0
    %1452 = vmatpush2.msra.mxu0 0.0
    %1453 = vmatprep.subr.mxu0 0.0
    %1454 = vmatpush2.msra.mxu0 0.0
    %1455 = vmatprep.subr.mxu0 0.0
    %1456 = vmatpush2.msra.mxu0 0.0
    %1457 = vmatprep.subr.mxu0 0.0
    %1458 = vmatpush2.msra.mxu0 0.0
    %1459 = vmatprep.subr.mxu0 0.0
    %1460 = vmatpush2.msra.mxu0 0.0
    %1461 = vmatprep.subr.mxu0 0.0
    %1462 = vmatpush2.msra.mxu0 0.0
    %1463 = vmatprep.mubr.f32.mxu0 0.0
    %1464 = vmatmul.mubr.f32.gmra.mxu0 %v1390
    %v1465 = vpop.f32.mrf.mxu0
    %v1466 = vadd.f32 0.0, %v1465
    %v1467 = vpop.f32.mrf.mxu0
    %1468 = vmatprep.mubr.f32.mxu0 0.0
    %1469 = vmatmul.mubr.f32.gmra.mxu0 %v1393
    %v1470 = vpop.f32.mrf.mxu0
    %v1471 = vadd.f32 0.0, %v1470
    %v1472 = vpop.f32.mrf.mxu0
    %1473 = vdwg.mxu0
    %v1474 = vadd.f32 %v1299, %v1466
    %v1475 = vadd.f32 %v1304, %v1471
    %v1476 = vadd.f32 %v1474, %v350
    %v1477 = vadd.f32 %v1475, %v355
    %s1478 = scalar_lea.vmem %s2, 16
    %v1479 = vld [vmem:[%s1478] sm:$0xff]
    %v1480 = vld [vmem:[%s1478 + $0x8] sm:$0xf]
    %v1482 = vsel %vm1388, %v1479, 0
    %v1485 = vsel %vm1388, %v1480, 0
    %1487 = vmatprep.subr.mxu0 0.0
    %1488 = vmatpush1.msra.mxu0 0.0
    %1489 = vmatprep.subr.mxu0 0.0
    %1490 = vmatpush1.msra.mxu0 0.0
    %1491 = vmatprep.subr.mxu0 0.0
    %1492 = vmatpush1.msra.mxu0 0.0
    %1493 = vmatprep.subr.mxu0 0.0
    %1494 = vmatpush1.msra.mxu0 0.0
    %1495 = vmatprep.subr.mxu0 0.0
    %1496 = vmatpush1.msra.mxu0 0.0
    %1497 = vmatprep.subr.mxu0 0.0
    %1498 = vmatpush1.msra.mxu0 0.0
    %1499 = vmatprep.subr.mxu0 0.0
    %1500 = vmatpush1.msra.mxu0 0.0
    %1501 = vmatprep.subr.mxu0 0.0
    %1502 = vmatpush1.msra.mxu0 0.0
    %1503 = vmatprep.subr.mxu0 0.0
    %1504 = vmatpush1.msra.mxu0 0.0
    %1505 = vmatprep.subr.mxu0 0.0
    %1506 = vmatpush1.msra.mxu0 0.0
    %1507 = vmatprep.subr.mxu0 0.0
    %1508 = vmatpush1.msra.mxu0 0.0
    %1509 = vmatprep.subr.mxu0 0.0
    %1510 = vmatpush1.msra.mxu0 0.0
    %1511 = vmatprep.subr.mxu0 0.0
    %1512 = vmatpush1.msra.mxu0 0.0
    %1513 = vmatprep.subr.mxu0 0.0
    %1514 = vmatpush1.msra.mxu0 0.0
    %1515 = vmatprep.subr.mxu0 0.0
    %1516 = vmatpush1.msra.mxu0 %v1397
    %1517 = vmatprep.subr.mxu0 0.0
    %1518 = vmatpush1.msra.mxu0 %v1378
    %1519 = vmatprep.subr.mxu0 0.0
    %1520 = vmatpush2.msra.mxu0 0.0
    %1521 = vmatprep.subr.mxu0 0.0
    %1522 = vmatpush2.msra.mxu0 0.0
    %1523 = vmatprep.subr.mxu0 0.0
    %1524 = vmatpush2.msra.mxu0 0.0
    %1525 = vmatprep.subr.mxu0 0.0
    %1526 = vmatpush2.msra.mxu0 0.0
    %1527 = vmatprep.subr.mxu0 0.0
    %1528 = vmatpush2.msra.mxu0 0.0
    %1529 = vmatprep.subr.mxu0 0.0
    %1530 = vmatpush2.msra.mxu0 0.0
    %1531 = vmatprep.subr.mxu0 0.0
    %1532 = vmatpush2.msra.mxu0 0.0
    %1533 = vmatprep.subr.mxu0 0.0
    %1534 = vmatpush2.msra.mxu0 0.0
    %1535 = vmatprep.subr.mxu0 0.0
    %1536 = vmatpush2.msra.mxu0 0.0
    %1537 = vmatprep.subr.mxu0 0.0
    %1538 = vmatpush2.msra.mxu0 0.0
    %1539 = vmatprep.subr.mxu0 0.0
    %1540 = vmatpush2.msra.mxu0 0.0
    %1541 = vmatprep.subr.mxu0 0.0
    %1542 = vmatpush2.msra.mxu0 0.0
    %1543 = vmatprep.subr.mxu0 0.0
    %1544 = vmatpush2.msra.mxu0 0.0
    %1545 = vmatprep.subr.mxu0 0.0
    %1546 = vmatpush2.msra.mxu0 0.0
    %1547 = vmatprep.subr.mxu0 0.0
    %1548 = vmatpush2.msra.mxu0 0.0
    %1549 = vmatprep.subr.mxu0 0.0
    %1550 = vmatpush2.msra.mxu0 0.0
    %1551 = vmatprep.mubr.f32.mxu0 0.0
    %1552 = vmatmul.mubr.f32.gmra.mxu0 %v1482
    %v1553 = vpop.f32.mrf.mxu0
    %v1554 = vadd.f32 0.0, %v1553
    %v1555 = vpop.f32.mrf.mxu0
    %1556 = vmatprep.mubr.f32.mxu0 0.0
    %1557 = vmatmul.mubr.f32.gmra.mxu0 %v1485
    %v1558 = vpop.f32.mrf.mxu0
    %v1559 = vadd.f32 0.0, %v1558
    %v1560 = vpop.f32.mrf.mxu0
    %1561 = vdwg.mxu0
    %v1562 = vadd.f32 %v1299, %v1554
    %v1563 = vadd.f32 %v1304, %v1559
    %v1564 = vadd.f32 %v1562, %v434
    %v1565 = vadd.f32 %v1563, %v439
    %s1566 = scalar_lea.vmem %s2, 32
    %v1567 = vld [vmem:[%s1566] sm:$0xff]
    %v1568 = vld [vmem:[%s1566 + $0x8] sm:$0xf]
    %v1570 = vsel %vm1388, %v1567, 0
    %v1573 = vsel %vm1388, %v1568, 0
    %1575 = vmatprep.subr.mxu0 0.0
    %1576 = vmatpush1.msra.mxu0 0.0
    %1577 = vmatprep.subr.mxu0 0.0
    %1578 = vmatpush1.msra.mxu0 0.0
    %1579 = vmatprep.subr.mxu0 0.0
    %1580 = vmatpush1.msra.mxu0 0.0
    %1581 = vmatprep.subr.mxu0 0.0
    %1582 = vmatpush1.msra.mxu0 0.0
    %1583 = vmatprep.subr.mxu0 0.0
    %1584 = vmatpush1.msra.mxu0 0.0
    %1585 = vmatprep.subr.mxu0 0.0
    %1586 = vmatpush1.msra.mxu0 0.0
    %1587 = vmatprep.subr.mxu0 0.0
    %1588 = vmatpush1.msra.mxu0 0.0
    %1589 = vmatprep.subr.mxu0 0.0
    %1590 = vmatpush1.msra.mxu0 0.0
    %1591 = vmatprep.subr.mxu0 0.0
    %1592 = vmatpush1.msra.mxu0 0.0
    %1593 = vmatprep.subr.mxu0 0.0
    %1594 = vmatpush1.msra.mxu0 0.0
    %1595 = vmatprep.subr.mxu0 0.0
    %1596 = vmatpush1.msra.mxu0 0.0
    %1597 = vmatprep.subr.mxu0 0.0
    %1598 = vmatpush1.msra.mxu0 0.0
    %1599 = vmatprep.subr.mxu0 0.0
    %1600 = vmatpush1.msra.mxu0 0.0
    %1601 = vmatprep.subr.mxu0 0.0
    %1602 = vmatpush1.msra.mxu0 0.0
    %1603 = vmatprep.subr.mxu0 0.0
    %1604 = vmatpush1.msra.mxu0 %v1397
    %1605 = vmatprep.subr.mxu0 0.0
    %1606 = vmatpush1.msra.mxu0 %v1378
    %1607 = vmatprep.subr.mxu0 0.0
    %1608 = vmatpush2.msra.mxu0 0.0
    %1609 = vmatprep.subr.mxu0 0.0
    %1610 = vmatpush2.msra.mxu0 0.0
    %1611 = vmatprep.subr.mxu0 0.0
    %1612 = vmatpush2.msra.mxu0 0.0
    %1613 = vmatprep.subr.mxu0 0.0
    %1614 = vmatpush2.msra.mxu0 0.0
    %1615 = vmatprep.subr.mxu0 0.0
    %1616 = vmatpush2.msra.mxu0 0.0
    %1617 = vmatprep.subr.mxu0 0.0
    %1618 = vmatpush2.msra.mxu0 0.0
    %1619 = vmatprep.subr.mxu0 0.0
    %1620 = vmatpush2.msra.mxu0 0.0
    %1621 = vmatprep.subr.mxu0 0.0
    %1622 = vmatpush2.msra.mxu0 0.0
    %1623 = vmatprep.subr.mxu0 0.0
    %1624 = vmatpush2.msra.mxu0 0.0
    %1625 = vmatprep.subr.mxu0 0.0
    %1626 = vmatpush2.msra.mxu0 0.0
    %1627 = vmatprep.subr.mxu0 0.0
    %1628 = vmatpush2.msra.mxu0 0.0
    %1629 = vmatprep.subr.mxu0 0.0
    %1630 = vmatpush2.msra.mxu0 0.0
    %1631 = vmatprep.subr.mxu0 0.0
    %1632 = vmatpush2.msra.mxu0 0.0
    %1633 = vmatprep.subr.mxu0 0.0
    %1634 = vmatpush2.msra.mxu0 0.0
    %1635 = vmatprep.subr.mxu0 0.0
    %1636 = vmatpush2.msra.mxu0 0.0
    %1637 = vmatprep.subr.mxu0 0.0
    %1638 = vmatpush2.msra.mxu0 0.0
    %1639 = vmatprep.mubr.f32.mxu0 0.0
    %1640 = vmatmul.mubr.f32.gmra.mxu0 %v1570
    %v1641 = vpop.f32.mrf.mxu0
    %v1642 = vadd.f32 0.0, %v1641
    %v1643 = vpop.f32.mrf.mxu0
    %1644 = vmatprep.mubr.f32.mxu0 0.0
    %1645 = vmatmul.mubr.f32.gmra.mxu0 %v1573
    %v1646 = vpop.f32.mrf.mxu0
    %v1647 = vadd.f32 0.0, %v1646
    %v1648 = vpop.f32.mrf.mxu0
    %1649 = vdwg.mxu0
    %v1650 = vadd.f32 %v1299, %v1642
    %v1651 = vadd.f32 %v1304, %v1647
    %v1652 = vadd.f32 %v1650, %v518
    %v1653 = vadd.f32 %v1651, %v523
    %s1654 = scalar_lea.vmem %s2, 48
    %v1655 = vld [vmem:[%s1654] sm:$0xff]
    %v1656 = vld [vmem:[%s1654 + $0x8] sm:$0xf]
    %v1658 = vsel %vm1388, %v1655, 0
    %v1661 = vsel %vm1388, %v1656, 0
    %1663 = vmatprep.subr.mxu0 0.0
    %1664 = vmatpush1.msra.mxu0 0.0
    %1665 = vmatprep.subr.mxu0 0.0
    %1666 = vmatpush1.msra.mxu0 0.0
    %1667 = vmatprep.subr.mxu0 0.0
    %1668 = vmatpush1.msra.mxu0 0.0
    %1669 = vmatprep.subr.mxu0 0.0
    %1670 = vmatpush1.msra.mxu0 0.0
    %1671 = vmatprep.subr.mxu0 0.0
    %1672 = vmatpush1.msra.mxu0 0.0
    %1673 = vmatprep.subr.mxu0 0.0
    %1674 = vmatpush1.msra.mxu0 0.0
    %1675 = vmatprep.subr.mxu0 0.0
    %1676 = vmatpush1.msra.mxu0 0.0
    %1677 = vmatprep.subr.mxu0 0.0
    %1678 = vmatpush1.msra.mxu0 0.0
    %1679 = vmatprep.subr.mxu0 0.0
    %1680 = vmatpush1.msra.mxu0 0.0
    %1681 = vmatprep.subr.mxu0 0.0
    %1682 = vmatpush1.msra.mxu0 0.0
    %1683 = vmatprep.subr.mxu0 0.0
    %1684 = vmatpush1.msra.mxu0 0.0
    %1685 = vmatprep.subr.mxu0 0.0
    %1686 = vmatpush1.msra.mxu0 0.0
    %1687 = vmatprep.subr.mxu0 0.0
    %1688 = vmatpush1.msra.mxu0 0.0
    %1689 = vmatprep.subr.mxu0 0.0
    %1690 = vmatpush1.msra.mxu0 0.0
    %1691 = vmatprep.subr.mxu0 0.0
    %1692 = vmatpush1.msra.mxu0 %v1397
    %1693 = vmatprep.subr.mxu0 0.0
    %1694 = vmatpush1.msra.mxu0 %v1378
    %1695 = vmatprep.subr.mxu0 0.0
    %1696 = vmatpush2.msra.mxu0 0.0
    %1697 = vmatprep.subr.mxu0 0.0
    %1698 = vmatpush2.msra.mxu0 0.0
    %1699 = vmatprep.subr.mxu0 0.0
    %1700 = vmatpush2.msra.mxu0 0.0
    %1701 = vmatprep.subr.mxu0 0.0
    %1702 = vmatpush2.msra.mxu0 0.0
    %1703 = vmatprep.subr.mxu0 0.0
    %1704 = vmatpush2.msra.mxu0 0.0
    %1705 = vmatprep.subr.mxu0 0.0
    %1706 = vmatpush2.msra.mxu0 0.0
    %1707 = vmatprep.subr.mxu0 0.0
    %1708 = vmatpush2.msra.mxu0 0.0
    %1709 = vmatprep.subr.mxu0 0.0
    %1710 = vmatpush2.msra.mxu0 0.0
    %1711 = vmatprep.subr.mxu0 0.0
    %1712 = vmatpush2.msra.mxu0 0.0
    %1713 = vmatprep.subr.mxu0 0.0
    %1714 = vmatpush2.msra.mxu0 0.0
    %1715 = vmatprep.subr.mxu0 0.0
    %1716 = vmatpush2.msra.mxu0 0.0
    %1717 = vmatprep.subr.mxu0 0.0
    %1718 = vmatpush2.msra.mxu0 0.0
    %1719 = vmatprep.subr.mxu0 0.0
    %1720 = vmatpush2.msra.mxu0 0.0
    %1721 = vmatprep.subr.mxu0 0.0
    %1722 = vmatpush2.msra.mxu0 0.0
    %1723 = vmatprep.subr.mxu0 0.0
    %1724 = vmatpush2.msra.mxu0 0.0
    %1725 = vmatprep.subr.mxu0 0.0
    %1726 = vmatpush2.msra.mxu0 0.0
    %1727 = vmatprep.mubr.f32.mxu0 0.0
    %1728 = vmatmul.mubr.f32.gmra.mxu0 %v1658
    %v1729 = vpop.f32.mrf.mxu0
    %v1730 = vadd.f32 0.0, %v1729
    %v1731 = vpop.f32.mrf.mxu0
    %1732 = vmatprep.mubr.f32.mxu0 0.0
    %1733 = vmatmul.mubr.f32.gmra.mxu0 %v1661
    %v1734 = vpop.f32.mrf.mxu0
    %v1735 = vadd.f32 0.0, %v1734
    %v1736 = vpop.f32.mrf.mxu0
    %1737 = vdwg.mxu0
    %v1738 = vadd.f32 %v1299, %v1730
    %v1739 = vadd.f32 %v1304, %v1735
    %v1740 = vadd.f32 %v1738, %v602
    %v1741 = vadd.f32 %v1739, %v607
    %vm1742 = vcmask 523264
    %v1743 = vsel %vm1742, %v1476, 0.0
    %vm1744 = vcmask 519168
    %v1745 = vsel %vm1744, %v1477, 0.0
    %v1746 = vadd.f32 %v1743, %v1745
    %v1747 = vrot.slane %v1746, 4
    %v1748 = vadd.f32 %v1746, %v1747
    %v1749 = vrot.slane %v1748, 2
    %v1750 = vadd.f32 %v1748, %v1749
    %v1751 = vrot.slane %v1750, 1
    %v1752 = vadd.f32 %v1750, %v1751
    %v1753 = vadd.f32 %v1752, 0.0
    %v1754 = vsel %vm1742, %v1564, 0.0
    %v1755 = vsel %vm1744, %v1565, 0.0
    %v1756 = vadd.f32 %v1754, %v1755
    %v1757 = vrot.slane %v1756, 4
    %v1758 = vadd.f32 %v1756, %v1757
    %v1759 = vrot.slane %v1758, 2
    %v1760 = vadd.f32 %v1758, %v1759
    %v1761 = vrot.slane %v1760, 1
    %v1762 = vadd.f32 %v1760, %v1761
    %v1763 = vadd.f32 %v1753, %v1762
    %v1764 = vsel %vm1742, %v1652, 0.0
    %v1765 = vsel %vm1744, %v1653, 0.0
    %v1766 = vadd.f32 %v1764, %v1765
    %v1767 = vrot.slane %v1766, 4
    %v1768 = vadd.f32 %v1766, %v1767
    %v1769 = vrot.slane %v1768, 2
    %v1770 = vadd.f32 %v1768, %v1769
    %v1771 = vrot.slane %v1770, 1
    %v1772 = vadd.f32 %v1770, %v1771
    %v1773 = vadd.f32 %v1763, %v1772
    %v1774 = vsel %vm1742, %v1740, 0.0
    %v1775 = vsel %vm1744, %v1741, 0.0
    %v1776 = vadd.f32 %v1774, %v1775
    %v1777 = vrot.slane %v1776, 4
    %v1778 = vadd.f32 %v1776, %v1777
    %v1779 = vrot.slane %v1778, 2
    %v1780 = vadd.f32 %v1778, %v1779
    %v1781 = vrot.slane %v1780, 1
    %v1782 = vadd.f32 %v1780, %v1781
    %v1783 = vadd.f32 %v1773, %v1782
    %v1784 = vmul.f32 %v1783, 0.020833334
    %v1785 = vsub.f32 %v1476, %v1784
    %v1786 = vsub.f32 %v1477, %v1784
    %v1787 = vmul.f32 %v1785, %v1785
    %v1788 = vmul.f32 %v1786, %v1786
    %v1789 = vsel %vm1742, %v1787, 0.0
    %v1790 = vsel %vm1744, %v1788, 0.0
    %v1791 = vadd.f32 %v1789, %v1790
    %v1792 = vrot.slane %v1791, 4
    %v1793 = vadd.f32 %v1791, %v1792
    %v1794 = vrot.slane %v1793, 2
    %v1795 = vadd.f32 %v1793, %v1794
    %v1796 = vrot.slane %v1795, 1
    %v1797 = vadd.f32 %v1795, %v1796
    %v1798 = vadd.f32 %v1797, 0.0
    %v1799 = vsub.f32 %v1564, %v1784
    %v1800 = vsub.f32 %v1565, %v1784
    %v1801 = vmul.f32 %v1799, %v1799
    %v1802 = vmul.f32 %v1800, %v1800
    %v1803 = vsel %vm1742, %v1801, 0.0
    %v1804 = vsel %vm1744, %v1802, 0.0
    %v1805 = vadd.f32 %v1803, %v1804
    %v1806 = vrot.slane %v1805, 4
    %v1807 = vadd.f32 %v1805, %v1806
    %v1808 = vrot.slane %v1807, 2
    %v1809 = vadd.f32 %v1807, %v1808
    %v1810 = vrot.slane %v1809, 1
    %v1811 = vadd.f32 %v1809, %v1810
    %v1812 = vadd.f32 %v1798, %v1811
    %v1813 = vsub.f32 %v1652, %v1784
    %v1814 = vsub.f32 %v1653, %v1784
    %v1815 = vmul.f32 %v1813, %v1813
    %v1816 = vmul.f32 %v1814, %v1814
    %v1817 = vsel %vm1742, %v1815, 0.0
    %v1818 = vsel %vm1744, %v1816, 0.0
    %v1819 = vadd.f32 %v1817, %v1818
    %v1820 = vrot.slane %v1819, 4
    %v1821 = vadd.f32 %v1819, %v1820
    %v1822 = vrot.slane %v1821, 2
    %v1823 = vadd.f32 %v1821, %v1822
    %v1824 = vrot.slane %v1823, 1
    %v1825 = vadd.f32 %v1823, %v1824
    %v1826 = vadd.f32 %v1812, %v1825
    %v1827 = vsub.f32 %v1740, %v1784
    %v1828 = vsub.f32 %v1741, %v1784
    %v1829 = vmul.f32 %v1827, %v1827
    %v1830 = vmul.f32 %v1828, %v1828
    %v1831 = vsel %vm1742, %v1829, 0.0
    %v1832 = vsel %vm1744, %v1830, 0.0
    %v1833 = vadd.f32 %v1831, %v1832
    %v1834 = vrot.slane %v1833, 4
    %v1835 = vadd.f32 %v1833, %v1834
    %v1836 = vrot.slane %v1835, 2
    %v1837 = vadd.f32 %v1835, %v1836
    %v1838 = vrot.slane %v1837, 1
    %v1839 = vadd.f32 %v1837, %v1838
    %v1840 = vadd.f32 %v1826, %v1839
    %v1841 = vmul.f32 %v1840, 0.020833334
    %v1842 = vld [vmem:[#allocation11] sm:$0x1]
    %v1843 = vadd.f32 %v1841, 1e-05
    %v1844 = vrsqrt.pop %v1843
    %v1845 = vmul.f32 %v1842, %v1844
    %v1846 = vld [vmem:[#allocation13] sm:$0x1]
    %v1847 = vmul.f32 %v1784, %v1845
    %v1848 = vsub.f32 %v1846, %v1847
    %v1850 = vlaneseq
    %v1851 = vshrl.u32 %v1850, 7
    %v1852 = vsub.s32 0, %v1851
    %v1853 = vrot.slane %v1845, %v1852
    %v1855 = vmul.f32 %v1476, %v1853
    %v1856 = vmul.f32 %v1477, %v1853
    %v1858 = vlaneseq
    %v1859 = vshrl.u32 %v1858, 7
    %v1860 = vsub.s32 0, %v1859
    %v1861 = vrot.slane %v1848, %v1860
    %v1863 = vadd.f32 %v1855, %v1861
    %v1864 = vadd.f32 %v1856, %v1861
    %v1865 = vand.u32 2147483647, %v1863
    %v1866 = vand.u32 2147483647, %v1864
    %v1867 = vsub.f32 0.0, %v1865
    %v1868 = vsub.f32 0.0, %v1866
    %v1869 = vmul.f32 %v1867, 1.442695
    %v1870 = vpow.pop %v1869
    %v1871 = vmul.f32 %v1868, 1.442695
    %v1872 = vpow.pop %v1871
    %v1873 = vadd.f32 %v1870, 1.0
    %v1874 = vadd.f32 %v1872, 1.0
    %v1875 = vrcp.pop %v1873
    %v1876 = vmul.f32 1.0, %v1875
    %v1877 = vrcp.pop %v1874
    %v1878 = vmul.f32 1.0, %v1877
    %vm1879 = vcmp.ge.f32.partialorder %v1863, 0.0
    %vm1880 = vcmp.ge.f32.partialorder %v1864, 0.0
    %v1881 = vmul.f32 %v1870, %v1876
    %v1882 = vmul.f32 %v1872, %v1878
    %v1883 = vsel %vm1879, %v1876, %v1881
    %v1884 = vsel %vm1880, %v1878, %v1882
    %vm1885 = vcmp.gt.f32.partialorder %v1863, 20.0
    %vm1886 = vcmp.gt.f32.partialorder %v1864, 20.0
    %v1887 = vmin.f32 %v1863, 20.0
    %v1888 = vmin.f32 %v1864, 20.0
    %v1889 = vmul.f32 %v1887, 1.442695
    %v1890 = vpow.pop %v1889
    %v1891 = vmul.f32 %v1888, 1.442695
    %v1892 = vpow.pop %v1891
    %v1893 = vadd.f32 %v1890, 1.0
    %v1894 = vlog2.pop %v1893
    %v1895 = vmul.f32 %v1894, 0.6931472
    %v1896 = vmul.f32 -0.5, %v1890
    %v1897 = vadd.f32 %v1896, 1.0
    %v1898 = vmul.f32 %v1897, %v1890
    %v1899 = vand.u32 2147483647, %v1890
    %vm1900 = vcmp.lt.f32.partialorder %v1899, 0.0004427343
    %v1901 = vsel %vm1900, %v1898, %v1895
    %v1902 = vadd.f32 %v1892, 1.0
    %v1903 = vlog2.pop %v1902
    %v1904 = vmul.f32 %v1903, 0.6931472
    %v1905 = vmul.f32 -0.5, %v1892
    %v1906 = vadd.f32 %v1905, 1.0
    %v1907 = vmul.f32 %v1906, %v1892
    %v1908 = vand.u32 2147483647, %v1892
    %vm1909 = vcmp.lt.f32.partialorder %v1908, 0.0004427343
    %v1910 = vsel %vm1909, %v1907, %v1904
    %v1911 = vsel %vm1885, %v1863, %v1901
    %v1912 = vsel %vm1886, %v1864, %v1910
    %1915 = vrot.lane.b32.xlu0 %v1911, 96
    %v1916 = vpop.permute.xlu0 %1915
    %1917 = vrot.lane.b32.xlu0 %v1912, 96
    %v1918 = vpop.permute.xlu0 %1917
    %v1921 = vmul.f32 %v1883, %v1916
    %v1922 = vmul.f32 %v1884, %v1918
    %v1923 = vadd.f32 %v1921, 0.0
    %v1924 = vadd.f32 %v1922, 0.0
    %v1925 = vmul.f32 %v1564, %v1853
    %v1926 = vmul.f32 %v1565, %v1853
    %v1927 = vadd.f32 %v1925, %v1861
    %v1928 = vadd.f32 %v1926, %v1861
    %v1929 = vand.u32 2147483647, %v1927
    %v1930 = vand.u32 2147483647, %v1928
    %v1931 = vsub.f32 0.0, %v1929
    %v1932 = vsub.f32 0.0, %v1930
    %v1933 = vmul.f32 %v1931, 1.442695
    %v1934 = vpow.pop %v1933
    %v1935 = vmul.f32 %v1932, 1.442695
    %v1936 = vpow.pop %v1935
    %v1937 = vadd.f32 %v1934, 1.0
    %v1938 = vadd.f32 %v1936, 1.0
    %v1939 = vrcp.pop %v1937
    %v1940 = vmul.f32 1.0, %v1939
    %v1941 = vrcp.pop %v1938
    %v1942 = vmul.f32 1.0, %v1941
    %vm1943 = vcmp.ge.f32.partialorder %v1927, 0.0
    %vm1944 = vcmp.ge.f32.partialorder %v1928, 0.0
    %v1945 = vmul.f32 %v1934, %v1940
    %v1946 = vmul.f32 %v1936, %v1942
    %v1947 = vsel %vm1943, %v1940, %v1945
    %v1948 = vsel %vm1944, %v1942, %v1946
    %vm1949 = vcmp.gt.f32.partialorder %v1927, 20.0
    %vm1950 = vcmp.gt.f32.partialorder %v1928, 20.0
    %v1951 = vmin.f32 %v1927, 20.0
    %v1952 = vmin.f32 %v1928, 20.0
    %v1953 = vmul.f32 %v1951, 1.442695
    %v1954 = vpow.pop %v1953
    %v1955 = vmul.f32 %v1952, 1.442695
    %v1956 = vpow.pop %v1955
    %v1957 = vadd.f32 %v1954, 1.0
    %v1958 = vlog2.pop %v1957
    %v1959 = vmul.f32 %v1958, 0.6931472
    %v1960 = vmul.f32 -0.5, %v1954
    %v1961 = vadd.f32 %v1960, 1.0
    %v1962 = vmul.f32 %v1961, %v1954
    %v1963 = vand.u32 2147483647, %v1954
    %vm1964 = vcmp.lt.f32.partialorder %v1963, 0.0004427343
    %v1965 = vsel %vm1964, %v1962, %v1959
    %v1966 = vadd.f32 %v1956, 1.0
    %v1967 = vlog2.pop %v1966
    %v1968 = vmul.f32 %v1967, 0.6931472
    %v1969 = vmul.f32 -0.5, %v1956
    %v1970 = vadd.f32 %v1969, 1.0
    %v1971 = vmul.f32 %v1970, %v1956
    %v1972 = vand.u32 2147483647, %v1956
    %vm1973 = vcmp.lt.f32.partialorder %v1972, 0.0004427343
    %v1974 = vsel %vm1973, %v1971, %v1968
    %v1975 = vsel %vm1949, %v1927, %v1965
    %v1976 = vsel %vm1950, %v1928, %v1974
    %1979 = vrot.lane.b32.xlu0 %v1975, 96
    %v1980 = vpop.permute.xlu0 %1979
    %1981 = vrot.lane.b32.xlu0 %v1976, 96
    %v1982 = vpop.permute.xlu0 %1981
    %v1985 = vmul.f32 %v1947, %v1980
    %v1986 = vmul.f32 %v1948, %v1982
    %v1987 = vadd.f32 %v1923, %v1985
    %v1988 = vadd.f32 %v1924, %v1986
    %v1989 = vmul.f32 %v1652, %v1853
    %v1990 = vmul.f32 %v1653, %v1853
    %v1991 = vadd.f32 %v1989, %v1861
    %v1992 = vadd.f32 %v1990, %v1861
    %v1993 = vand.u32 2147483647, %v1991
    %v1994 = vand.u32 2147483647, %v1992
    %v1995 = vsub.f32 0.0, %v1993
    %v1996 = vsub.f32 0.0, %v1994
    %v1997 = vmul.f32 %v1995, 1.442695
    %v1998 = vpow.pop %v1997
    %v1999 = vmul.f32 %v1996, 1.442695
    %v2000 = vpow.pop %v1999
    %v2001 = vadd.f32 %v1998, 1.0
    %v2002 = vadd.f32 %v2000, 1.0
    %v2003 = vrcp.pop %v2001
    %v2004 = vmul.f32 1.0, %v2003
    %v2005 = vrcp.pop %v2002
    %v2006 = vmul.f32 1.0, %v2005
    %vm2007 = vcmp.ge.f32.partialorder %v1991, 0.0
    %vm2008 = vcmp.ge.f32.partialorder %v1992, 0.0
    %v2009 = vmul.f32 %v1998, %v2004
    %v2010 = vmul.f32 %v2000, %v2006
    %v2011 = vsel %vm2007, %v2004, %v2009
    %v2012 = vsel %vm2008, %v2006, %v2010
    %vm2013 = vcmp.gt.f32.partialorder %v1991, 20.0
    %vm2014 = vcmp.gt.f32.partialorder %v1992, 20.0
    %v2015 = vmin.f32 %v1991, 20.0
    %v2016 = vmin.f32 %v1992, 20.0
    %v2017 = vmul.f32 %v2015, 1.442695
    %v2018 = vpow.pop %v2017
    %v2019 = vmul.f32 %v2016, 1.442695
    %v2020 = vpow.pop %v2019
    %v2021 = vadd.f32 %v2018, 1.0
    %v2022 = vlog2.pop %v2021
    %v2023 = vmul.f32 %v2022, 0.6931472
    %v2024 = vmul.f32 -0.5, %v2018
    %v2025 = vadd.f32 %v2024, 1.0
    %v2026 = vmul.f32 %v2025, %v2018
    %v2027 = vand.u32 2147483647, %v2018
    %vm2028 = vcmp.lt.f32.partialorder %v2027, 0.0004427343
    %v2029 = vsel %vm2028, %v2026, %v2023
    %v2030 = vadd.f32 %v2020, 1.0
    %v2031 = vlog2.pop %v2030
    %v2032 = vmul.f32 %v2031, 0.6931472
    %v2033 = vmul.f32 -0.5, %v2020
    %v2034 = vadd.f32 %v2033, 1.0
    %v2035 = vmul.f32 %v2034, %v2020
    %v2036 = vand.u32 2147483647, %v2020
    %vm2037 = vcmp.lt.f32.partialorder %v2036, 0.0004427343
    %v2038 = vsel %vm2037, %v2035, %v2032
    %v2039 = vsel %vm2013, %v1991, %v2029
    %v2040 = vsel %vm2014, %v1992, %v2038
    %2043 = vrot.lane.b32.xlu0 %v2039, 96
    %v2044 = vpop.permute.xlu0 %2043
    %2045 = vrot.lane.b32.xlu0 %v2040, 96
    %v2046 = vpop.permute.xlu0 %2045
    %v2049 = vmul.f32 %v2011, %v2044
    %v2050 = vmul.f32 %v2012, %v2046
    %v2051 = vadd.f32 %v1987, %v2049
    %v2052 = vadd.f32 %v1988, %v2050
    %v2053 = vmul.f32 %v1740, %v1853
    %v2054 = vmul.f32 %v1741, %v1853
    %v2055 = vadd.f32 %v2053, %v1861
    %v2056 = vadd.f32 %v2054, %v1861
    %v2057 = vand.u32 2147483647, %v2055
    %v2058 = vand.u32 2147483647, %v2056
    %v2059 = vsub.f32 0.0, %v2057
    %v2060 = vsub.f32 0.0, %v2058
    %v2061 = vmul.f32 %v2059, 1.442695
    %v2062 = vpow.pop %v2061
    %v2063 = vmul.f32 %v2060, 1.442695
    %v2064 = vpow.pop %v2063
    %v2065 = vadd.f32 %v2062, 1.0
    %v2066 = vadd.f32 %v2064, 1.0
    %v2067 = vrcp.pop %v2065
    %v2068 = vmul.f32 1.0, %v2067
    %v2069 = vrcp.pop %v2066
    %v2070 = vmul.f32 1.0, %v2069
    %vm2071 = vcmp.ge.f32.partialorder %v2055, 0.0
    %vm2072 = vcmp.ge.f32.partialorder %v2056, 0.0
    %v2073 = vmul.f32 %v2062, %v2068
    %v2074 = vmul.f32 %v2064, %v2070
    %v2075 = vsel %vm2071, %v2068, %v2073
    %v2076 = vsel %vm2072, %v2070, %v2074
    %vm2077 = vcmp.gt.f32.partialorder %v2055, 20.0
    %vm2078 = vcmp.gt.f32.partialorder %v2056, 20.0
    %v2079 = vmin.f32 %v2055, 20.0
    %v2080 = vmin.f32 %v2056, 20.0
    %v2081 = vmul.f32 %v2079, 1.442695
    %v2082 = vpow.pop %v2081
    %v2083 = vmul.f32 %v2080, 1.442695
    %v2084 = vpow.pop %v2083
    %v2085 = vadd.f32 %v2082, 1.0
    %v2086 = vlog2.pop %v2085
    %v2087 = vmul.f32 %v2086, 0.6931472
    %v2088 = vmul.f32 -0.5, %v2082
    %v2089 = vadd.f32 %v2088, 1.0
    %v2090 = vmul.f32 %v2089, %v2082
    %v2091 = vand.u32 2147483647, %v2082
    %vm2092 = vcmp.lt.f32.partialorder %v2091, 0.0004427343
    %v2093 = vsel %vm2092, %v2090, %v2087
    %v2094 = vadd.f32 %v2084, 1.0
    %v2095 = vlog2.pop %v2094
    %v2096 = vmul.f32 %v2095, 0.6931472
    %v2097 = vmul.f32 -0.5, %v2084
    %v2098 = vadd.f32 %v2097, 1.0
    %v2099 = vmul.f32 %v2098, %v2084
    %v2100 = vand.u32 2147483647, %v2084
    %vm2101 = vcmp.lt.f32.partialorder %v2100, 0.0004427343
    %v2102 = vsel %vm2101, %v2099, %v2096
    %v2103 = vsel %vm2077, %v2055, %v2093
    %v2104 = vsel %vm2078, %v2056, %v2102
    %2107 = vrot.lane.b32.xlu0 %v2103, 96
    %v2108 = vpop.permute.xlu0 %2107
    %2109 = vrot.lane.b32.xlu0 %v2104, 96
    %v2110 = vpop.permute.xlu0 %2109
    %v2113 = vmul.f32 %v2075, %v2108
    %v2114 = vmul.f32 %v2076, %v2110
    %v2115 = vadd.f32 %v2051, %v2113
    %v2116 = vadd.f32 %v2052, %v2114
    %v2117 = vsel %vm1225, %v2115, 0.0
    %vm2118 = vcmask 257024
    %v2119 = vsel %vm2118, %v2116, 0.0
    %v2120 = vadd.f32 %v2117, %v2119
    %v2121 = vrot.slane %v2120, 4
    %v2122 = vadd.f32 %v2120, %v2121
    %v2123 = vrot.slane %v2122, 2
    %v2124 = vadd.f32 %v2122, %v2123
    %v2125 = vrot.slane %v2124, 1
    %v2126 = vadd.f32 %v2124, %v2125
    %v2127 = vmul.f32 %v2126, 0.083333336
    %v2128 = vsub.f32 %v2115, %v2127
    %v2129 = vsub.f32 %v2116, %v2127
    %v2130 = vmul.f32 %v2128, %v2128
    %v2131 = vmul.f32 %v2129, %v2129
    %v2132 = vsel %vm1225, %v2130, 0.0
    %v2133 = vsel %vm2118, %v2131, 0.0
    %v2134 = vadd.f32 %v2132, %v2133
    %v2135 = vrot.slane %v2134, 4
    %v2136 = vadd.f32 %v2134, %v2135
    %v2137 = vrot.slane %v2136, 2
    %v2138 = vadd.f32 %v2136, %v2137
    %v2139 = vrot.slane %v2138, 1
    %v2140 = vadd.f32 %v2138, %v2139
    %v2141 = vmul.f32 %v2140, 0.083333336
    %v2142 = vld [vmem:[%s12] sm:$0x1]
    %v2143 = vadd.f32 %v2141, 1e-05
    %v2144 = vrsqrt.pop %v2143
    %v2145 = vmul.f32 %v2142, %v2144
    %v2147 = vlaneseq
    %v2148 = vshrl.u32 %v2147, 7
    %v2149 = vsub.s32 0, %v2148
    %v2150 = vrot.slane %v2145, %v2149
    %v2152 = vmul.f32 %v2128, %v2150
    %v2153 = vmul.f32 %v2129, %v2150
    %v2154 = vld [vmem:[#allocation14] sm:$0x1]
    %v2156 = vlaneseq
    %v2157 = vshrl.u32 %v2156, 7
    %v2158 = vsub.s32 0, %v2157
    %v2159 = vrot.slane %v2154, %v2158
    %v2161 = vadd.f32 %v2152, %v2159
    %v2162 = vadd.f32 %v2153, %v2159
    %v2163 = vadd.f32 %v265, %v2161
    %v2164 = vadd.f32 %v270, %v2162
    %vm2165 = vcmp.gt.f32.partialorder %v2163, 20.0
    %vm2166 = vcmp.gt.f32.partialorder %v2164, 20.0
    %v2167 = vmin.f32 %v2163, 20.0
    %v2168 = vmin.f32 %v2164, 20.0
    %v2169 = vmul.f32 %v2167, 1.442695
    %v2170 = vpow.pop %v2169
    %v2171 = vmul.f32 %v2168, 1.442695
    %v2172 = vpow.pop %v2171
    %v2173 = vadd.f32 %v2170, 1.0
    %v2174 = vlog2.pop %v2173
    %v2175 = vmul.f32 %v2174, 0.6931472
    %v2176 = vmul.f32 -0.5, %v2170
    %v2177 = vadd.f32 %v2176, 1.0
    %v2178 = vmul.f32 %v2177, %v2170
    %v2179 = vand.u32 2147483647, %v2170
    %vm2180 = vcmp.lt.f32.partialorder %v2179, 0.0004427343
    %v2181 = vsel %vm2180, %v2178, %v2175
    %v2182 = vadd.f32 %v2172, 1.0
    %v2183 = vlog2.pop %v2182
    %v2184 = vmul.f32 %v2183, 0.6931472
    %v2185 = vmul.f32 -0.5, %v2172
    %v2186 = vadd.f32 %v2185, 1.0
    %v2187 = vmul.f32 %v2186, %v2172
    %v2188 = vand.u32 2147483647, %v2172
    %vm2189 = vcmp.lt.f32.partialorder %v2188, 0.0004427343
    %v2190 = vsel %vm2189, %v2187, %v2184
    %v2191 = vsel %vm2165, %v2163, %v2181
    %v2192 = vsel %vm2166, %v2164, %v2190
    %s2193 = scalar_lea.vmem %s6, 32
    %v2194 = vld [vmem:[%s2193] sm:$0xff]
    %v2195 = vld [vmem:[%s2193 + $0x8] sm:$0xff]
    %v2196 = vld [vmem:[%s2193 + $0x10] sm:$0xff]
    %v2197 = vld [vmem:[%s2193 + $0x18] sm:$0xff]
    %s2198 = scalar_lea.vmem [#allocation10], 1
    %v2199 = vld [vmem:[%s2198] sm:$0x1]
    %v2201 = vlaneseq
    %v2202 = vshrl.u32 %v2201, 7
    %v2203 = vsub.s32 0, %v2202
    %v2204 = vrot.slane %v2199, %v2203
    %v2207 = vsel %vm1225, %v2191, 0
    %v2210 = vsel %vm1225, %v2192, 0
    %2212 = vmatprep.subr.mxu0 0.0
    %2213 = vmatpush1.msra.mxu0 0.0
    %2214 = vmatprep.subr.mxu0 0.0
    %2215 = vmatpush1.msra.mxu0 0.0
    %2216 = vmatprep.subr.mxu0 0.0
    %2217 = vmatpush1.msra.mxu0 0.0
    %2218 = vmatprep.subr.mxu0 0.0
    %2219 = vmatpush1.msra.mxu0 0.0
    %2220 = vmatprep.subr.mxu0 0.0
    %2221 = vmatpush1.msra.mxu0 0.0
    %2222 = vmatprep.subr.mxu0 0.0
    %2223 = vmatpush1.msra.mxu0 0.0
    %2224 = vmatprep.subr.mxu0 0.0
    %2225 = vmatpush1.msra.mxu0 0.0
    %2226 = vmatprep.subr.mxu0 0.0
    %2227 = vmatpush1.msra.mxu0 0.0
    %2228 = vmatprep.subr.mxu0 0.0
    %2229 = vmatpush1.msra.mxu0 0.0
    %2230 = vmatprep.subr.mxu0 0.0
    %2231 = vmatpush1.msra.mxu0 0.0
    %2232 = vmatprep.subr.mxu0 0.0
    %2233 = vmatpush1.msra.mxu0 0.0
    %2234 = vmatprep.subr.mxu0 0.0
    %2235 = vmatpush1.msra.mxu0 0.0
    %2236 = vmatprep.subr.mxu0 0.0
    %2237 = vmatpush1.msra.mxu0 %v2197
    %2238 = vmatprep.subr.mxu0 0.0
    %2239 = vmatpush1.msra.mxu0 %v2196
    %2240 = vmatprep.subr.mxu0 0.0
    %2241 = vmatpush1.msra.mxu0 %v2195
    %2242 = vmatprep.subr.mxu0 0.0
    %2243 = vmatpush1.msra.mxu0 %v2194
    %2244 = vmatprep.subr.mxu0 0.0
    %2245 = vmatpush2.msra.mxu0 0.0
    %2246 = vmatprep.subr.mxu0 0.0
    %2247 = vmatpush2.msra.mxu0 0.0
    %2248 = vmatprep.subr.mxu0 0.0
    %2249 = vmatpush2.msra.mxu0 0.0
    %2250 = vmatprep.subr.mxu0 0.0
    %2251 = vmatpush2.msra.mxu0 0.0
    %2252 = vmatprep.subr.mxu0 0.0
    %2253 = vmatpush2.msra.mxu0 0.0
    %2254 = vmatprep.subr.mxu0 0.0
    %2255 = vmatpush2.msra.mxu0 0.0
    %2256 = vmatprep.subr.mxu0 0.0
    %2257 = vmatpush2.msra.mxu0 0.0
    %2258 = vmatprep.subr.mxu0 0.0
    %2259 = vmatpush2.msra.mxu0 0.0
    %2260 = vmatprep.subr.mxu0 0.0
    %2261 = vmatpush2.msra.mxu0 0.0
    %2262 = vmatprep.subr.mxu0 0.0
    %2263 = vmatpush2.msra.mxu0 0.0
    %2264 = vmatprep.subr.mxu0 0.0
    %2265 = vmatpush2.msra.mxu0 0.0
    %2266 = vmatprep.subr.mxu0 0.0
    %2267 = vmatpush2.msra.mxu0 0.0
    %2268 = vmatprep.subr.mxu0 0.0
    %2269 = vmatpush2.msra.mxu0 0.0
    %2270 = vmatprep.subr.mxu0 0.0
    %2271 = vmatpush2.msra.mxu0 0.0
    %2272 = vmatprep.subr.mxu0 0.0
    %2273 = vmatpush2.msra.mxu0 0.0
    %2274 = vmatprep.subr.mxu0 0.0
    %2275 = vmatpush2.msra.mxu0 0.0
    %2276 = vmatprep.mubr.f32.mxu0 0.0
    %2277 = vmatmul.mubr.f32.gmra.mxu0 %v2207
    %v2278 = vpop.f32.mrf.mxu0
    %v2279 = vadd.f32 %v2204, %v2278
    %v2280 = vpop.f32.mrf.mxu0
    %2281 = vmatprep.mubr.f32.mxu0 0.0
    %2282 = vmatmul.mubr.f32.gmra.mxu0 %v2210
    %v2283 = vpop.f32.mrf.mxu0
    %v2284 = vadd.f32 %v2204, %v2283
    %v2285 = vpop.f32.mrf.mxu0
    %2286 = vdwg.mxu0
    %s2287 = scalar_lea.vmem %s7, 32
    %v2288 = vld [vmem:[%s2287] sm:$0xff]
    %v2289 = vld [vmem:[%s2287 + $0x8] sm:$0xff]
    %v2290 = vld [vmem:[%s2287 + $0x10] sm:$0xff]
    %v2291 = vld [vmem:[%s2287 + $0x18] sm:$0xff]
    %2292 = vmatprep.subr.mxu0 0.0
    %2293 = vmatpush1.msra.mxu0 0.0
    %2294 = vmatprep.subr.mxu0 0.0
    %2295 = vmatpush1.msra.mxu0 0.0
    %2296 = vmatprep.subr.mxu0 0.0
    %2297 = vmatpush1.msra.mxu0 0.0
    %2298 = vmatprep.subr.mxu0 0.0
    %2299 = vmatpush1.msra.mxu0 0.0
    %2300 = vmatprep.subr.mxu0 0.0
    %2301 = vmatpush1.msra.mxu0 0.0
    %2302 = vmatprep.subr.mxu0 0.0
    %2303 = vmatpush1.msra.mxu0 0.0
    %2304 = vmatprep.subr.mxu0 0.0
    %2305 = vmatpush1.msra.mxu0 0.0
    %2306 = vmatprep.subr.mxu0 0.0
    %2307 = vmatpush1.msra.mxu0 0.0
    %2308 = vmatprep.subr.mxu0 0.0
    %2309 = vmatpush1.msra.mxu0 0.0
    %2310 = vmatprep.subr.mxu0 0.0
    %2311 = vmatpush1.msra.mxu0 0.0
    %2312 = vmatprep.subr.mxu0 0.0
    %2313 = vmatpush1.msra.mxu0 0.0
    %2314 = vmatprep.subr.mxu0 0.0
    %2315 = vmatpush1.msra.mxu0 0.0
    %2316 = vmatprep.subr.mxu0 0.0
    %2317 = vmatpush1.msra.mxu0 %v2291
    %2318 = vmatprep.subr.mxu0 0.0
    %2319 = vmatpush1.msra.mxu0 %v2290
    %2320 = vmatprep.subr.mxu0 0.0
    %2321 = vmatpush1.msra.mxu0 %v2289
    %2322 = vmatprep.subr.mxu0 0.0
    %2323 = vmatpush1.msra.mxu0 %v2288
    %2324 = vmatprep.subr.mxu0 0.0
    %2325 = vmatpush2.msra.mxu0 0.0
    %2326 = vmatprep.subr.mxu0 0.0
    %2327 = vmatpush2.msra.mxu0 0.0
    %2328 = vmatprep.subr.mxu0 0.0
    %2329 = vmatpush2.msra.mxu0 0.0
    %2330 = vmatprep.subr.mxu0 0.0
    %2331 = vmatpush2.msra.mxu0 0.0
    %2332 = vmatprep.subr.mxu0 0.0
    %2333 = vmatpush2.msra.mxu0 0.0
    %2334 = vmatprep.subr.mxu0 0.0
    %2335 = vmatpush2.msra.mxu0 0.0
    %2336 = vmatprep.subr.mxu0 0.0
    %2337 = vmatpush2.msra.mxu0 0.0
    %2338 = vmatprep.subr.mxu0 0.0
    %2339 = vmatpush2.msra.mxu0 0.0
    %2340 = vmatprep.subr.mxu0 0.0
    %2341 = vmatpush2.msra.mxu0 0.0
    %2342 = vmatprep.subr.mxu0 0.0
    %2343 = vmatpush2.msra.mxu0 0.0
    %2344 = vmatprep.subr.mxu0 0.0
    %2345 = vmatpush2.msra.mxu0 0.0
    %2346 = vmatprep.subr.mxu0 0.0
    %2347 = vmatpush2.msra.mxu0 0.0
    %2348 = vmatprep.subr.mxu0 0.0
    %2349 = vmatpush2.msra.mxu0 0.0
    %2350 = vmatprep.subr.mxu0 0.0
    %2351 = vmatpush2.msra.mxu0 0.0
    %2352 = vmatprep.subr.mxu0 0.0
    %2353 = vmatpush2.msra.mxu0 0.0
    %2354 = vmatprep.subr.mxu0 0.0
    %2355 = vmatpush2.msra.mxu0 0.0
    %2356 = vmatprep.mubr.f32.mxu0 0.0
    %2357 = vmatmul.mubr.f32.gmra.mxu0 %v2207
    %v2358 = vpop.f32.mrf.mxu0
    %v2359 = vadd.f32 0.0, %v2358
    %v2360 = vpop.f32.mrf.mxu0
    %2361 = vmatprep.mubr.f32.mxu0 0.0
    %2362 = vmatmul.mubr.f32.gmra.mxu0 %v2210
    %v2363 = vpop.f32.mrf.mxu0
    %v2364 = vadd.f32 0.0, %v2363
    %v2365 = vpop.f32.mrf.mxu0
    %2366 = vdwg.mxu0
    %v2368 = vsel %vm1395, %v2364, 0
    %2370 = vmatprep.subr.mxu0 0.0
    %2371 = vmatpush1.msra.mxu0 0.0
    %2372 = vmatprep.subr.mxu0 0.0
    %2373 = vmatpush1.msra.mxu0 0.0
    %2374 = vmatprep.subr.mxu0 0.0
    %2375 = vmatpush1.msra.mxu0 0.0
    %2376 = vmatprep.subr.mxu0 0.0
    %2377 = vmatpush1.msra.mxu0 0.0
    %2378 = vmatprep.subr.mxu0 0.0
    %2379 = vmatpush1.msra.mxu0 0.0
    %2380 = vmatprep.subr.mxu0 0.0
    %2381 = vmatpush1.msra.mxu0 0.0
    %2382 = vmatprep.subr.mxu0 0.0
    %2383 = vmatpush1.msra.mxu0 0.0
    %2384 = vmatprep.subr.mxu0 0.0
    %2385 = vmatpush1.msra.mxu0 0.0
    %2386 = vmatprep.subr.mxu0 0.0
    %2387 = vmatpush1.msra.mxu0 0.0
    %2388 = vmatprep.subr.mxu0 0.0
    %2389 = vmatpush1.msra.mxu0 0.0
    %2390 = vmatprep.subr.mxu0 0.0
    %2391 = vmatpush1.msra.mxu0 0.0
    %2392 = vmatprep.subr.mxu0 0.0
    %2393 = vmatpush1.msra.mxu0 0.0
    %2394 = vmatprep.subr.mxu0 0.0
    %2395 = vmatpush1.msra.mxu0 0.0
    %2396 = vmatprep.subr.mxu0 0.0
    %2397 = vmatpush1.msra.mxu0 0.0
    %2398 = vmatprep.subr.mxu0 0.0
    %2399 = vmatpush1.msra.mxu0 %v2368
    %2400 = vmatprep.subr.mxu0 0.0
    %2401 = vmatpush1.msra.mxu0 %v2359
    %2402 = vmatprep.subr.mxu0 0.0
    %2403 = vmatpush2.msra.mxu0 0.0
    %2404 = vmatprep.subr.mxu0 0.0
    %2405 = vmatpush2.msra.mxu0 0.0
    %2406 = vmatprep.subr.mxu0 0.0
    %2407 = vmatpush2.msra.mxu0 0.0
    %2408 = vmatprep.subr.mxu0 0.0
    %2409 = vmatpush2.msra.mxu0 0.0
    %2410 = vmatprep.subr.mxu0 0.0
    %2411 = vmatpush2.msra.mxu0 0.0
    %2412 = vmatprep.subr.mxu0 0.0
    %2413 = vmatpush2.msra.mxu0 0.0
    %2414 = vmatprep.subr.mxu0 0.0
    %2415 = vmatpush2.msra.mxu0 0.0
    %2416 = vmatprep.subr.mxu0 0.0
    %2417 = vmatpush2.msra.mxu0 0.0
    %2418 = vmatprep.subr.mxu0 0.0
    %2419 = vmatpush2.msra.mxu0 0.0
    %2420 = vmatprep.subr.mxu0 0.0
    %2421 = vmatpush2.msra.mxu0 0.0
    %2422 = vmatprep.subr.mxu0 0.0
    %2423 = vmatpush2.msra.mxu0 0.0
    %2424 = vmatprep.subr.mxu0 0.0
    %2425 = vmatpush2.msra.mxu0 0.0
    %2426 = vmatprep.subr.mxu0 0.0
    %2427 = vmatpush2.msra.mxu0 0.0
    %2428 = vmatprep.subr.mxu0 0.0
    %2429 = vmatpush2.msra.mxu0 0.0
    %2430 = vmatprep.subr.mxu0 0.0
    %2431 = vmatpush2.msra.mxu0 0.0
    %2432 = vmatprep.subr.mxu0 0.0
    %2433 = vmatpush2.msra.mxu0 0.0
    %2434 = vmatprep.mubr.f32.mxu0 0.0
    %2435 = vmatmul.mubr.f32.gmra.mxu0 %v1390
    %v2436 = vpop.f32.mrf.mxu0
    %v2437 = vadd.f32 0.0, %v2436
    %v2438 = vpop.f32.mrf.mxu0
    %2439 = vmatprep.mubr.f32.mxu0 0.0
    %2440 = vmatmul.mubr.f32.gmra.mxu0 %v1393
    %v2441 = vpop.f32.mrf.mxu0
    %v2442 = vadd.f32 0.0, %v2441
    %v2443 = vpop.f32.mrf.mxu0
    %2444 = vdwg.mxu0
    %v2445 = vadd.f32 %v2279, %v2437
    %v2446 = vadd.f32 %v2284, %v2442
    %v2447 = vadd.f32 %v2445, %v679
    %v2448 = vadd.f32 %v2446, %v684
    %2449 = vmatprep.subr.mxu0 0.0
    %2450 = vmatpush1.msra.mxu0 0.0
    %2451 = vmatprep.subr.mxu0 0.0
    %2452 = vmatpush1.msra.mxu0 0.0
    %2453 = vmatprep.subr.mxu0 0.0
    %2454 = vmatpush1.msra.mxu0 0.0
    %2455 = vmatprep.subr.mxu0 0.0
    %2456 = vmatpush1.msra.mxu0 0.0
    %2457 = vmatprep.subr.mxu0 0.0
    %2458 = vmatpush1.msra.mxu0 0.0
    %2459 = vmatprep.subr.mxu0 0.0
    %2460 = vmatpush1.msra.mxu0 0.0
    %2461 = vmatprep.subr.mxu0 0.0
    %2462 = vmatpush1.msra.mxu0 0.0
    %2463 = vmatprep.subr.mxu0 0.0
    %2464 = vmatpush1.msra.mxu0 0.0
    %2465 = vmatprep.subr.mxu0 0.0
    %2466 = vmatpush1.msra.mxu0 0.0
    %2467 = vmatprep.subr.mxu0 0.0
    %2468 = vmatpush1.msra.mxu0 0.0
    %2469 = vmatprep.subr.mxu0 0.0
    %2470 = vmatpush1.msra.mxu0 0.0
    %2471 = vmatprep.subr.mxu0 0.0
    %2472 = vmatpush1.msra.mxu0 0.0
    %2473 = vmatprep.subr.mxu0 0.0
    %2474 = vmatpush1.msra.mxu0 0.0
    %2475 = vmatprep.subr.mxu0 0.0
    %2476 = vmatpush1.msra.mxu0 0.0
    %2477 = vmatprep.subr.mxu0 0.0
    %2478 = vmatpush1.msra.mxu0 %v2368
    %2479 = vmatprep.subr.mxu0 0.0
    %2480 = vmatpush1.msra.mxu0 %v2359
    %2481 = vmatprep.subr.mxu0 0.0
    %2482 = vmatpush2.msra.mxu0 0.0
    %2483 = vmatprep.subr.mxu0 0.0
    %2484 = vmatpush2.msra.mxu0 0.0
    %2485 = vmatprep.subr.mxu0 0.0
    %2486 = vmatpush2.msra.mxu0 0.0
    %2487 = vmatprep.subr.mxu0 0.0
    %2488 = vmatpush2.msra.mxu0 0.0
    %2489 = vmatprep.subr.mxu0 0.0
    %2490 = vmatpush2.msra.mxu0 0.0
    %2491 = vmatprep.subr.mxu0 0.0
    %2492 = vmatpush2.msra.mxu0 0.0
    %2493 = vmatprep.subr.mxu0 0.0
    %2494 = vmatpush2.msra.mxu0 0.0
    %2495 = vmatprep.subr.mxu0 0.0
    %2496 = vmatpush2.msra.mxu0 0.0
    %2497 = vmatprep.subr.mxu0 0.0
    %2498 = vmatpush2.msra.mxu0 0.0
    %2499 = vmatprep.subr.mxu0 0.0
    %2500 = vmatpush2.msra.mxu0 0.0
    %2501 = vmatprep.subr.mxu0 0.0
    %2502 = vmatpush2.msra.mxu0 0.0
    %2503 = vmatprep.subr.mxu0 0.0
    %2504 = vmatpush2.msra.mxu0 0.0
    %2505 = vmatprep.subr.mxu0 0.0
    %2506 = vmatpush2.msra.mxu0 0.0
    %2507 = vmatprep.subr.mxu0 0.0
    %2508 = vmatpush2.msra.mxu0 0.0
    %2509 = vmatprep.subr.mxu0 0.0
    %2510 = vmatpush2.msra.mxu0 0.0
    %2511 = vmatprep.subr.mxu0 0.0
    %2512 = vmatpush2.msra.mxu0 0.0
    %2513 = vmatprep.mubr.f32.mxu0 0.0
    %2514 = vmatmul.mubr.f32.gmra.mxu0 %v1482
    %v2515 = vpop.f32.mrf.mxu0
    %v2516 = vadd.f32 0.0, %v2515
    %v2517 = vpop.f32.mrf.mxu0
    %2518 = vmatprep.mubr.f32.mxu0 0.0
    %2519 = vmatmul.mubr.f32.gmra.mxu0 %v1485
    %v2520 = vpop.f32.mrf.mxu0
    %v2521 = vadd.f32 0.0, %v2520
    %v2522 = vpop.f32.mrf.mxu0
    %2523 = vdwg.mxu0
    %v2524 = vadd.f32 %v2279, %v2516
    %v2525 = vadd.f32 %v2284, %v2521
    %v2526 = vadd.f32 %v2524, %v754
    %v2527 = vadd.f32 %v2525, %v759
    %2528 = vmatprep.subr.mxu0 0.0
    %2529 = vmatpush1.msra.mxu0 0.0
    %2530 = vmatprep.subr.mxu0 0.0
    %2531 = vmatpush1.msra.mxu0 0.0
    %2532 = vmatprep.subr.mxu0 0.0
    %2533 = vmatpush1.msra.mxu0 0.0
    %2534 = vmatprep.subr.mxu0 0.0
    %2535 = vmatpush1.msra.mxu0 0.0
    %2536 = vmatprep.subr.mxu0 0.0
    %2537 = vmatpush1.msra.mxu0 0.0
    %2538 = vmatprep.subr.mxu0 0.0
    %2539 = vmatpush1.msra.mxu0 0.0
    %2540 = vmatprep.subr.mxu0 0.0
    %2541 = vmatpush1.msra.mxu0 0.0
    %2542 = vmatprep.subr.mxu0 0.0
    %2543 = vmatpush1.msra.mxu0 0.0
    %2544 = vmatprep.subr.mxu0 0.0
    %2545 = vmatpush1.msra.mxu0 0.0
    %2546 = vmatprep.subr.mxu0 0.0
    %2547 = vmatpush1.msra.mxu0 0.0
    %2548 = vmatprep.subr.mxu0 0.0
    %2549 = vmatpush1.msra.mxu0 0.0
    %2550 = vmatprep.subr.mxu0 0.0
    %2551 = vmatpush1.msra.mxu0 0.0
    %2552 = vmatprep.subr.mxu0 0.0
    %2553 = vmatpush1.msra.mxu0 0.0
    %2554 = vmatprep.subr.mxu0 0.0
    %2555 = vmatpush1.msra.mxu0 0.0
    %2556 = vmatprep.subr.mxu0 0.0
    %2557 = vmatpush1.msra.mxu0 %v2368
    %2558 = vmatprep.subr.mxu0 0.0
    %2559 = vmatpush1.msra.mxu0 %v2359
    %2560 = vmatprep.subr.mxu0 0.0
    %2561 = vmatpush2.msra.mxu0 0.0
    %2562 = vmatprep.subr.mxu0 0.0
    %2563 = vmatpush2.msra.mxu0 0.0
    %2564 = vmatprep.subr.mxu0 0.0
    %2565 = vmatpush2.msra.mxu0 0.0
    %2566 = vmatprep.subr.mxu0 0.0
    %2567 = vmatpush2.msra.mxu0 0.0
    %2568 = vmatprep.subr.mxu0 0.0
    %2569 = vmatpush2.msra.mxu0 0.0
    %2570 = vmatprep.subr.mxu0 0.0
    %2571 = vmatpush2.msra.mxu0 0.0
    %2572 = vmatprep.subr.mxu0 0.0
    %2573 = vmatpush2.msra.mxu0 0.0
    %2574 = vmatprep.subr.mxu0 0.0
    %2575 = vmatpush2.msra.mxu0 0.0
    %2576 = vmatprep.subr.mxu0 0.0
    %2577 = vmatpush2.msra.mxu0 0.0
    %2578 = vmatprep.subr.mxu0 0.0
    %2579 = vmatpush2.msra.mxu0 0.0
    %2580 = vmatprep.subr.mxu0 0.0
    %2581 = vmatpush2.msra.mxu0 0.0
    %2582 = vmatprep.subr.mxu0 0.0
    %2583 = vmatpush2.msra.mxu0 0.0
    %2584 = vmatprep.subr.mxu0 0.0
    %2585 = vmatpush2.msra.mxu0 0.0
    %2586 = vmatprep.subr.mxu0 0.0
    %2587 = vmatpush2.msra.mxu0 0.0
    %2588 = vmatprep.subr.mxu0 0.0
    %2589 = vmatpush2.msra.mxu0 0.0
    %2590 = vmatprep.subr.mxu0 0.0
    %2591 = vmatpush2.msra.mxu0 0.0
    %2592 = vmatprep.mubr.f32.mxu0 0.0
    %2593 = vmatmul.mubr.f32.gmra.mxu0 %v1570
    %v2594 = vpop.f32.mrf.mxu0
    %v2595 = vadd.f32 0.0, %v2594
    %v2596 = vpop.f32.mrf.mxu0
    %2597 = vmatprep.mubr.f32.mxu0 0.0
    %2598 = vmatmul.mubr.f32.gmra.mxu0 %v1573
    %v2599 = vpop.f32.mrf.mxu0
    %v2600 = vadd.f32 0.0, %v2599
    %v2601 = vpop.f32.mrf.mxu0
    %2602 = vdwg.mxu0
    %v2603 = vadd.f32 %v2279, %v2595
    %v2604 = vadd.f32 %v2284, %v2600
    %v2605 = vadd.f32 %v2603, %v829
    %v2606 = vadd.f32 %v2604, %v834
    %2607 = vmatprep.subr.mxu0 0.0
    %2608 = vmatpush1.msra.mxu0 0.0
    %2609 = vmatprep.subr.mxu0 0.0
    %2610 = vmatpush1.msra.mxu0 0.0
    %2611 = vmatprep.subr.mxu0 0.0
    %2612 = vmatpush1.msra.mxu0 0.0
    %2613 = vmatprep.subr.mxu0 0.0
    %2614 = vmatpush1.msra.mxu0 0.0
    %2615 = vmatprep.subr.mxu0 0.0
    %2616 = vmatpush1.msra.mxu0 0.0
    %2617 = vmatprep.subr.mxu0 0.0
    %2618 = vmatpush1.msra.mxu0 0.0
    %2619 = vmatprep.subr.mxu0 0.0
    %2620 = vmatpush1.msra.mxu0 0.0
    %2621 = vmatprep.subr.mxu0 0.0
    %2622 = vmatpush1.msra.mxu0 0.0
    %2623 = vmatprep.subr.mxu0 0.0
    %2624 = vmatpush1.msra.mxu0 0.0
    %2625 = vmatprep.subr.mxu0 0.0
    %2626 = vmatpush1.msra.mxu0 0.0
    %2627 = vmatprep.subr.mxu0 0.0
    %2628 = vmatpush1.msra.mxu0 0.0
    %2629 = vmatprep.subr.mxu0 0.0
    %2630 = vmatpush1.msra.mxu0 0.0
    %2631 = vmatprep.subr.mxu0 0.0
    %2632 = vmatpush1.msra.mxu0 0.0
    %2633 = vmatprep.subr.mxu0 0.0
    %2634 = vmatpush1.msra.mxu0 0.0
    %2635 = vmatprep.subr.mxu0 0.0
    %2636 = vmatpush1.msra.mxu0 %v2368
    %2637 = vmatprep.subr.mxu0 0.0
    %2638 = vmatpush1.msra.mxu0 %v2359
    %2639 = vmatprep.subr.mxu0 0.0
    %2640 = vmatpush2.msra.mxu0 0.0
    %2641 = vmatprep.subr.mxu0 0.0
    %2642 = vmatpush2.msra.mxu0 0.0
    %2643 = vmatprep.subr.mxu0 0.0
    %2644 = vmatpush2.msra.mxu0 0.0
    %2645 = vmatprep.subr.mxu0 0.0
    %2646 = vmatpush2.msra.mxu0 0.0
    %2647 = vmatprep.subr.mxu0 0.0
    %2648 = vmatpush2.msra.mxu0 0.0
    %2649 = vmatprep.subr.mxu0 0.0
    %2650 = vmatpush2.msra.mxu0 0.0
    %2651 = vmatprep.subr.mxu0 0.0
    %2652 = vmatpush2.msra.mxu0 0.0
    %2653 = vmatprep.subr.mxu0 0.0
    %2654 = vmatpush2.msra.mxu0 0.0
    %2655 = vmatprep.subr.mxu0 0.0
    %2656 = vmatpush2.msra.mxu0 0.0
    %2657 = vmatprep.subr.mxu0 0.0
    %2658 = vmatpush2.msra.mxu0 0.0
    %2659 = vmatprep.subr.mxu0 0.0
    %2660 = vmatpush2.msra.mxu0 0.0
    %2661 = vmatprep.subr.mxu0 0.0
    %2662 = vmatpush2.msra.mxu0 0.0
    %2663 = vmatprep.subr.mxu0 0.0
    %2664 = vmatpush2.msra.mxu0 0.0
    %2665 = vmatprep.subr.mxu0 0.0
    %2666 = vmatpush2.msra.mxu0 0.0
    %2667 = vmatprep.subr.mxu0 0.0
    %2668 = vmatpush2.msra.mxu0 0.0
    %2669 = vmatprep.subr.mxu0 0.0
    %2670 = vmatpush2.msra.mxu0 0.0
    %2671 = vmatprep.mubr.f32.mxu0 0.0
    %2672 = vmatmul.mubr.f32.gmra.mxu0 %v1658
    %v2673 = vpop.f32.mrf.mxu0
    %v2674 = vadd.f32 0.0, %v2673
    %v2675 = vpop.f32.mrf.mxu0
    %2676 = vmatprep.mubr.f32.mxu0 0.0
    %2677 = vmatmul.mubr.f32.gmra.mxu0 %v1661
    %v2678 = vpop.f32.mrf.mxu0
    %v2679 = vadd.f32 0.0, %v2678
    %v2680 = vpop.f32.mrf.mxu0
    %2681 = vdwg.mxu0
    %v2682 = vadd.f32 %v2279, %v2674
    %v2683 = vadd.f32 %v2284, %v2679
    %v2684 = vadd.f32 %v2682, %v904
    %v2685 = vadd.f32 %v2683, %v909
    %v2686 = vsel %vm1742, %v2447, 0.0
    %v2687 = vsel %vm1744, %v2448, 0.0
    %v2688 = vadd.f32 %v2686, %v2687
    %v2689 = vrot.slane %v2688, 4
    %v2690 = vadd.f32 %v2688, %v2689
    %v2691 = vrot.slane %v2690, 2
    %v2692 = vadd.f32 %v2690, %v2691
    %v2693 = vrot.slane %v2692, 1
    %v2694 = vadd.f32 %v2692, %v2693
    %v2695 = vadd.f32 %v2694, 0.0
    %v2696 = vsel %vm1742, %v2526, 0.0
    %v2697 = vsel %vm1744, %v2527, 0.0
    %v2698 = vadd.f32 %v2696, %v2697
    %v2699 = vrot.slane %v2698, 4
    %v2700 = vadd.f32 %v2698, %v2699
    %v2701 = vrot.slane %v2700, 2
    %v2702 = vadd.f32 %v2700, %v2701
    %v2703 = vrot.slane %v2702, 1
    %v2704 = vadd.f32 %v2702, %v2703
    %v2705 = vadd.f32 %v2695, %v2704
    %v2706 = vsel %vm1742, %v2605, 0.0
    %v2707 = vsel %vm1744, %v2606, 0.0
    %v2708 = vadd.f32 %v2706, %v2707
    %v2709 = vrot.slane %v2708, 4
    %v2710 = vadd.f32 %v2708, %v2709
    %v2711 = vrot.slane %v2710, 2
    %v2712 = vadd.f32 %v2710, %v2711
    %v2713 = vrot.slane %v2712, 1
    %v2714 = vadd.f32 %v2712, %v2713
    %v2715 = vadd.f32 %v2705, %v2714
    %v2716 = vsel %vm1742, %v2684, 0.0
    %v2717 = vsel %vm1744, %v2685, 0.0
    %v2718 = vadd.f32 %v2716, %v2717
    %v2719 = vrot.slane %v2718, 4
    %v2720 = vadd.f32 %v2718, %v2719
    %v2721 = vrot.slane %v2720, 2
    %v2722 = vadd.f32 %v2720, %v2721
    %v2723 = vrot.slane %v2722, 1
    %v2724 = vadd.f32 %v2722, %v2723
    %v2725 = vadd.f32 %v2715, %v2724
    %v2726 = vmul.f32 %v2725, 0.020833334
    %v2727 = vsub.f32 %v2447, %v2726
    %v2728 = vsub.f32 %v2448, %v2726
    %v2729 = vmul.f32 %v2727, %v2727
    %v2730 = vmul.f32 %v2728, %v2728
    %v2731 = vsel %vm1742, %v2729, 0.0
    %v2732 = vsel %vm1744, %v2730, 0.0
    %v2733 = vadd.f32 %v2731, %v2732
    %v2734 = vrot.slane %v2733, 4
    %v2735 = vadd.f32 %v2733, %v2734
    %v2736 = vrot.slane %v2735, 2
    %v2737 = vadd.f32 %v2735, %v2736
    %v2738 = vrot.slane %v2737, 1
    %v2739 = vadd.f32 %v2737, %v2738
    %v2740 = vadd.f32 %v2739, 0.0
    %v2741 = vsub.f32 %v2526, %v2726
    %v2742 = vsub.f32 %v2527, %v2726
    %v2743 = vmul.f32 %v2741, %v2741
    %v2744 = vmul.f32 %v2742, %v2742
    %v2745 = vsel %vm1742, %v2743, 0.0
    %v2746 = vsel %vm1744, %v2744, 0.0
    %v2747 = vadd.f32 %v2745, %v2746
    %v2748 = vrot.slane %v2747, 4
    %v2749 = vadd.f32 %v2747, %v2748
    %v2750 = vrot.slane %v2749, 2
    %v2751 = vadd.f32 %v2749, %v2750
    %v2752 = vrot.slane %v2751, 1
    %v2753 = vadd.f32 %v2751, %v2752
    %v2754 = vadd.f32 %v2740, %v2753
    %v2755 = vsub.f32 %v2605, %v2726
    %v2756 = vsub.f32 %v2606, %v2726
    %v2757 = vmul.f32 %v2755, %v2755
    %v2758 = vmul.f32 %v2756, %v2756
    %v2759 = vsel %vm1742, %v2757, 0.0
    %v2760 = vsel %vm1744, %v2758, 0.0
    %v2761 = vadd.f32 %v2759, %v2760
    %v2762 = vrot.slane %v2761, 4
    %v2763 = vadd.f32 %v2761, %v2762
    %v2764 = vrot.slane %v2763, 2
    %v2765 = vadd.f32 %v2763, %v2764
    %v2766 = vrot.slane %v2765, 1
    %v2767 = vadd.f32 %v2765, %v2766
    %v2768 = vadd.f32 %v2754, %v2767
    %v2769 = vsub.f32 %v2684, %v2726
    %v2770 = vsub.f32 %v2685, %v2726
    %v2771 = vmul.f32 %v2769, %v2769
    %v2772 = vmul.f32 %v2770, %v2770
    %v2773 = vsel %vm1742, %v2771, 0.0
    %v2774 = vsel %vm1744, %v2772, 0.0
    %v2775 = vadd.f32 %v2773, %v2774
    %v2776 = vrot.slane %v2775, 4
    %v2777 = vadd.f32 %v2775, %v2776
    %v2778 = vrot.slane %v2777, 2
    %v2779 = vadd.f32 %v2777, %v2778
    %v2780 = vrot.slane %v2779, 1
    %v2781 = vadd.f32 %v2779, %v2780
    %v2782 = vadd.f32 %v2768, %v2781
    %v2783 = vmul.f32 %v2782, 0.020833334
    %s2784 = scalar_lea.vmem [#allocation11], 1
    %v2785 = vld [vmem:[%s2784] sm:$0x1]
    %v2786 = vadd.f32 %v2783, 1e-05
    %v2787 = vrsqrt.pop %v2786
    %v2788 = vmul.f32 %v2785, %v2787
    %s2789 = scalar_lea.vmem [#allocation13], 1
    %v2790 = vld [vmem:[%s2789] sm:$0x1]
    %v2791 = vmul.f32 %v2726, %v2788
    %v2792 = vsub.f32 %v2790, %v2791
    %v2794 = vlaneseq
    %v2795 = vshrl.u32 %v2794, 7
    %v2796 = vsub.s32 0, %v2795
    %v2797 = vrot.slane %v2788, %v2796
    %v2799 = vmul.f32 %v2447, %v2797
    %v2800 = vmul.f32 %v2448, %v2797
    %v2802 = vlaneseq
    %v2803 = vshrl.u32 %v2802, 7
    %v2804 = vsub.s32 0, %v2803
    %v2805 = vrot.slane %v2792, %v2804
    %v2807 = vadd.f32 %v2799, %v2805
    %v2808 = vadd.f32 %v2800, %v2805
    %v2809 = vand.u32 2147483647, %v2807
    %v2810 = vand.u32 2147483647, %v2808
    %v2811 = vsub.f32 0.0, %v2809
    %v2812 = vsub.f32 0.0, %v2810
    %v2813 = vmul.f32 %v2811, 1.442695
    %v2814 = vpow.pop %v2813
    %v2815 = vmul.f32 %v2812, 1.442695
    %v2816 = vpow.pop %v2815
    %v2817 = vadd.f32 %v2814, 1.0
    %v2818 = vadd.f32 %v2816, 1.0
    %v2819 = vrcp.pop %v2817
    %v2820 = vmul.f32 1.0, %v2819
    %v2821 = vrcp.pop %v2818
    %v2822 = vmul.f32 1.0, %v2821
    %vm2823 = vcmp.ge.f32.partialorder %v2807, 0.0
    %vm2824 = vcmp.ge.f32.partialorder %v2808, 0.0
    %v2825 = vmul.f32 %v2814, %v2820
    %v2826 = vmul.f32 %v2816, %v2822
    %v2827 = vsel %vm2823, %v2820, %v2825
    %v2828 = vsel %vm2824, %v2822, %v2826
    %vm2829 = vcmp.gt.f32.partialorder %v2807, 20.0
    %vm2830 = vcmp.gt.f32.partialorder %v2808, 20.0
    %v2831 = vmin.f32 %v2807, 20.0
    %v2832 = vmin.f32 %v2808, 20.0
    %v2833 = vmul.f32 %v2831, 1.442695
    %v2834 = vpow.pop %v2833
    %v2835 = vmul.f32 %v2832, 1.442695
    %v2836 = vpow.pop %v2835
    %v2837 = vadd.f32 %v2834, 1.0
    %v2838 = vlog2.pop %v2837
    %v2839 = vmul.f32 %v2838, 0.6931472
    %v2840 = vmul.f32 -0.5, %v2834
    %v2841 = vadd.f32 %v2840, 1.0
    %v2842 = vmul.f32 %v2841, %v2834
    %v2843 = vand.u32 2147483647, %v2834
    %vm2844 = vcmp.lt.f32.partialorder %v2843, 0.0004427343
    %v2845 = vsel %vm2844, %v2842, %v2839
    %v2846 = vadd.f32 %v2836, 1.0
    %v2847 = vlog2.pop %v2846
    %v2848 = vmul.f32 %v2847, 0.6931472
    %v2849 = vmul.f32 -0.5, %v2836
    %v2850 = vadd.f32 %v2849, 1.0
    %v2851 = vmul.f32 %v2850, %v2836
    %v2852 = vand.u32 2147483647, %v2836
    %vm2853 = vcmp.lt.f32.partialorder %v2852, 0.0004427343
    %v2854 = vsel %vm2853, %v2851, %v2848
    %v2855 = vsel %vm2829, %v2807, %v2845
    %v2856 = vsel %vm2830, %v2808, %v2854
    %2859 = vrot.lane.b32.xlu0 %v2855, 96
    %v2860 = vpop.permute.xlu0 %2859
    %2861 = vrot.lane.b32.xlu0 %v2856, 96
    %v2862 = vpop.permute.xlu0 %2861
    %v2865 = vmul.f32 %v2827, %v2860
    %v2866 = vmul.f32 %v2828, %v2862
    %v2867 = vadd.f32 %v2865, 0.0
    %v2868 = vadd.f32 %v2866, 0.0
    %v2869 = vmul.f32 %v2526, %v2797
    %v2870 = vmul.f32 %v2527, %v2797
    %v2871 = vadd.f32 %v2869, %v2805
    %v2872 = vadd.f32 %v2870, %v2805
    %v2873 = vand.u32 2147483647, %v2871
    %v2874 = vand.u32 2147483647, %v2872
    %v2875 = vsub.f32 0.0, %v2873
    %v2876 = vsub.f32 0.0, %v2874
    %v2877 = vmul.f32 %v2875, 1.442695
    %v2878 = vpow.pop %v2877
    %v2879 = vmul.f32 %v2876, 1.442695
    %v2880 = vpow.pop %v2879
    %v2881 = vadd.f32 %v2878, 1.0
    %v2882 = vadd.f32 %v2880, 1.0
    %v2883 = vrcp.pop %v2881
    %v2884 = vmul.f32 1.0, %v2883
    %v2885 = vrcp.pop %v2882
    %v2886 = vmul.f32 1.0, %v2885
    %vm2887 = vcmp.ge.f32.partialorder %v2871, 0.0
    %vm2888 = vcmp.ge.f32.partialorder %v2872, 0.0
    %v2889 = vmul.f32 %v2878, %v2884
    %v2890 = vmul.f32 %v2880, %v2886
    %v2891 = vsel %vm2887, %v2884, %v2889
    %v2892 = vsel %vm2888, %v2886, %v2890
    %vm2893 = vcmp.gt.f32.partialorder %v2871, 20.0
    %vm2894 = vcmp.gt.f32.partialorder %v2872, 20.0
    %v2895 = vmin.f32 %v2871, 20.0
    %v2896 = vmin.f32 %v2872, 20.0
    %v2897 = vmul.f32 %v2895, 1.442695
    %v2898 = vpow.pop %v2897
    %v2899 = vmul.f32 %v2896, 1.442695
    %v2900 = vpow.pop %v2899
    %v2901 = vadd.f32 %v2898, 1.0
    %v2902 = vlog2.pop %v2901
    %v2903 = vmul.f32 %v2902, 0.6931472
    %v2904 = vmul.f32 -0.5, %v2898
    %v2905 = vadd.f32 %v2904, 1.0
    %v2906 = vmul.f32 %v2905, %v2898
    %v2907 = vand.u32 2147483647, %v2898
    %vm2908 = vcmp.lt.f32.partialorder %v2907, 0.0004427343
    %v2909 = vsel %vm2908, %v2906, %v2903
    %v2910 = vadd.f32 %v2900, 1.0
    %v2911 = vlog2.pop %v2910
    %v2912 = vmul.f32 %v2911, 0.6931472
    %v2913 = vmul.f32 -0.5, %v2900
    %v2914 = vadd.f32 %v2913, 1.0
    %v2915 = vmul.f32 %v2914, %v2900
    %v2916 = vand.u32 2147483647, %v2900
    %vm2917 = vcmp.lt.f32.partialorder %v2916, 0.0004427343
    %v2918 = vsel %vm2917, %v2915, %v2912
    %v2919 = vsel %vm2893, %v2871, %v2909
    %v2920 = vsel %vm2894, %v2872, %v2918
    %2923 = vrot.lane.b32.xlu0 %v2919, 96
    %v2924 = vpop.permute.xlu0 %2923
    %2925 = vrot.lane.b32.xlu0 %v2920, 96
    %v2926 = vpop.permute.xlu0 %2925
    %v2929 = vmul.f32 %v2891, %v2924
    %v2930 = vmul.f32 %v2892, %v2926
    %v2931 = vadd.f32 %v2867, %v2929
    %v2932 = vadd.f32 %v2868, %v2930
    %v2933 = vmul.f32 %v2605, %v2797
    %v2934 = vmul.f32 %v2606, %v2797
    %v2935 = vadd.f32 %v2933, %v2805
    %v2936 = vadd.f32 %v2934, %v2805
    %v2937 = vand.u32 2147483647, %v2935
    %v2938 = vand.u32 2147483647, %v2936
    %v2939 = vsub.f32 0.0, %v2937
    %v2940 = vsub.f32 0.0, %v2938
    %v2941 = vmul.f32 %v2939, 1.442695
    %v2942 = vpow.pop %v2941
    %v2943 = vmul.f32 %v2940, 1.442695
    %v2944 = vpow.pop %v2943
    %v2945 = vadd.f32 %v2942, 1.0
    %v2946 = vadd.f32 %v2944, 1.0
    %v2947 = vrcp.pop %v2945
    %v2948 = vmul.f32 1.0, %v2947
    %v2949 = vrcp.pop %v2946
    %v2950 = vmul.f32 1.0, %v2949
    %vm2951 = vcmp.ge.f32.partialorder %v2935, 0.0
    %vm2952 = vcmp.ge.f32.partialorder %v2936, 0.0
    %v2953 = vmul.f32 %v2942, %v2948
    %v2954 = vmul.f32 %v2944, %v2950
    %v2955 = vsel %vm2951, %v2948, %v2953
    %v2956 = vsel %vm2952, %v2950, %v2954
    %vm2957 = vcmp.gt.f32.partialorder %v2935, 20.0
    %vm2958 = vcmp.gt.f32.partialorder %v2936, 20.0
    %v2959 = vmin.f32 %v2935, 20.0
    %v2960 = vmin.f32 %v2936, 20.0
    %v2961 = vmul.f32 %v2959, 1.442695
    %v2962 = vpow.pop %v2961
    %v2963 = vmul.f32 %v2960, 1.442695
    %v2964 = vpow.pop %v2963
    %v2965 = vadd.f32 %v2962, 1.0
    %v2966 = vlog2.pop %v2965
    %v2967 = vmul.f32 %v2966, 0.6931472
    %v2968 = vmul.f32 -0.5, %v2962
    %v2969 = vadd.f32 %v2968, 1.0
    %v2970 = vmul.f32 %v2969, %v2962
    %v2971 = vand.u32 2147483647, %v2962
    %vm2972 = vcmp.lt.f32.partialorder %v2971, 0.0004427343
    %v2973 = vsel %vm2972, %v2970, %v2967
    %v2974 = vadd.f32 %v2964, 1.0
    %v2975 = vlog2.pop %v2974
    %v2976 = vmul.f32 %v2975, 0.6931472
    %v2977 = vmul.f32 -0.5, %v2964
    %v2978 = vadd.f32 %v2977, 1.0
    %v2979 = vmul.f32 %v2978, %v2964
    %v2980 = vand.u32 2147483647, %v2964
    %vm2981 = vcmp.lt.f32.partialorder %v2980, 0.0004427343
    %v2982 = vsel %vm2981, %v2979, %v2976
    %v2983 = vsel %vm2957, %v2935, %v2973
    %v2984 = vsel %vm2958, %v2936, %v2982
    %2987 = vrot.lane.b32.xlu0 %v2983, 96
    %v2988 = vpop.permute.xlu0 %2987
    %2989 = vrot.lane.b32.xlu0 %v2984, 96
    %v2990 = vpop.permute.xlu0 %2989
    %v2993 = vmul.f32 %v2955, %v2988
    %v2994 = vmul.f32 %v2956, %v2990
    %v2995 = vadd.f32 %v2931, %v2993
    %v2996 = vadd.f32 %v2932, %v2994
    %v2997 = vmul.f32 %v2684, %v2797
    %v2998 = vmul.f32 %v2685, %v2797
    %v2999 = vadd.f32 %v2997, %v2805
    %v3000 = vadd.f32 %v2998, %v2805
    %v3001 = vand.u32 2147483647, %v2999
    %v3002 = vand.u32 2147483647, %v3000
    %v3003 = vsub.f32 0.0, %v3001
    %v3004 = vsub.f32 0.0, %v3002
    %v3005 = vmul.f32 %v3003, 1.442695
    %v3006 = vpow.pop %v3005
    %v3007 = vmul.f32 %v3004, 1.442695
    %v3008 = vpow.pop %v3007
    %v3009 = vadd.f32 %v3006, 1.0
    %v3010 = vadd.f32 %v3008, 1.0
    %v3011 = vrcp.pop %v3009
    %v3012 = vmul.f32 1.0, %v3011
    %v3013 = vrcp.pop %v3010
    %v3014 = vmul.f32 1.0, %v3013
    %vm3015 = vcmp.ge.f32.partialorder %v2999, 0.0
    %vm3016 = vcmp.ge.f32.partialorder %v3000, 0.0
    %v3017 = vmul.f32 %v3006, %v3012
    %v3018 = vmul.f32 %v3008, %v3014
    %v3019 = vsel %vm3015, %v3012, %v3017
    %v3020 = vsel %vm3016, %v3014, %v3018
    %vm3021 = vcmp.gt.f32.partialorder %v2999, 20.0
    %vm3022 = vcmp.gt.f32.partialorder %v3000, 20.0
    %v3023 = vmin.f32 %v2999, 20.0
    %v3024 = vmin.f32 %v3000, 20.0
    %v3025 = vmul.f32 %v3023, 1.442695
    %v3026 = vpow.pop %v3025
    %v3027 = vmul.f32 %v3024, 1.442695
    %v3028 = vpow.pop %v3027
    %v3029 = vadd.f32 %v3026, 1.0
    %v3030 = vlog2.pop %v3029
    %v3031 = vmul.f32 %v3030, 0.6931472
    %v3032 = vmul.f32 -0.5, %v3026
    %v3033 = vadd.f32 %v3032, 1.0
    %v3034 = vmul.f32 %v3033, %v3026
    %v3035 = vand.u32 2147483647, %v3026
    %vm3036 = vcmp.lt.f32.partialorder %v3035, 0.0004427343
    %v3037 = vsel %vm3036, %v3034, %v3031
    %v3038 = vadd.f32 %v3028, 1.0
    %v3039 = vlog2.pop %v3038
    %v3040 = vmul.f32 %v3039, 0.6931472
    %v3041 = vmul.f32 -0.5, %v3028
    %v3042 = vadd.f32 %v3041, 1.0
    %v3043 = vmul.f32 %v3042, %v3028
    %v3044 = vand.u32 2147483647, %v3028
    %vm3045 = vcmp.lt.f32.partialorder %v3044, 0.0004427343
    %v3046 = vsel %vm3045, %v3043, %v3040
    %v3047 = vsel %vm3021, %v2999, %v3037
    %v3048 = vsel %vm3022, %v3000, %v3046
    %3051 = vrot.lane.b32.xlu0 %v3047, 96
    %v3052 = vpop.permute.xlu0 %3051
    %3053 = vrot.lane.b32.xlu0 %v3048, 96
    %v3054 = vpop.permute.xlu0 %3053
    %v3057 = vmul.f32 %v3019, %v3052
    %v3058 = vmul.f32 %v3020, %v3054
    %v3059 = vadd.f32 %v2995, %v3057
    %v3060 = vadd.f32 %v2996, %v3058
    %v3061 = vsel %vm1225, %v3059, 0.0
    %v3062 = vsel %vm2118, %v3060, 0.0
    %v3063 = vadd.f32 %v3061, %v3062
    %v3064 = vrot.slane %v3063, 4
    %v3065 = vadd.f32 %v3063, %v3064
    %v3066 = vrot.slane %v3065, 2
    %v3067 = vadd.f32 %v3065, %v3066
    %v3068 = vrot.slane %v3067, 1
    %v3069 = vadd.f32 %v3067, %v3068
    %v3070 = vmul.f32 %v3069, 0.083333336
    %v3071 = vsub.f32 %v3059, %v3070
    %v3072 = vsub.f32 %v3060, %v3070
    %v3073 = vmul.f32 %v3071, %v3071
    %v3074 = vmul.f32 %v3072, %v3072
    %v3075 = vsel %vm1225, %v3073, 0.0
    %v3076 = vsel %vm2118, %v3074, 0.0
    %v3077 = vadd.f32 %v3075, %v3076
    %v3078 = vrot.slane %v3077, 4
    %v3079 = vadd.f32 %v3077, %v3078
    %v3080 = vrot.slane %v3079, 2
    %v3081 = vadd.f32 %v3079, %v3080
    %v3082 = vrot.slane %v3081, 1
    %v3083 = vadd.f32 %v3081, %v3082
    %v3084 = vmul.f32 %v3083, 0.083333336
    %s3085 = scalar_lea.vmem %s12, 1
    %v3086 = vld [vmem:[%s3085] sm:$0x1]
    %v3087 = vadd.f32 %v3084, 1e-05
    %v3088 = vrsqrt.pop %v3087
    %v3089 = vmul.f32 %v3086, %v3088
    %v3091 = vlaneseq
    %v3092 = vshrl.u32 %v3091, 7
    %v3093 = vsub.s32 0, %v3092
    %v3094 = vrot.slane %v3089, %v3093
    %v3096 = vmul.f32 %v3071, %v3094
    %v3097 = vmul.f32 %v3072, %v3094
    %s3098 = scalar_lea.vmem [#allocation14], 1
    %v3099 = vld [vmem:[%s3098] sm:$0x1]
    %v3101 = vlaneseq
    %v3102 = vshrl.u32 %v3101, 7
    %v3103 = vsub.s32 0, %v3102
    %v3104 = vrot.slane %v3099, %v3103
    %v3106 = vadd.f32 %v3096, %v3104
    %v3107 = vadd.f32 %v3097, %v3104
    %v3108 = vadd.f32 %v2191, %v3106
    %v3109 = vadd.f32 %v2192, %v3107
    %vm3110 = vcmp.gt.f32.partialorder %v3108, 20.0
    %vm3111 = vcmp.gt.f32.partialorder %v3109, 20.0
    %v3112 = vmin.f32 %v3108, 20.0
    %v3113 = vmin.f32 %v3109, 20.0
    %v3114 = vmul.f32 %v3112, 1.442695
    %v3115 = vpow.pop %v3114
    %v3116 = vmul.f32 %v3113, 1.442695
    %v3117 = vpow.pop %v3116
    %v3118 = vadd.f32 %v3115, 1.0
    %v3119 = vlog2.pop %v3118
    %v3120 = vmul.f32 %v3119, 0.6931472
    %v3121 = vmul.f32 -0.5, %v3115
    %v3122 = vadd.f32 %v3121, 1.0
    %v3123 = vmul.f32 %v3122, %v3115
    %v3124 = vand.u32 2147483647, %v3115
    %vm3125 = vcmp.lt.f32.partialorder %v3124, 0.0004427343
    %v3126 = vsel %vm3125, %v3123, %v3120
    %v3127 = vadd.f32 %v3117, 1.0
    %v3128 = vlog2.pop %v3127
    %v3129 = vmul.f32 %v3128, 0.6931472
    %v3130 = vmul.f32 -0.5, %v3117
    %v3131 = vadd.f32 %v3130, 1.0
    %v3132 = vmul.f32 %v3131, %v3117
    %v3133 = vand.u32 2147483647, %v3117
    %vm3134 = vcmp.lt.f32.partialorder %v3133, 0.0004427343
    %v3135 = vsel %vm3134, %v3132, %v3129
    %v3136 = vsel %vm3110, %v3108, %v3126
    %v3137 = vsel %vm3111, %v3109, %v3135
    %s3138 = scalar_lea.vmem %s6, 64
    %v3139 = vld [vmem:[%s3138] sm:$0xff]
    %v3140 = vld [vmem:[%s3138 + $0x8] sm:$0xff]
    %v3141 = vld [vmem:[%s3138 + $0x10] sm:$0xff]
    %v3142 = vld [vmem:[%s3138 + $0x18] sm:$0xff]
    %s3143 = scalar_lea.vmem [#allocation10], 2
    %v3144 = vld [vmem:[%s3143] sm:$0x1]
    %v3146 = vlaneseq
    %v3147 = vshrl.u32 %v3146, 7
    %v3148 = vsub.s32 0, %v3147
    %v3149 = vrot.slane %v3144, %v3148
    %v3152 = vsel %vm1225, %v3136, 0
    %v3155 = vsel %vm1225, %v3137, 0
    %3157 = vmatprep.subr.mxu0 0.0
    %3158 = vmatpush1.msra.mxu0 0.0
    %3159 = vmatprep.subr.mxu0 0.0
    %3160 = vmatpush1.msra.mxu0 0.0
    %3161 = vmatprep.subr.mxu0 0.0
    %3162 = vmatpush1.msra.mxu0 0.0
    %3163 = vmatprep.subr.mxu0 0.0
    %3164 = vmatpush1.msra.mxu0 0.0
    %3165 = vmatprep.subr.mxu0 0.0
    %3166 = vmatpush1.msra.mxu0 0.0
    %3167 = vmatprep.subr.mxu0 0.0
    %3168 = vmatpush1.msra.mxu0 0.0
    %3169 = vmatprep.subr.mxu0 0.0
    %3170 = vmatpush1.msra.mxu0 0.0
    %3171 = vmatprep.subr.mxu0 0.0
    %3172 = vmatpush1.msra.mxu0 0.0
    %3173 = vmatprep.subr.mxu0 0.0
    %3174 = vmatpush1.msra.mxu0 0.0
    %3175 = vmatprep.subr.mxu0 0.0
    %3176 = vmatpush1.msra.mxu0 0.0
    %3177 = vmatprep.subr.mxu0 0.0
    %3178 = vmatpush1.msra.mxu0 0.0
    %3179 = vmatprep.subr.mxu0 0.0
    %3180 = vmatpush1.msra.mxu0 0.0
    %3181 = vmatprep.subr.mxu0 0.0
    %3182 = vmatpush1.msra.mxu0 %v3142
    %3183 = vmatprep.subr.mxu0 0.0
    %3184 = vmatpush1.msra.mxu0 %v3141
    %3185 = vmatprep.subr.mxu0 0.0
    %3186 = vmatpush1.msra.mxu0 %v3140
    %3187 = vmatprep.subr.mxu0 0.0
    %3188 = vmatpush1.msra.mxu0 %v3139
    %3189 = vmatprep.subr.mxu0 0.0
    %3190 = vmatpush2.msra.mxu0 0.0
    %3191 = vmatprep.subr.mxu0 0.0
    %3192 = vmatpush2.msra.mxu0 0.0
    %3193 = vmatprep.subr.mxu0 0.0
    %3194 = vmatpush2.msra.mxu0 0.0
    %3195 = vmatprep.subr.mxu0 0.0
    %3196 = vmatpush2.msra.mxu0 0.0
    %3197 = vmatprep.subr.mxu0 0.0
    %3198 = vmatpush2.msra.mxu0 0.0
    %3199 = vmatprep.subr.mxu0 0.0
    %3200 = vmatpush2.msra.mxu0 0.0
    %3201 = vmatprep.subr.mxu0 0.0
    %3202 = vmatpush2.msra.mxu0 0.0
    %3203 = vmatprep.subr.mxu0 0.0
    %3204 = vmatpush2.msra.mxu0 0.0
    %3205 = vmatprep.subr.mxu0 0.0
    %3206 = vmatpush2.msra.mxu0 0.0
    %3207 = vmatprep.subr.mxu0 0.0
    %3208 = vmatpush2.msra.mxu0 0.0
    %3209 = vmatprep.subr.mxu0 0.0
    %3210 = vmatpush2.msra.mxu0 0.0
    %3211 = vmatprep.subr.mxu0 0.0
    %3212 = vmatpush2.msra.mxu0 0.0
    %3213 = vmatprep.subr.mxu0 0.0
    %3214 = vmatpush2.msra.mxu0 0.0
    %3215 = vmatprep.subr.mxu0 0.0
    %3216 = vmatpush2.msra.mxu0 0.0
    %3217 = vmatprep.subr.mxu0 0.0
    %3218 = vmatpush2.msra.mxu0 0.0
    %3219 = vmatprep.subr.mxu0 0.0
    %3220 = vmatpush2.msra.mxu0 0.0
    %3221 = vmatprep.mubr.f32.mxu0 0.0
    %3222 = vmatmul.mubr.f32.gmra.mxu0 %v3152
    %v3223 = vpop.f32.mrf.mxu0
    %v3224 = vadd.f32 %v3149, %v3223
    %v3225 = vpop.f32.mrf.mxu0
    %3226 = vmatprep.mubr.f32.mxu0 0.0
    %3227 = vmatmul.mubr.f32.gmra.mxu0 %v3155
    %v3228 = vpop.f32.mrf.mxu0
    %v3229 = vadd.f32 %v3149, %v3228
    %v3230 = vpop.f32.mrf.mxu0
    %3231 = vdwg.mxu0
    %s3232 = scalar_lea.vmem %s7, 64
    %v3233 = vld [vmem:[%s3232] sm:$0xff]
    %v3234 = vld [vmem:[%s3232 + $0x8] sm:$0xff]
    %v3235 = vld [vmem:[%s3232 + $0x10] sm:$0xff]
    %v3236 = vld [vmem:[%s3232 + $0x18] sm:$0xff]
    %3237 = vmatprep.subr.mxu0 0.0
    %3238 = vmatpush1.msra.mxu0 0.0
    %3239 = vmatprep.subr.mxu0 0.0
    %3240 = vmatpush1.msra.mxu0 0.0
    %3241 = vmatprep.subr.mxu0 0.0
    %3242 = vmatpush1.msra.mxu0 0.0
    %3243 = vmatprep.subr.mxu0 0.0
    %3244 = vmatpush1.msra.mxu0 0.0
    %3245 = vmatprep.subr.mxu0 0.0
    %3246 = vmatpush1.msra.mxu0 0.0
    %3247 = vmatprep.subr.mxu0 0.0
    %3248 = vmatpush1.msra.mxu0 0.0
    %3249 = vmatprep.subr.mxu0 0.0
    %3250 = vmatpush1.msra.mxu0 0.0
    %3251 = vmatprep.subr.mxu0 0.0
    %3252 = vmatpush1.msra.mxu0 0.0
    %3253 = vmatprep.subr.mxu0 0.0
    %3254 = vmatpush1.msra.mxu0 0.0
    %3255 = vmatprep.subr.mxu0 0.0
    %3256 = vmatpush1.msra.mxu0 0.0
    %3257 = vmatprep.subr.mxu0 0.0
    %3258 = vmatpush1.msra.mxu0 0.0
    %3259 = vmatprep.subr.mxu0 0.0
    %3260 = vmatpush1.msra.mxu0 0.0
    %3261 = vmatprep.subr.mxu0 0.0
    %3262 = vmatpush1.msra.mxu0 %v3236
    %3263 = vmatprep.subr.mxu0 0.0
    %3264 = vmatpush1.msra.mxu0 %v3235
    %3265 = vmatprep.subr.mxu0 0.0
    %3266 = vmatpush1.msra.mxu0 %v3234
    %3267 = vmatprep.subr.mxu0 0.0
    %3268 = vmatpush1.msra.mxu0 %v3233
    %3269 = vmatprep.subr.mxu0 0.0
    %3270 = vmatpush2.msra.mxu0 0.0
    %3271 = vmatprep.subr.mxu0 0.0
    %3272 = vmatpush2.msra.mxu0 0.0
    %3273 = vmatprep.subr.mxu0 0.0
    %3274 = vmatpush2.msra.mxu0 0.0
    %3275 = vmatprep.subr.mxu0 0.0
    %3276 = vmatpush2.msra.mxu0 0.0
    %3277 = vmatprep.subr.mxu0 0.0
    %3278 = vmatpush2.msra.mxu0 0.0
    %3279 = vmatprep.subr.mxu0 0.0
    %3280 = vmatpush2.msra.mxu0 0.0
    %3281 = vmatprep.subr.mxu0 0.0
    %3282 = vmatpush2.msra.mxu0 0.0
    %3283 = vmatprep.subr.mxu0 0.0
    %3284 = vmatpush2.msra.mxu0 0.0
    %3285 = vmatprep.subr.mxu0 0.0
    %3286 = vmatpush2.msra.mxu0 0.0
    %3287 = vmatprep.subr.mxu0 0.0
    %3288 = vmatpush2.msra.mxu0 0.0
    %3289 = vmatprep.subr.mxu0 0.0
    %3290 = vmatpush2.msra.mxu0 0.0
    %3291 = vmatprep.subr.mxu0 0.0
    %3292 = vmatpush2.msra.mxu0 0.0
    %3293 = vmatprep.subr.mxu0 0.0
    %3294 = vmatpush2.msra.mxu0 0.0
    %3295 = vmatprep.subr.mxu0 0.0
    %3296 = vmatpush2.msra.mxu0 0.0
    %3297 = vmatprep.subr.mxu0 0.0
    %3298 = vmatpush2.msra.mxu0 0.0
    %3299 = vmatprep.subr.mxu0 0.0
    %3300 = vmatpush2.msra.mxu0 0.0
    %3301 = vmatprep.mubr.f32.mxu0 0.0
    %3302 = vmatmul.mubr.f32.gmra.mxu0 %v3152
    %v3303 = vpop.f32.mrf.mxu0
    %v3304 = vadd.f32 0.0, %v3303
    %v3305 = vpop.f32.mrf.mxu0
    %3306 = vmatprep.mubr.f32.mxu0 0.0
    %3307 = vmatmul.mubr.f32.gmra.mxu0 %v3155
    %v3308 = vpop.f32.mrf.mxu0
    %v3309 = vadd.f32 0.0, %v3308
    %v3310 = vpop.f32.mrf.mxu0
    %3311 = vdwg.mxu0
    %v3313 = vsel %vm1395, %v3309, 0
    %3315 = vmatprep.subr.mxu0 0.0
    %3316 = vmatpush1.msra.mxu0 0.0
    %3317 = vmatprep.subr.mxu0 0.0
    %3318 = vmatpush1.msra.mxu0 0.0
    %3319 = vmatprep.subr.mxu0 0.0
    %3320 = vmatpush1.msra.mxu0 0.0
    %3321 = vmatprep.subr.mxu0 0.0
    %3322 = vmatpush1.msra.mxu0 0.0
    %3323 = vmatprep.subr.mxu0 0.0
    %3324 = vmatpush1.msra.mxu0 0.0
    %3325 = vmatprep.subr.mxu0 0.0
    %3326 = vmatpush1.msra.mxu0 0.0
    %3327 = vmatprep.subr.mxu0 0.0
    %3328 = vmatpush1.msra.mxu0 0.0
    %3329 = vmatprep.subr.mxu0 0.0
    %3330 = vmatpush1.msra.mxu0 0.0
    %3331 = vmatprep.subr.mxu0 0.0
    %3332 = vmatpush1.msra.mxu0 0.0
    %3333 = vmatprep.subr.mxu0 0.0
    %3334 = vmatpush1.msra.mxu0 0.0
    %3335 = vmatprep.subr.mxu0 0.0
    %3336 = vmatpush1.msra.mxu0 0.0
    %3337 = vmatprep.subr.mxu0 0.0
    %3338 = vmatpush1.msra.mxu0 0.0
    %3339 = vmatprep.subr.mxu0 0.0
    %3340 = vmatpush1.msra.mxu0 0.0
    %3341 = vmatprep.subr.mxu0 0.0
    %3342 = vmatpush1.msra.mxu0 0.0
    %3343 = vmatprep.subr.mxu0 0.0
    %3344 = vmatpush1.msra.mxu0 %v3313
    %3345 = vmatprep.subr.mxu0 0.0
    %3346 = vmatpush1.msra.mxu0 %v3304
    %3347 = vmatprep.subr.mxu0 0.0
    %3348 = vmatpush2.msra.mxu0 0.0
    %3349 = vmatprep.subr.mxu0 0.0
    %3350 = vmatpush2.msra.mxu0 0.0
    %3351 = vmatprep.subr.mxu0 0.0
    %3352 = vmatpush2.msra.mxu0 0.0
    %3353 = vmatprep.subr.mxu0 0.0
    %3354 = vmatpush2.msra.mxu0 0.0
    %3355 = vmatprep.subr.mxu0 0.0
    %3356 = vmatpush2.msra.mxu0 0.0
    %3357 = vmatprep.subr.mxu0 0.0
    %3358 = vmatpush2.msra.mxu0 0.0
    %3359 = vmatprep.subr.mxu0 0.0
    %3360 = vmatpush2.msra.mxu0 0.0
    %3361 = vmatprep.subr.mxu0 0.0
    %3362 = vmatpush2.msra.mxu0 0.0
    %3363 = vmatprep.subr.mxu0 0.0
    %3364 = vmatpush2.msra.mxu0 0.0
    %3365 = vmatprep.subr.mxu0 0.0
    %3366 = vmatpush2.msra.mxu0 0.0
    %3367 = vmatprep.subr.mxu0 0.0
    %3368 = vmatpush2.msra.mxu0 0.0
    %3369 = vmatprep.subr.mxu0 0.0
    %3370 = vmatpush2.msra.mxu0 0.0
    %3371 = vmatprep.subr.mxu0 0.0
    %3372 = vmatpush2.msra.mxu0 0.0
    %3373 = vmatprep.subr.mxu0 0.0
    %3374 = vmatpush2.msra.mxu0 0.0
    %3375 = vmatprep.subr.mxu0 0.0
    %3376 = vmatpush2.msra.mxu0 0.0
    %3377 = vmatprep.subr.mxu0 0.0
    %3378 = vmatpush2.msra.mxu0 0.0
    %3379 = vmatprep.mubr.f32.mxu0 0.0
    %3380 = vmatmul.mubr.f32.gmra.mxu0 %v1390
    %v3381 = vpop.f32.mrf.mxu0
    %v3382 = vadd.f32 0.0, %v3381
    %v3383 = vpop.f32.mrf.mxu0
    %3384 = vmatprep.mubr.f32.mxu0 0.0
    %3385 = vmatmul.mubr.f32.gmra.mxu0 %v1393
    %v3386 = vpop.f32.mrf.mxu0
    %v3387 = vadd.f32 0.0, %v3386
    %v3388 = vpop.f32.mrf.mxu0
    %3389 = vdwg.mxu0
    %v3390 = vadd.f32 %v3224, %v3382
    %v3391 = vadd.f32 %v3229, %v3387
    %v3392 = vadd.f32 %v3390, %v981
    %v3393 = vadd.f32 %v3391, %v986
    %3394 = vmatprep.subr.mxu0 0.0
    %3395 = vmatpush1.msra.mxu0 0.0
    %3396 = vmatprep.subr.mxu0 0.0
    %3397 = vmatpush1.msra.mxu0 0.0
    %3398 = vmatprep.subr.mxu0 0.0
    %3399 = vmatpush1.msra.mxu0 0.0
    %3400 = vmatprep.subr.mxu0 0.0
    %3401 = vmatpush1.msra.mxu0 0.0
    %3402 = vmatprep.subr.mxu0 0.0
    %3403 = vmatpush1.msra.mxu0 0.0
    %3404 = vmatprep.subr.mxu0 0.0
    %3405 = vmatpush1.msra.mxu0 0.0
    %3406 = vmatprep.subr.mxu0 0.0
    %3407 = vmatpush1.msra.mxu0 0.0
    %3408 = vmatprep.subr.mxu0 0.0
    %3409 = vmatpush1.msra.mxu0 0.0
    %3410 = vmatprep.subr.mxu0 0.0
    %3411 = vmatpush1.msra.mxu0 0.0
    %3412 = vmatprep.subr.mxu0 0.0
    %3413 = vmatpush1.msra.mxu0 0.0
    %3414 = vmatprep.subr.mxu0 0.0
    %3415 = vmatpush1.msra.mxu0 0.0
    %3416 = vmatprep.subr.mxu0 0.0
    %3417 = vmatpush1.msra.mxu0 0.0
    %3418 = vmatprep.subr.mxu0 0.0
    %3419 = vmatpush1.msra.mxu0 0.0
    %3420 = vmatprep.subr.mxu0 0.0
    %3421 = vmatpush1.msra.mxu0 0.0
    %3422 = vmatprep.subr.mxu0 0.0
    %3423 = vmatpush1.msra.mxu0 %v3313
    %3424 = vmatprep.subr.mxu0 0.0
    %3425 = vmatpush1.msra.mxu0 %v3304
    %3426 = vmatprep.subr.mxu0 0.0
    %3427 = vmatpush2.msra.mxu0 0.0
    %3428 = vmatprep.subr.mxu0 0.0
    %3429 = vmatpush2.msra.mxu0 0.0
    %3430 = vmatprep.subr.mxu0 0.0
    %3431 = vmatpush2.msra.mxu0 0.0
    %3432 = vmatprep.subr.mxu0 0.0
    %3433 = vmatpush2.msra.mxu0 0.0
    %3434 = vmatprep.subr.mxu0 0.0
    %3435 = vmatpush2.msra.mxu0 0.0
    %3436 = vmatprep.subr.mxu0 0.0
    %3437 = vmatpush2.msra.mxu0 0.0
    %3438 = vmatprep.subr.mxu0 0.0
    %3439 = vmatpush2.msra.mxu0 0.0
    %3440 = vmatprep.subr.mxu0 0.0
    %3441 = vmatpush2.msra.mxu0 0.0
    %3442 = vmatprep.subr.mxu0 0.0
    %3443 = vmatpush2.msra.mxu0 0.0
    %3444 = vmatprep.subr.mxu0 0.0
    %3445 = vmatpush2.msra.mxu0 0.0
    %3446 = vmatprep.subr.mxu0 0.0
    %3447 = vmatpush2.msra.mxu0 0.0
    %3448 = vmatprep.subr.mxu0 0.0
    %3449 = vmatpush2.msra.mxu0 0.0
    %3450 = vmatprep.subr.mxu0 0.0
    %3451 = vmatpush2.msra.mxu0 0.0
    %3452 = vmatprep.subr.mxu0 0.0
    %3453 = vmatpush2.msra.mxu0 0.0
    %3454 = vmatprep.subr.mxu0 0.0
    %3455 = vmatpush2.msra.mxu0 0.0
    %3456 = vmatprep.subr.mxu0 0.0
    %3457 = vmatpush2.msra.mxu0 0.0
    %3458 = vmatprep.mubr.f32.mxu0 0.0
    %3459 = vmatmul.mubr.f32.gmra.mxu0 %v1482
    %v3460 = vpop.f32.mrf.mxu0
    %v3461 = vadd.f32 0.0, %v3460
    %v3462 = vpop.f32.mrf.mxu0
    %3463 = vmatprep.mubr.f32.mxu0 0.0
    %3464 = vmatmul.mubr.f32.gmra.mxu0 %v1485
    %v3465 = vpop.f32.mrf.mxu0
    %v3466 = vadd.f32 0.0, %v3465
    %v3467 = vpop.f32.mrf.mxu0
    %3468 = vdwg.mxu0
    %v3469 = vadd.f32 %v3224, %v3461
    %v3470 = vadd.f32 %v3229, %v3466
    %v3471 = vadd.f32 %v3469, %v1056
    %v3472 = vadd.f32 %v3470, %v1061
    %3473 = vmatprep.subr.mxu0 0.0
    %3474 = vmatpush1.msra.mxu0 0.0
    %3475 = vmatprep.subr.mxu0 0.0
    %3476 = vmatpush1.msra.mxu0 0.0
    %3477 = vmatprep.subr.mxu0 0.0
    %3478 = vmatpush1.msra.mxu0 0.0
    %3479 = vmatprep.subr.mxu0 0.0
    %3480 = vmatpush1.msra.mxu0 0.0
    %3481 = vmatprep.subr.mxu0 0.0
    %3482 = vmatpush1.msra.mxu0 0.0
    %3483 = vmatprep.subr.mxu0 0.0
    %3484 = vmatpush1.msra.mxu0 0.0
    %3485 = vmatprep.subr.mxu0 0.0
    %3486 = vmatpush1.msra.mxu0 0.0
    %3487 = vmatprep.subr.mxu0 0.0
    %3488 = vmatpush1.msra.mxu0 0.0
    %3489 = vmatprep.subr.mxu0 0.0
    %3490 = vmatpush1.msra.mxu0 0.0
    %3491 = vmatprep.subr.mxu0 0.0
    %3492 = vmatpush1.msra.mxu0 0.0
    %3493 = vmatprep.subr.mxu0 0.0
    %3494 = vmatpush1.msra.mxu0 0.0
    %3495 = vmatprep.subr.mxu0 0.0
    %3496 = vmatpush1.msra.mxu0 0.0
    %3497 = vmatprep.subr.mxu0 0.0
    %3498 = vmatpush1.msra.mxu0 0.0
    %3499 = vmatprep.subr.mxu0 0.0
    %3500 = vmatpush1.msra.mxu0 0.0
    %3501 = vmatprep.subr.mxu0 0.0
    %3502 = vmatpush1.msra.mxu0 %v3313
    %3503 = vmatprep.subr.mxu0 0.0
    %3504 = vmatpush1.msra.mxu0 %v3304
    %3505 = vmatprep.subr.mxu0 0.0
    %3506 = vmatpush2.msra.mxu0 0.0
    %3507 = vmatprep.subr.mxu0 0.0
    %3508 = vmatpush2.msra.mxu0 0.0
    %3509 = vmatprep.subr.mxu0 0.0
    %3510 = vmatpush2.msra.mxu0 0.0
    %3511 = vmatprep.subr.mxu0 0.0
    %3512 = vmatpush2.msra.mxu0 0.0
    %3513 = vmatprep.subr.mxu0 0.0
    %3514 = vmatpush2.msra.mxu0 0.0
    %3515 = vmatprep.subr.mxu0 0.0
    %3516 = vmatpush2.msra.mxu0 0.0
    %3517 = vmatprep.subr.mxu0 0.0
    %3518 = vmatpush2.msra.mxu0 0.0
    %3519 = vmatprep.subr.mxu0 0.0
    %3520 = vmatpush2.msra.mxu0 0.0
    %3521 = vmatprep.subr.mxu0 0.0
    %3522 = vmatpush2.msra.mxu0 0.0
    %3523 = vmatprep.subr.mxu0 0.0
    %3524 = vmatpush2.msra.mxu0 0.0
    %3525 = vmatprep.subr.mxu0 0.0
    %3526 = vmatpush2.msra.mxu0 0.0
    %3527 = vmatprep.subr.mxu0 0.0
    %3528 = vmatpush2.msra.mxu0 0.0
    %3529 = vmatprep.subr.mxu0 0.0
    %3530 = vmatpush2.msra.mxu0 0.0
    %3531 = vmatprep.subr.mxu0 0.0
    %3532 = vmatpush2.msra.mxu0 0.0
    %3533 = vmatprep.subr.mxu0 0.0
    %3534 = vmatpush2.msra.mxu0 0.0
    %3535 = vmatprep.subr.mxu0 0.0
    %3536 = vmatpush2.msra.mxu0 0.0
    %3537 = vmatprep.mubr.f32.mxu0 0.0
    %3538 = vmatmul.mubr.f32.gmra.mxu0 %v1570
    %v3539 = vpop.f32.mrf.mxu0
    %v3540 = vadd.f32 0.0, %v3539
    %v3541 = vpop.f32.mrf.mxu0
    %3542 = vmatprep.mubr.f32.mxu0 0.0
    %3543 = vmatmul.mubr.f32.gmra.mxu0 %v1573
    %v3544 = vpop.f32.mrf.mxu0
    %v3545 = vadd.f32 0.0, %v3544
    %v3546 = vpop.f32.mrf.mxu0
    %3547 = vdwg.mxu0
    %v3548 = vadd.f32 %v3224, %v3540
    %v3549 = vadd.f32 %v3229, %v3545
    %v3550 = vadd.f32 %v3548, %v1131
    %v3551 = vadd.f32 %v3549, %v1136
    %3552 = vmatprep.subr.mxu0 0.0
    %3553 = vmatpush1.msra.mxu0 0.0
    %3554 = vmatprep.subr.mxu0 0.0
    %3555 = vmatpush1.msra.mxu0 0.0
    %3556 = vmatprep.subr.mxu0 0.0
    %3557 = vmatpush1.msra.mxu0 0.0
    %3558 = vmatprep.subr.mxu0 0.0
    %3559 = vmatpush1.msra.mxu0 0.0
    %3560 = vmatprep.subr.mxu0 0.0
    %3561 = vmatpush1.msra.mxu0 0.0
    %3562 = vmatprep.subr.mxu0 0.0
    %3563 = vmatpush1.msra.mxu0 0.0
    %3564 = vmatprep.subr.mxu0 0.0
    %3565 = vmatpush1.msra.mxu0 0.0
    %3566 = vmatprep.subr.mxu0 0.0
    %3567 = vmatpush1.msra.mxu0 0.0
    %3568 = vmatprep.subr.mxu0 0.0
    %3569 = vmatpush1.msra.mxu0 0.0
    %3570 = vmatprep.subr.mxu0 0.0
    %3571 = vmatpush1.msra.mxu0 0.0
    %3572 = vmatprep.subr.mxu0 0.0
    %3573 = vmatpush1.msra.mxu0 0.0
    %3574 = vmatprep.subr.mxu0 0.0
    %3575 = vmatpush1.msra.mxu0 0.0
    %3576 = vmatprep.subr.mxu0 0.0
    %3577 = vmatpush1.msra.mxu0 0.0
    %3578 = vmatprep.subr.mxu0 0.0
    %3579 = vmatpush1.msra.mxu0 0.0
    %3580 = vmatprep.subr.mxu0 0.0
    %3581 = vmatpush1.msra.mxu0 %v3313
    %3582 = vmatprep.subr.mxu0 0.0
    %3583 = vmatpush1.msra.mxu0 %v3304
    %3584 = vmatprep.subr.mxu0 0.0
    %3585 = vmatpush2.msra.mxu0 0.0
    %3586 = vmatprep.subr.mxu0 0.0
    %3587 = vmatpush2.msra.mxu0 0.0
    %3588 = vmatprep.subr.mxu0 0.0
    %3589 = vmatpush2.msra.mxu0 0.0
    %3590 = vmatprep.subr.mxu0 0.0
    %3591 = vmatpush2.msra.mxu0 0.0
    %3592 = vmatprep.subr.mxu0 0.0
    %3593 = vmatpush2.msra.mxu0 0.0
    %3594 = vmatprep.subr.mxu0 0.0
    %3595 = vmatpush2.msra.mxu0 0.0
    %3596 = vmatprep.subr.mxu0 0.0
    %3597 = vmatpush2.msra.mxu0 0.0
    %3598 = vmatprep.subr.mxu0 0.0
    %3599 = vmatpush2.msra.mxu0 0.0
    %3600 = vmatprep.subr.mxu0 0.0
    %3601 = vmatpush2.msra.mxu0 0.0
    %3602 = vmatprep.subr.mxu0 0.0
    %3603 = vmatpush2.msra.mxu0 0.0
    %3604 = vmatprep.subr.mxu0 0.0
    %3605 = vmatpush2.msra.mxu0 0.0
    %3606 = vmatprep.subr.mxu0 0.0
    %3607 = vmatpush2.msra.mxu0 0.0
    %3608 = vmatprep.subr.mxu0 0.0
    %3609 = vmatpush2.msra.mxu0 0.0
    %3610 = vmatprep.subr.mxu0 0.0
    %3611 = vmatpush2.msra.mxu0 0.0
    %3612 = vmatprep.subr.mxu0 0.0
    %3613 = vmatpush2.msra.mxu0 0.0
    %3614 = vmatprep.subr.mxu0 0.0
    %3615 = vmatpush2.msra.mxu0 0.0
    %3616 = vmatprep.mubr.f32.mxu0 0.0
    %3617 = vmatmul.mubr.f32.gmra.mxu0 %v1658
    %v3618 = vpop.f32.mrf.mxu0
    %v3619 = vadd.f32 0.0, %v3618
    %v3620 = vpop.f32.mrf.mxu0
    %3621 = vmatprep.mubr.f32.mxu0 0.0
    %3622 = vmatmul.mubr.f32.gmra.mxu0 %v1661
    %v3623 = vpop.f32.mrf.mxu0
    %v3624 = vadd.f32 0.0, %v3623
    %v3625 = vpop.f32.mrf.mxu0
    %3626 = vdwg.mxu0
    %v3627 = vadd.f32 %v3224, %v3619
    %v3628 = vadd.f32 %v3229, %v3624
    %v3629 = vadd.f32 %v3627, %v1206
    %v3630 = vadd.f32 %v3628, %v1211
    %v3631 = vsel %vm1742, %v3392, 0.0
    %v3632 = vsel %vm1744, %v3393, 0.0
    %v3633 = vadd.f32 %v3631, %v3632
    %v3634 = vrot.slane %v3633, 4
    %v3635 = vadd.f32 %v3633, %v3634
    %v3636 = vrot.slane %v3635, 2
    %v3637 = vadd.f32 %v3635, %v3636
    %v3638 = vrot.slane %v3637, 1
    %v3639 = vadd.f32 %v3637, %v3638
    %v3640 = vadd.f32 %v3639, 0.0
    %v3641 = vsel %vm1742, %v3471, 0.0
    %v3642 = vsel %vm1744, %v3472, 0.0
    %v3643 = vadd.f32 %v3641, %v3642
    %v3644 = vrot.slane %v3643, 4
    %v3645 = vadd.f32 %v3643, %v3644
    %v3646 = vrot.slane %v3645, 2
    %v3647 = vadd.f32 %v3645, %v3646
    %v3648 = vrot.slane %v3647, 1
    %v3649 = vadd.f32 %v3647, %v3648
    %v3650 = vadd.f32 %v3640, %v3649
    %v3651 = vsel %vm1742, %v3550, 0.0
    %v3652 = vsel %vm1744, %v3551, 0.0
    %v3653 = vadd.f32 %v3651, %v3652
    %v3654 = vrot.slane %v3653, 4
    %v3655 = vadd.f32 %v3653, %v3654
    %v3656 = vrot.slane %v3655, 2
    %v3657 = vadd.f32 %v3655, %v3656
    %v3658 = vrot.slane %v3657, 1
    %v3659 = vadd.f32 %v3657, %v3658
    %v3660 = vadd.f32 %v3650, %v3659
    %v3661 = vsel %vm1742, %v3629, 0.0
    %v3662 = vsel %vm1744, %v3630, 0.0
    %v3663 = vadd.f32 %v3661, %v3662
    %v3664 = vrot.slane %v3663, 4
    %v3665 = vadd.f32 %v3663, %v3664
    %v3666 = vrot.slane %v3665, 2
    %v3667 = vadd.f32 %v3665, %v3666
    %v3668 = vrot.slane %v3667, 1
    %v3669 = vadd.f32 %v3667, %v3668
    %v3670 = vadd.f32 %v3660, %v3669
    %v3671 = vmul.f32 %v3670, 0.020833334
    %v3672 = vsub.f32 %v3392, %v3671
    %v3673 = vsub.f32 %v3393, %v3671
    %v3674 = vmul.f32 %v3672, %v3672
    %v3675 = vmul.f32 %v3673, %v3673
    %v3676 = vsel %vm1742, %v3674, 0.0
    %v3677 = vsel %vm1744, %v3675, 0.0
    %v3678 = vadd.f32 %v3676, %v3677
    %v3679 = vrot.slane %v3678, 4
    %v3680 = vadd.f32 %v3678, %v3679
    %v3681 = vrot.slane %v3680, 2
    %v3682 = vadd.f32 %v3680, %v3681
    %v3683 = vrot.slane %v3682, 1
    %v3684 = vadd.f32 %v3682, %v3683
    %v3685 = vadd.f32 %v3684, 0.0
    %v3686 = vsub.f32 %v3471, %v3671
    %v3687 = vsub.f32 %v3472, %v3671
    %v3688 = vmul.f32 %v3686, %v3686
    %v3689 = vmul.f32 %v3687, %v3687
    %v3690 = vsel %vm1742, %v3688, 0.0
    %v3691 = vsel %vm1744, %v3689, 0.0
    %v3692 = vadd.f32 %v3690, %v3691
    %v3693 = vrot.slane %v3692, 4
    %v3694 = vadd.f32 %v3692, %v3693
    %v3695 = vrot.slane %v3694, 2
    %v3696 = vadd.f32 %v3694, %v3695
    %v3697 = vrot.slane %v3696, 1
    %v3698 = vadd.f32 %v3696, %v3697
    %v3699 = vadd.f32 %v3685, %v3698
    %v3700 = vsub.f32 %v3550, %v3671
    %v3701 = vsub.f32 %v3551, %v3671
    %v3702 = vmul.f32 %v3700, %v3700
    %v3703 = vmul.f32 %v3701, %v3701
    %v3704 = vsel %vm1742, %v3702, 0.0
    %v3705 = vsel %vm1744, %v3703, 0.0
    %v3706 = vadd.f32 %v3704, %v3705
    %v3707 = vrot.slane %v3706, 4
    %v3708 = vadd.f32 %v3706, %v3707
    %v3709 = vrot.slane %v3708, 2
    %v3710 = vadd.f32 %v3708, %v3709
    %v3711 = vrot.slane %v3710, 1
    %v3712 = vadd.f32 %v3710, %v3711
    %v3713 = vadd.f32 %v3699, %v3712
    %v3714 = vsub.f32 %v3629, %v3671
    %v3715 = vsub.f32 %v3630, %v3671
    %v3716 = vmul.f32 %v3714, %v3714
    %v3717 = vmul.f32 %v3715, %v3715
    %v3718 = vsel %vm1742, %v3716, 0.0
    %v3719 = vsel %vm1744, %v3717, 0.0
    %v3720 = vadd.f32 %v3718, %v3719
    %v3721 = vrot.slane %v3720, 4
    %v3722 = vadd.f32 %v3720, %v3721
    %v3723 = vrot.slane %v3722, 2
    %v3724 = vadd.f32 %v3722, %v3723
    %v3725 = vrot.slane %v3724, 1
    %v3726 = vadd.f32 %v3724, %v3725
    %v3727 = vadd.f32 %v3713, %v3726
    %v3728 = vmul.f32 %v3727, 0.020833334
    %s3729 = scalar_lea.vmem [#allocation11], 2
    %v3730 = vld [vmem:[%s3729] sm:$0x1]
    %v3731 = vadd.f32 %v3728, 1e-05
    %v3732 = vrsqrt.pop %v3731
    %v3733 = vmul.f32 %v3730, %v3732
    %s3734 = scalar_lea.vmem [#allocation13], 2
    %v3735 = vld [vmem:[%s3734] sm:$0x1]
    %v3736 = vmul.f32 %v3671, %v3733
    %v3737 = vsub.f32 %v3735, %v3736
    %v3739 = vlaneseq
    %v3740 = vshrl.u32 %v3739, 7
    %v3741 = vsub.s32 0, %v3740
    %v3742 = vrot.slane %v3733, %v3741
    %v3744 = vmul.f32 %v3392, %v3742
    %v3745 = vmul.f32 %v3393, %v3742
    %v3747 = vlaneseq
    %v3748 = vshrl.u32 %v3747, 7
    %v3749 = vsub.s32 0, %v3748
    %v3750 = vrot.slane %v3737, %v3749
    %v3752 = vadd.f32 %v3744, %v3750
    %v3753 = vadd.f32 %v3745, %v3750
    %v3754 = vand.u32 2147483647, %v3752
    %v3755 = vand.u32 2147483647, %v3753
    %v3756 = vsub.f32 0.0, %v3754
    %v3757 = vsub.f32 0.0, %v3755
    %v3758 = vmul.f32 %v3756, 1.442695
    %v3759 = vpow.pop %v3758
    %v3760 = vmul.f32 %v3757, 1.442695
    %v3761 = vpow.pop %v3760
    %v3762 = vadd.f32 %v3759, 1.0
    %v3763 = vadd.f32 %v3761, 1.0
    %v3764 = vrcp.pop %v3762
    %v3765 = vmul.f32 1.0, %v3764
    %v3766 = vrcp.pop %v3763
    %v3767 = vmul.f32 1.0, %v3766
    %vm3768 = vcmp.ge.f32.partialorder %v3752, 0.0
    %vm3769 = vcmp.ge.f32.partialorder %v3753, 0.0
    %v3770 = vmul.f32 %v3759, %v3765
    %v3771 = vmul.f32 %v3761, %v3767
    %v3772 = vsel %vm3768, %v3765, %v3770
    %v3773 = vsel %vm3769, %v3767, %v3771
    %vm3774 = vcmp.gt.f32.partialorder %v3752, 20.0
    %vm3775 = vcmp.gt.f32.partialorder %v3753, 20.0
    %v3776 = vmin.f32 %v3752, 20.0
    %v3777 = vmin.f32 %v3753, 20.0
    %v3778 = vmul.f32 %v3776, 1.442695
    %v3779 = vpow.pop %v3778
    %v3780 = vmul.f32 %v3777, 1.442695
    %v3781 = vpow.pop %v3780
    %v3782 = vadd.f32 %v3779, 1.0
    %v3783 = vlog2.pop %v3782
    %v3784 = vmul.f32 %v3783, 0.6931472
    %v3785 = vmul.f32 -0.5, %v3779
    %v3786 = vadd.f32 %v3785, 1.0
    %v3787 = vmul.f32 %v3786, %v3779
    %v3788 = vand.u32 2147483647, %v3779
    %vm3789 = vcmp.lt.f32.partialorder %v3788, 0.0004427343
    %v3790 = vsel %vm3789, %v3787, %v3784
    %v3791 = vadd.f32 %v3781, 1.0
    %v3792 = vlog2.pop %v3791
    %v3793 = vmul.f32 %v3792, 0.6931472
    %v3794 = vmul.f32 -0.5, %v3781
    %v3795 = vadd.f32 %v3794, 1.0
    %v3796 = vmul.f32 %v3795, %v3781
    %v3797 = vand.u32 2147483647, %v3781
    %vm3798 = vcmp.lt.f32.partialorder %v3797, 0.0004427343
    %v3799 = vsel %vm3798, %v3796, %v3793
    %v3800 = vsel %vm3774, %v3752, %v3790
    %v3801 = vsel %vm3775, %v3753, %v3799
    %3804 = vrot.lane.b32.xlu0 %v3800, 96
    %v3805 = vpop.permute.xlu0 %3804
    %3806 = vrot.lane.b32.xlu0 %v3801, 96
    %v3807 = vpop.permute.xlu0 %3806
    %v3810 = vmul.f32 %v3772, %v3805
    %v3811 = vmul.f32 %v3773, %v3807
    %v3812 = vadd.f32 %v3810, 0.0
    %v3813 = vadd.f32 %v3811, 0.0
    %v3814 = vmul.f32 %v3471, %v3742
    %v3815 = vmul.f32 %v3472, %v3742
    %v3816 = vadd.f32 %v3814, %v3750
    %v3817 = vadd.f32 %v3815, %v3750
    %v3818 = vand.u32 2147483647, %v3816
    %v3819 = vand.u32 2147483647, %v3817
    %v3820 = vsub.f32 0.0, %v3818
    %v3821 = vsub.f32 0.0, %v3819
    %v3822 = vmul.f32 %v3820, 1.442695
    %v3823 = vpow.pop %v3822
    %v3824 = vmul.f32 %v3821, 1.442695
    %v3825 = vpow.pop %v3824
    %v3826 = vadd.f32 %v3823, 1.0
    %v3827 = vadd.f32 %v3825, 1.0
    %v3828 = vrcp.pop %v3826
    %v3829 = vmul.f32 1.0, %v3828
    %v3830 = vrcp.pop %v3827
    %v3831 = vmul.f32 1.0, %v3830
    %vm3832 = vcmp.ge.f32.partialorder %v3816, 0.0
    %vm3833 = vcmp.ge.f32.partialorder %v3817, 0.0
    %v3834 = vmul.f32 %v3823, %v3829
    %v3835 = vmul.f32 %v3825, %v3831
    %v3836 = vsel %vm3832, %v3829, %v3834
    %v3837 = vsel %vm3833, %v3831, %v3835
    %vm3838 = vcmp.gt.f32.partialorder %v3816, 20.0
    %vm3839 = vcmp.gt.f32.partialorder %v3817, 20.0
    %v3840 = vmin.f32 %v3816, 20.0
    %v3841 = vmin.f32 %v3817, 20.0
    %v3842 = vmul.f32 %v3840, 1.442695
    %v3843 = vpow.pop %v3842
    %v3844 = vmul.f32 %v3841, 1.442695
    %v3845 = vpow.pop %v3844
    %v3846 = vadd.f32 %v3843, 1.0
    %v3847 = vlog2.pop %v3846
    %v3848 = vmul.f32 %v3847, 0.6931472
    %v3849 = vmul.f32 -0.5, %v3843
    %v3850 = vadd.f32 %v3849, 1.0
    %v3851 = vmul.f32 %v3850, %v3843
    %v3852 = vand.u32 2147483647, %v3843
    %vm3853 = vcmp.lt.f32.partialorder %v3852, 0.0004427343
    %v3854 = vsel %vm3853, %v3851, %v3848
    %v3855 = vadd.f32 %v3845, 1.0
    %v3856 = vlog2.pop %v3855
    %v3857 = vmul.f32 %v3856, 0.6931472
    %v3858 = vmul.f32 -0.5, %v3845
    %v3859 = vadd.f32 %v3858, 1.0
    %v3860 = vmul.f32 %v3859, %v3845
    %v3861 = vand.u32 2147483647, %v3845
    %vm3862 = vcmp.lt.f32.partialorder %v3861, 0.0004427343
    %v3863 = vsel %vm3862, %v3860, %v3857
    %v3864 = vsel %vm3838, %v3816, %v3854
    %v3865 = vsel %vm3839, %v3817, %v3863
    %3868 = vrot.lane.b32.xlu0 %v3864, 96
    %v3869 = vpop.permute.xlu0 %3868
    %3870 = vrot.lane.b32.xlu0 %v3865, 96
    %v3871 = vpop.permute.xlu0 %3870
    %v3874 = vmul.f32 %v3836, %v3869
    %v3875 = vmul.f32 %v3837, %v3871
    %v3876 = vadd.f32 %v3812, %v3874
    %v3877 = vadd.f32 %v3813, %v3875
    %v3878 = vmul.f32 %v3550, %v3742
    %v3879 = vmul.f32 %v3551, %v3742
    %v3880 = vadd.f32 %v3878, %v3750
    %v3881 = vadd.f32 %v3879, %v3750
    %v3882 = vand.u32 2147483647, %v3880
    %v3883 = vand.u32 2147483647, %v3881
    %v3884 = vsub.f32 0.0, %v3882
    %v3885 = vsub.f32 0.0, %v3883
    %v3886 = vmul.f32 %v3884, 1.442695
    %v3887 = vpow.pop %v3886
    %v3888 = vmul.f32 %v3885, 1.442695
    %v3889 = vpow.pop %v3888
    %v3890 = vadd.f32 %v3887, 1.0
    %v3891 = vadd.f32 %v3889, 1.0
    %v3892 = vrcp.pop %v3890
    %v3893 = vmul.f32 1.0, %v3892
    %v3894 = vrcp.pop %v3891
    %v3895 = vmul.f32 1.0, %v3894
    %vm3896 = vcmp.ge.f32.partialorder %v3880, 0.0
    %vm3897 = vcmp.ge.f32.partialorder %v3881, 0.0
    %v3898 = vmul.f32 %v3887, %v3893
    %v3899 = vmul.f32 %v3889, %v3895
    %v3900 = vsel %vm3896, %v3893, %v3898
    %v3901 = vsel %vm3897, %v3895, %v3899
    %vm3902 = vcmp.gt.f32.partialorder %v3880, 20.0
    %vm3903 = vcmp.gt.f32.partialorder %v3881, 20.0
    %v3904 = vmin.f32 %v3880, 20.0
    %v3905 = vmin.f32 %v3881, 20.0
    %v3906 = vmul.f32 %v3904, 1.442695
    %v3907 = vpow.pop %v3906
    %v3908 = vmul.f32 %v3905, 1.442695
    %v3909 = vpow.pop %v3908
    %v3910 = vadd.f32 %v3907, 1.0
    %v3911 = vlog2.pop %v3910
    %v3912 = vmul.f32 %v3911, 0.6931472
    %v3913 = vmul.f32 -0.5, %v3907
    %v3914 = vadd.f32 %v3913, 1.0
    %v3915 = vmul.f32 %v3914, %v3907
    %v3916 = vand.u32 2147483647, %v3907
    %vm3917 = vcmp.lt.f32.partialorder %v3916, 0.0004427343
    %v3918 = vsel %vm3917, %v3915, %v3912
    %v3919 = vadd.f32 %v3909, 1.0
    %v3920 = vlog2.pop %v3919
    %v3921 = vmul.f32 %v3920, 0.6931472
    %v3922 = vmul.f32 -0.5, %v3909
    %v3923 = vadd.f32 %v3922, 1.0
    %v3924 = vmul.f32 %v3923, %v3909
    %v3925 = vand.u32 2147483647, %v3909
    %vm3926 = vcmp.lt.f32.partialorder %v3925, 0.0004427343
    %v3927 = vsel %vm3926, %v3924, %v3921
    %v3928 = vsel %vm3902, %v3880, %v3918
    %v3929 = vsel %vm3903, %v3881, %v3927
    %3932 = vrot.lane.b32.xlu0 %v3928, 96
    %v3933 = vpop.permute.xlu0 %3932
    %3934 = vrot.lane.b32.xlu0 %v3929, 96
    %v3935 = vpop.permute.xlu0 %3934
    %v3938 = vmul.f32 %v3900, %v3933
    %v3939 = vmul.f32 %v3901, %v3935
    %v3940 = vadd.f32 %v3876, %v3938
    %v3941 = vadd.f32 %v3877, %v3939
    %v3942 = vmul.f32 %v3629, %v3742
    %v3943 = vmul.f32 %v3630, %v3742
    %v3944 = vadd.f32 %v3942, %v3750
    %v3945 = vadd.f32 %v3943, %v3750
    %v3946 = vand.u32 2147483647, %v3944
    %v3947 = vand.u32 2147483647, %v3945
    %v3948 = vsub.f32 0.0, %v3946
    %v3949 = vsub.f32 0.0, %v3947
    %v3950 = vmul.f32 %v3948, 1.442695
    %v3951 = vpow.pop %v3950
    %v3952 = vmul.f32 %v3949, 1.442695
    %v3953 = vpow.pop %v3952
    %v3954 = vadd.f32 %v3951, 1.0
    %v3955 = vadd.f32 %v3953, 1.0
    %v3956 = vrcp.pop %v3954
    %v3957 = vmul.f32 1.0, %v3956
    %v3958 = vrcp.pop %v3955
    %v3959 = vmul.f32 1.0, %v3958
    %vm3960 = vcmp.ge.f32.partialorder %v3944, 0.0
    %vm3961 = vcmp.ge.f32.partialorder %v3945, 0.0
    %v3962 = vmul.f32 %v3951, %v3957
    %v3963 = vmul.f32 %v3953, %v3959
    %v3964 = vsel %vm3960, %v3957, %v3962
    %v3965 = vsel %vm3961, %v3959, %v3963
    %vm3966 = vcmp.gt.f32.partialorder %v3944, 20.0
    %vm3967 = vcmp.gt.f32.partialorder %v3945, 20.0
    %v3968 = vmin.f32 %v3944, 20.0
    %v3969 = vmin.f32 %v3945, 20.0
    %v3970 = vmul.f32 %v3968, 1.442695
    %v3971 = vpow.pop %v3970
    %v3972 = vmul.f32 %v3969, 1.442695
    %v3973 = vpow.pop %v3972
    %v3974 = vadd.f32 %v3971, 1.0
    %v3975 = vlog2.pop %v3974
    %v3976 = vmul.f32 %v3975, 0.6931472
    %v3977 = vmul.f32 -0.5, %v3971
    %v3978 = vadd.f32 %v3977, 1.0
    %v3979 = vmul.f32 %v3978, %v3971
    %v3980 = vand.u32 2147483647, %v3971
    %vm3981 = vcmp.lt.f32.partialorder %v3980, 0.0004427343
    %v3982 = vsel %vm3981, %v3979, %v3976
    %v3983 = vadd.f32 %v3973, 1.0
    %v3984 = vlog2.pop %v3983
    %v3985 = vmul.f32 %v3984, 0.6931472
    %v3986 = vmul.f32 -0.5, %v3973
    %v3987 = vadd.f32 %v3986, 1.0
    %v3988 = vmul.f32 %v3987, %v3973
    %v3989 = vand.u32 2147483647, %v3973
    %vm3990 = vcmp.lt.f32.partialorder %v3989, 0.0004427343
    %v3991 = vsel %vm3990, %v3988, %v3985
    %v3992 = vsel %vm3966, %v3944, %v3982
    %v3993 = vsel %vm3967, %v3945, %v3991
    %3996 = vrot.lane.b32.xlu0 %v3992, 96
    %v3997 = vpop.permute.xlu0 %3996
    %3998 = vrot.lane.b32.xlu0 %v3993, 96
    %v3999 = vpop.permute.xlu0 %3998
    %v4002 = vmul.f32 %v3964, %v3997
    %v4003 = vmul.f32 %v3965, %v3999
    %v4004 = vadd.f32 %v3940, %v4002
    %v4005 = vadd.f32 %v3941, %v4003
    %v4006 = vsel %vm1225, %v4004, 0.0
    %v4007 = vsel %vm2118, %v4005, 0.0
    %v4008 = vadd.f32 %v4006, %v4007
    %v4009 = vrot.slane %v4008, 4
    %v4010 = vadd.f32 %v4008, %v4009
    %v4011 = vrot.slane %v4010, 2
    %v4012 = vadd.f32 %v4010, %v4011
    %v4013 = vrot.slane %v4012, 1
    %v4014 = vadd.f32 %v4012, %v4013
    %v4015 = vmul.f32 %v4014, 0.083333336
    %v4016 = vsub.f32 %v4004, %v4015
    %v4017 = vsub.f32 %v4005, %v4015
    %v4018 = vmul.f32 %v4016, %v4016
    %v4019 = vmul.f32 %v4017, %v4017
    %v4020 = vsel %vm1225, %v4018, 0.0
    %v4021 = vsel %vm2118, %v4019, 0.0
    %v4022 = vadd.f32 %v4020, %v4021
    %v4023 = vrot.slane %v4022, 4
    %v4024 = vadd.f32 %v4022, %v4023
    %v4025 = vrot.slane %v4024, 2
    %v4026 = vadd.f32 %v4024, %v4025
    %v4027 = vrot.slane %v4026, 1
    %v4028 = vadd.f32 %v4026, %v4027
    %v4029 = vmul.f32 %v4028, 0.083333336
    %s4030 = scalar_lea.vmem %s12, 2
    %v4031 = vld [vmem:[%s4030] sm:$0x1]
    %v4032 = vadd.f32 %v4029, 1e-05
    %v4033 = vrsqrt.pop %v4032
    %v4034 = vmul.f32 %v4031, %v4033
    %v4036 = vlaneseq
    %v4037 = vshrl.u32 %v4036, 7
    %v4038 = vsub.s32 0, %v4037
    %v4039 = vrot.slane %v4034, %v4038
    %v4041 = vmul.f32 %v4016, %v4039
    %v4042 = vmul.f32 %v4017, %v4039
    %s4043 = scalar_lea.vmem [#allocation14], 2
    %v4044 = vld [vmem:[%s4043] sm:$0x1]
    %v4046 = vlaneseq
    %v4047 = vshrl.u32 %v4046, 7
    %v4048 = vsub.s32 0, %v4047
    %v4049 = vrot.slane %v4044, %v4048
    %v4051 = vadd.f32 %v4041, %v4049
    %v4052 = vadd.f32 %v4042, %v4049
    %v4053 = vadd.f32 %v3136, %v4051
    %v4054 = vadd.f32 %v3137, %v4052
    %vm4055 = vcmp.gt.f32.partialorder %v4053, 20.0
    %vm4056 = vcmp.gt.f32.partialorder %v4054, 20.0
    %v4057 = vmin.f32 %v4053, 20.0
    %v4058 = vmin.f32 %v4054, 20.0
    %v4059 = vmul.f32 %v4057, 1.442695
    %v4060 = vpow.pop %v4059
    %v4061 = vmul.f32 %v4058, 1.442695
    %v4062 = vpow.pop %v4061
    %v4063 = vadd.f32 %v4060, 1.0
    %v4064 = vlog2.pop %v4063
    %v4065 = vmul.f32 %v4064, 0.6931472
    %v4066 = vmul.f32 -0.5, %v4060
    %v4067 = vadd.f32 %v4066, 1.0
    %v4068 = vmul.f32 %v4067, %v4060
    %v4069 = vand.u32 2147483647, %v4060
    %vm4070 = vcmp.lt.f32.partialorder %v4069, 0.0004427343
    %v4071 = vsel %vm4070, %v4068, %v4065
    %v4072 = vadd.f32 %v4062, 1.0
    %v4073 = vlog2.pop %v4072
    %v4074 = vmul.f32 %v4073, 0.6931472
    %v4075 = vmul.f32 -0.5, %v4062
    %v4076 = vadd.f32 %v4075, 1.0
    %v4077 = vmul.f32 %v4076, %v4062
    %v4078 = vand.u32 2147483647, %v4062
    %vm4079 = vcmp.lt.f32.partialorder %v4078, 0.0004427343
    %v4080 = vsel %vm4079, %v4077, %v4074
    %v4081 = vsel %vm4055, %v4053, %v4071
    %v4082 = vsel %vm4056, %v4054, %v4080
    %v4083 = vld [vmem:[%s3] sm:$0x3]
    %v4085 = vsel %vm1388, %v4083, 0
    %v4088 = vsel %vm1395, %v4082, 0
    %4090 = vmatprep.subr.mxu0 0.0
    %4091 = vmatpush1.msra.mxu0 0.0
    %4092 = vmatprep.subr.mxu0 0.0
    %4093 = vmatpush1.msra.mxu0 0.0
    %4094 = vmatprep.subr.mxu0 0.0
    %4095 = vmatpush1.msra.mxu0 0.0
    %4096 = vmatprep.subr.mxu0 0.0
    %4097 = vmatpush1.msra.mxu0 0.0
    %4098 = vmatprep.subr.mxu0 0.0
    %4099 = vmatpush1.msra.mxu0 0.0
    %4100 = vmatprep.subr.mxu0 0.0
    %4101 = vmatpush1.msra.mxu0 0.0
    %4102 = vmatprep.subr.mxu0 0.0
    %4103 = vmatpush1.msra.mxu0 0.0
    %4104 = vmatprep.subr.mxu0 0.0
    %4105 = vmatpush1.msra.mxu0 0.0
    %4106 = vmatprep.subr.mxu0 0.0
    %4107 = vmatpush1.msra.mxu0 0.0
    %4108 = vmatprep.subr.mxu0 0.0
    %4109 = vmatpush1.msra.mxu0 0.0
    %4110 = vmatprep.subr.mxu0 0.0
    %4111 = vmatpush1.msra.mxu0 0.0
    %4112 = vmatprep.subr.mxu0 0.0
    %4113 = vmatpush1.msra.mxu0 0.0
    %4114 = vmatprep.subr.mxu0 0.0
    %4115 = vmatpush1.msra.mxu0 0.0
    %4116 = vmatprep.subr.mxu0 0.0
    %4117 = vmatpush1.msra.mxu0 0.0
    %4118 = vmatprep.subr.mxu0 0.0
    %4119 = vmatpush1.msra.mxu0 %v4088
    %4120 = vmatprep.subr.mxu0 0.0
    %4121 = vmatpush1.msra.mxu0 %v4081
    %4122 = vmatprep.subr.mxu0 0.0
    %4123 = vmatpush2.msra.mxu0 0.0
    %4124 = vmatprep.subr.mxu0 0.0
    %4125 = vmatpush2.msra.mxu0 0.0
    %4126 = vmatprep.subr.mxu0 0.0
    %4127 = vmatpush2.msra.mxu0 0.0
    %4128 = vmatprep.subr.mxu0 0.0
    %4129 = vmatpush2.msra.mxu0 0.0
    %4130 = vmatprep.subr.mxu0 0.0
    %4131 = vmatpush2.msra.mxu0 0.0
    %4132 = vmatprep.subr.mxu0 0.0
    %4133 = vmatpush2.msra.mxu0 0.0
    %4134 = vmatprep.subr.mxu0 0.0
    %4135 = vmatpush2.msra.mxu0 0.0
    %4136 = vmatprep.subr.mxu0 0.0
    %4137 = vmatpush2.msra.mxu0 0.0
    %4138 = vmatprep.subr.mxu0 0.0
    %4139 = vmatpush2.msra.mxu0 0.0
    %4140 = vmatprep.subr.mxu0 0.0
    %4141 = vmatpush2.msra.mxu0 0.0
    %4142 = vmatprep.subr.mxu0 0.0
    %4143 = vmatpush2.msra.mxu0 0.0
    %4144 = vmatprep.subr.mxu0 0.0
    %4145 = vmatpush2.msra.mxu0 0.0
    %4146 = vmatprep.subr.mxu0 0.0
    %4147 = vmatpush2.msra.mxu0 0.0
    %4148 = vmatprep.subr.mxu0 0.0
    %4149 = vmatpush2.msra.mxu0 0.0
    %4150 = vmatprep.subr.mxu0 0.0
    %4151 = vmatpush2.msra.mxu0 0.0
    %4152 = vmatprep.subr.mxu0 0.0
    %4153 = vmatpush2.msra.mxu0 0.0
    %4154 = vmatprep.mubr.f32.mxu0 0.0
    %4155 = vmatmul.mubr.f32.gmra.mxu0 %v4085
    %v4156 = vpop.f32.mrf.mxu0
    %v4157 = vadd.f32 0.0, %v4156
    %v4158 = vpop.f32.mrf.mxu0
    %4159 = vdwg.mxu0
    %vm4160 = vcmp.gt.f32.partialorder %v4157, 20.0
    %v4161 = vmin.f32 %v4157, 20.0
    %v4162 = vmul.f32 %v4161, 1.442695
    %v4163 = vpow.pop %v4162
    %v4164 = vadd.f32 %v4163, 1.0
    %v4165 = vlog2.pop %v4164
    %v4166 = vmul.f32 %v4165, 0.6931472
    %v4167 = vmul.f32 -0.5, %v4163
    %v4168 = vadd.f32 %v4167, 1.0
    %v4169 = vmul.f32 %v4168, %v4163
    %v4170 = vand.u32 2147483647, %v4163
    %vm4171 = vcmp.lt.f32.partialorder %v4170, 0.0004427343
    %v4172 = vsel %vm4171, %v4169, %v4166
    %v4173 = vsel %vm4160, %v4157, %v4172
    %v4174 = vld [vmem:[%s14] sm:$0xff]
    %v4175 = vld [vmem:[%s14 + $0x8] sm:$0xff]
    %v4176 = vld [vmem:[%s14 + $0x10] sm:$0xff]
    %v4177 = vld [vmem:[%s14 + $0x18] sm:$0xff]
    %v4178 = vld [vmem:[%s15] sm:$0x1]
    %v4180 = vlaneseq
    %v4181 = vshrl.u32 %v4180, 7
    %v4182 = vsub.s32 0, %v4181
    %v4183 = vrot.slane %v4178, %v4182
    %v4186 = vsel %vm1225, %v4173, 0
    %4188 = vmatprep.subr.mxu0 0.0
    %4189 = vmatpush1.msra.mxu0 0.0
    %4190 = vmatprep.subr.mxu0 0.0
    %4191 = vmatpush1.msra.mxu0 0.0
    %4192 = vmatprep.subr.mxu0 0.0
    %4193 = vmatpush1.msra.mxu0 0.0
    %4194 = vmatprep.subr.mxu0 0.0
    %4195 = vmatpush1.msra.mxu0 0.0
    %4196 = vmatprep.subr.mxu0 0.0
    %4197 = vmatpush1.msra.mxu0 0.0
    %4198 = vmatprep.subr.mxu0 0.0
    %4199 = vmatpush1.msra.mxu0 0.0
    %4200 = vmatprep.subr.mxu0 0.0
    %4201 = vmatpush1.msra.mxu0 0.0
    %4202 = vmatprep.subr.mxu0 0.0
    %4203 = vmatpush1.msra.mxu0 0.0
    %4204 = vmatprep.subr.mxu0 0.0
    %4205 = vmatpush1.msra.mxu0 0.0
    %4206 = vmatprep.subr.mxu0 0.0
    %4207 = vmatpush1.msra.mxu0 0.0
    %4208 = vmatprep.subr.mxu0 0.0
    %4209 = vmatpush1.msra.mxu0 0.0
    %4210 = vmatprep.subr.mxu0 0.0
    %4211 = vmatpush1.msra.mxu0 0.0
    %4212 = vmatprep.subr.mxu0 0.0
    %4213 = vmatpush1.msra.mxu0 %v4177
    %4214 = vmatprep.subr.mxu0 0.0
    %4215 = vmatpush1.msra.mxu0 %v4176
    %4216 = vmatprep.subr.mxu0 0.0
    %4217 = vmatpush1.msra.mxu0 %v4175
    %4218 = vmatprep.subr.mxu0 0.0
    %4219 = vmatpush1.msra.mxu0 %v4174
    %4220 = vmatprep.subr.mxu0 0.0
    %4221 = vmatpush2.msra.mxu0 0.0
    %4222 = vmatprep.subr.mxu0 0.0
    %4223 = vmatpush2.msra.mxu0 0.0
    %4224 = vmatprep.subr.mxu0 0.0
    %4225 = vmatpush2.msra.mxu0 0.0
    %4226 = vmatprep.subr.mxu0 0.0
    %4227 = vmatpush2.msra.mxu0 0.0
    %4228 = vmatprep.subr.mxu0 0.0
    %4229 = vmatpush2.msra.mxu0 0.0
    %4230 = vmatprep.subr.mxu0 0.0
    %4231 = vmatpush2.msra.mxu0 0.0
    %4232 = vmatprep.subr.mxu0 0.0
    %4233 = vmatpush2.msra.mxu0 0.0
    %4234 = vmatprep.subr.mxu0 0.0
    %4235 = vmatpush2.msra.mxu0 0.0
    %4236 = vmatprep.subr.mxu0 0.0
    %4237 = vmatpush2.msra.mxu0 0.0
    %4238 = vmatprep.subr.mxu0 0.0
    %4239 = vmatpush2.msra.mxu0 0.0
    %4240 = vmatprep.subr.mxu0 0.0
    %4241 = vmatpush2.msra.mxu0 0.0
    %4242 = vmatprep.subr.mxu0 0.0
    %4243 = vmatpush2.msra.mxu0 0.0
    %4244 = vmatprep.subr.mxu0 0.0
    %4245 = vmatpush2.msra.mxu0 0.0
    %4246 = vmatprep.subr.mxu0 0.0
    %4247 = vmatpush2.msra.mxu0 0.0
    %4248 = vmatprep.subr.mxu0 0.0
    %4249 = vmatpush2.msra.mxu0 0.0
    %4250 = vmatprep.subr.mxu0 0.0
    %4251 = vmatpush2.msra.mxu0 0.0
    %4252 = vmatprep.mubr.f32.mxu0 0.0
    %4253 = vmatmul.mubr.f32.gmra.mxu0 %v4186
    %v4254 = vpop.f32.mrf.mxu0
    %v4255 = vadd.f32 %v4183, %v4254
    %v4256 = vpop.f32.mrf.mxu0
    %4257 = vdwg.mxu0
    %vm4258 = vcmp.gt.f32.partialorder %v4255, 20.0
    %v4259 = vmin.f32 %v4255, 20.0
    %v4260 = vmul.f32 %v4259, 1.442695
    %v4261 = vpow.pop %v4260
    %v4262 = vadd.f32 %v4261, 1.0
    %v4263 = vlog2.pop %v4262
    %v4264 = vmul.f32 %v4263, 0.6931472
    %v4265 = vmul.f32 -0.5, %v4261
    %v4266 = vadd.f32 %v4265, 1.0
    %v4267 = vmul.f32 %v4266, %v4261
    %v4268 = vand.u32 2147483647, %v4261
    %vm4269 = vcmp.lt.f32.partialorder %v4268, 0.0004427343
    %v4270 = vsel %vm4269, %v4267, %v4264
    %v4271 = vsel %vm4258, %v4255, %v4270
    %v4272 = vld [vmem:[#allocation16] sm:$0xff]
    %v4273 = vld [vmem:[#allocation16 + $0x8] sm:$0xff]
    %v4274 = vld [vmem:[#allocation16 + $0x10] sm:$0xff]
    %v4275 = vld [vmem:[#allocation16 + $0x18] sm:$0xff]
    %v4276 = vld [vmem:[#allocation16 + $0x20] sm:$0xff]
    %v4277 = vld [vmem:[#allocation16 + $0x28] sm:$0xff]
    %v4278 = vld [vmem:[#allocation16 + $0x30] sm:$0xff]
    %v4279 = vld [vmem:[#allocation16 + $0x38] sm:$0xff]
    %v4280 = vld [vmem:[%s17] sm:$0x1]
    %v4282 = vlaneseq
    %v4283 = vshrl.u32 %v4282, 7
    %v4284 = vsub.s32 0, %v4283
    %v4285 = vrot.slane %v4280, %v4284
    %v4288 = vsel %vm1742, %v4271, 0
    %4290 = vmatprep.subr.mxu0 0.0
    %4291 = vmatpush1.msra.mxu0 0.0
    %4292 = vmatprep.subr.mxu0 0.0
    %4293 = vmatpush1.msra.mxu0 0.0
    %4294 = vmatprep.subr.mxu0 0.0
    %4295 = vmatpush1.msra.mxu0 0.0
    %4296 = vmatprep.subr.mxu0 0.0
    %4297 = vmatpush1.msra.mxu0 0.0
    %4298 = vmatprep.subr.mxu0 0.0
    %4299 = vmatpush1.msra.mxu0 0.0
    %4300 = vmatprep.subr.mxu0 0.0
    %4301 = vmatpush1.msra.mxu0 0.0
    %4302 = vmatprep.subr.mxu0 0.0
    %4303 = vmatpush1.msra.mxu0 0.0
    %4304 = vmatprep.subr.mxu0 0.0
    %4305 = vmatpush1.msra.mxu0 0.0
    %4306 = vmatprep.subr.mxu0 0.0
    %4307 = vmatpush1.msra.mxu0 %v4279
    %4308 = vmatprep.subr.mxu0 0.0
    %4309 = vmatpush1.msra.mxu0 %v4278
    %4310 = vmatprep.subr.mxu0 0.0
    %4311 = vmatpush1.msra.mxu0 %v4277
    %4312 = vmatprep.subr.mxu0 0.0
    %4313 = vmatpush1.msra.mxu0 %v4276
    %4314 = vmatprep.subr.mxu0 0.0
    %4315 = vmatpush1.msra.mxu0 %v4275
    %4316 = vmatprep.subr.mxu0 0.0
    %4317 = vmatpush1.msra.mxu0 %v4274
    %4318 = vmatprep.subr.mxu0 0.0
    %4319 = vmatpush1.msra.mxu0 %v4273
    %4320 = vmatprep.subr.mxu0 0.0
    %4321 = vmatpush1.msra.mxu0 %v4272
    %4322 = vmatprep.subr.mxu0 0.0
    %4323 = vmatpush2.msra.mxu0 0.0
    %4324 = vmatprep.subr.mxu0 0.0
    %4325 = vmatpush2.msra.mxu0 0.0
    %4326 = vmatprep.subr.mxu0 0.0
    %4327 = vmatpush2.msra.mxu0 0.0
    %4328 = vmatprep.subr.mxu0 0.0
    %4329 = vmatpush2.msra.mxu0 0.0
    %4330 = vmatprep.subr.mxu0 0.0
    %4331 = vmatpush2.msra.mxu0 0.0
    %4332 = vmatprep.subr.mxu0 0.0
    %4333 = vmatpush2.msra.mxu0 0.0
    %4334 = vmatprep.subr.mxu0 0.0
    %4335 = vmatpush2.msra.mxu0 0.0
    %4336 = vmatprep.subr.mxu0 0.0
    %4337 = vmatpush2.msra.mxu0 0.0
    %4338 = vmatprep.subr.mxu0 0.0
    %4339 = vmatpush2.msra.mxu0 0.0
    %4340 = vmatprep.subr.mxu0 0.0
    %4341 = vmatpush2.msra.mxu0 0.0
    %4342 = vmatprep.subr.mxu0 0.0
    %4343 = vmatpush2.msra.mxu0 0.0
    %4344 = vmatprep.subr.mxu0 0.0
    %4345 = vmatpush2.msra.mxu0 0.0
    %4346 = vmatprep.subr.mxu0 0.0
    %4347 = vmatpush2.msra.mxu0 0.0
    %4348 = vmatprep.subr.mxu0 0.0
    %4349 = vmatpush2.msra.mxu0 0.0
    %4350 = vmatprep.subr.mxu0 0.0
    %4351 = vmatpush2.msra.mxu0 0.0
    %4352 = vmatprep.subr.mxu0 0.0
    %4353 = vmatpush2.msra.mxu0 0.0
    %4354 = vmatprep.mubr.f32.mxu0 0.0
    %4355 = vmatmul.mubr.f32.gmra.mxu0 %v4288
    %v4356 = vpop.f32.mrf.mxu0
    %v4357 = vadd.f32 %v4285, %v4356
    %v4358 = vpop.f32.mrf.mxu0
    %4359 = vdwg.mxu0
    %4360 = vst [vmem:[#allocation17] sm:$0x3] %v4357
    // Predicated region
    $region110: #{tpu_custom_call.1} parent=1 // pred_check
      _
    $region111: #{tpu_custom_call.1} parent=1 // pred_check_branch
      %4362 = sbr.rel (0) target = $region113
    $region112: #{tpu_custom_call.1} parent=1 // pred_region
      %s4364 = ssub.s32 32, 32
      %4365 = vsyncadd [#allocation4], %s4364
      %s4367 = sshll.u32 [#allocation17], 4
      %s4368 = int_to_ptr.vmem [resolvable:$true] %s4367
      %4370 = dma.vmem_to_hbm [thread:$0]  %s4368, 32, %s18, [#allocation4]
    $region113: #{tpu_custom_call.1} parent=1 // pred_fallthru
      _
    // Predicated region
    $region114: #{tpu_custom_call.1} parent=1 // pred_check
      _
    $region115: #{tpu_custom_call.1} parent=1 // pred_check_branch
      %4372 = sbr.rel (0) target = $region117
    $region116: #{tpu_custom_call.1} parent=1 // pred_region
      %4373 = dma.done [#allocation4], 32
    $region117: #{tpu_custom_call.1} parent=1 // pred_fallthru
      _
    %4374 = vsyncpa [#allocation3], 1
    %4375 = vsyncpa [#allocation6], 1
    %4376 = vsyncpa [#allocation9], 1
    %4377 = vsyncpa [#allocation12], 1
    %4378 = vsyncpa [#allocation15], 1
    %4379 = vsyncpa [#allocation4], 1

</llo_original>
